<compile_context>
chip_gen: v5e
topology: v5e:2x2
jax: 0.10.0
libtpu: 0.0.40
codegen_flags: <defaults>
</compile_context>

<pallas_src>
import jax
import jax.numpy as jnp
from jax.experimental import pallas as pl
from jax.experimental.pallas import tpu as pltpu


# ----------------------------------------------------------------------------
# Fused Pallas kernel: full autoencoder forward for one batch element.
# ----------------------------------------------------------------------------
def _make_fused_kernel(H, W):
    """Builds the fused kernel for a fixed input spatial size (H, W)."""
    H1, W1 = H // 2, W // 2          # after encoder conv1 / decoder conv1
    H2, W2 = H // 4, W // 4          # latent spatial size
    M1, M2 = H1 * W1, H2 * W2

    # Sub-pixel decomposition of a stride-2, k=3, pad=1, output_padding=1
    # transposed conv: output row (2*i + a) receives contributions from input
    # row (i + shift) with kernel-row index kh, for (kh, shift) in _t_terms(a).
    def _t_terms(a):
        return ((1, 0),) if a == 0 else ((2, 0), (0, 1))

    def kernel(cols1_ref, w1_ref, b1_ref, w2_ref, b2_ref, w3_ref, b3_ref,
               w4_ref, b4_ref, out_ref, s1, s2, s3):
        f32 = jnp.float32

        # ------------- layer 1: Conv2d(3, 64, 3, s=2, p=1) + ReLU -------------
        h1 = jnp.dot(cols1_ref[0], w1_ref[...], preferred_element_type=f32)
        h1 = jnp.maximum(h1 + b1_ref[...], 0.0)                     # (M1, 64)
        s1[...] = jnp.zeros_like(s1)                                # zero pad ring
        s1[1:H1 + 1, 1:W1 + 1, :] = h1.reshape(H1, W1, 64)

        # ------------ layer 2: Conv2d(64, 128, 3, s=2, p=1) + ReLU ------------
        # Expose row/column parity of the padded activation so the stride-2
        # taps become contiguous static slices (no strided memory access).
        v1 = s1[...].reshape((H1 + 2) // 2, 2, (W1 + 2) // 2, 2, 64)
        acc2 = jnp.zeros((M2, 128), f32)
        for kh in range(3):
            for kw in range(3):
                tap = v1[kh // 2:kh // 2 + H2, kh % 2,
                         kw // 2:kw // 2 + W2, kw % 2, :].reshape(M2, 64)
                acc2 = acc2 + jnp.dot(tap, w2_ref[kh * 3 + kw],
                                      preferred_element_type=f32)
        h2 = jnp.maximum(acc2 + b2_ref[...], 0.0)                   # (M2, 128)
        s2[...] = jnp.zeros_like(s2)                                # pad bottom/right
        s2[0:H2, 0:W2, :] = h2.reshape(H2, W2, 128)

        # ----- layer 3: ConvTranspose2d(128, 64, 3, s=2, p=1, op=1) + ReLU ----
        ph = {}
        for a in range(2):
            for b in range(2):
                acc = jnp.zeros((M2, 64), f32)
                for kh, sh in _t_terms(a):
                    for kw, sw in _t_terms(b):
                        tap = s2[sh:sh + H2, sw:sw + W2, :].reshape(M2, 128)
                        acc = acc + jnp.dot(tap, w3_ref[kh * 3 + kw],
                                            preferred_element_type=f32)
                ph[(a, b)] = jnp.maximum(acc + b3_ref[...],
                                         0.0).reshape(H2, W2, 64)
        # interleave the four (H2, W2) phases into the (H1, W1) activation
        rows = []
        for a in range(2):
            r = jnp.concatenate([ph[(a, 0)][:, :, None, :],
                                 ph[(a, 1)][:, :, None, :]], axis=2)
            rows.append(r.reshape(H2, W1, 64)[:, None, :, :])
        x3 = jnp.concatenate(rows, axis=1).reshape(H1, W1, 64)
        s3[...] = jnp.zeros_like(s3)                                # pad bottom/right
        s3[0:H1, 0:W1, :] = x3

        # ---- layer 4: ConvTranspose2d(64, 3, 3, s=2, p=1, op=1) + Sigmoid ----
        # Cout padded to 128 in w4/b4 -> lane-dense stores; phases are
        # interleaved back to (H, W) outside the kernel.
        for a in range(2):
            for b in range(2):
                acc = jnp.zeros((M1, 128), f32)
                for kh, sh in _t_terms(a):
                    for kw, sw in _t_terms(b):
                        tap = s3[sh:sh + H1, sw:sw + W1, :].reshape(M1, 64)
                        acc = acc + jnp.dot(tap, w4_ref[kh * 3 + kw],
                                            preferred_element_type=f32)
                z = acc + b4_ref[...]
                out_ref[0, 2 * a + b] = 1.0 / (1.0 + jnp.exp(-z))   # exact sigmoid

    return kernel


# ----------------------------------------------------------------------------
# Forward pass (NCHW in / NCHW out, matching PyTorch semantics)
# ----------------------------------------------------------------------------
@jax.jit
def conv_autoencoder_forward(params, x_nchw):
    N, C, H, W = x_nchw.shape
    assert C == 3 and H % 4 == 0 and W % 4 == 0
    H1, W1 = H // 2, W // 2
    M1 = H1 * W1

    x = jnp.transpose(x_nchw, (0, 2, 3, 1))                  # NHWC

    # ---- layer-1 im2col in plain JAX (tiny); K = 27 padded to 32 ----
    xp = jnp.pad(x, ((0, 0), (1, 1), (1, 1), (0, 0)))
    taps = [xp[:, kh:kh + 2 * H1:2, kw:kw + 2 * W1:2, :]
            for kh in range(3) for kw in range(3)]
    cols = jnp.concatenate(taps, axis=-1).reshape(N, M1, 27)
    cols = jnp.pad(cols, ((0, 0), (0, 0), (0, 5)))           # (N, M1, 32)

    # ---- weights / biases in per-tap matmul form ----
    w1 = jnp.pad(jnp.transpose(params["w1"], (2, 3, 1, 0)).reshape(27, 64),
                 ((0, 5), (0, 0)))                                       # (32, 64)
    w2 = jnp.transpose(params["w2"], (2, 3, 1, 0)).reshape(9, 64, 128)   # (9,64,128)
    w3 = jnp.transpose(params["w3"], (2, 3, 0, 1)).reshape(9, 128, 64)   # (9,128,64)
    w4 = jnp.pad(jnp.transpose(params["w4"], (2, 3, 0, 1)).reshape(9, 64, 3),
                 ((0, 0), (0, 0), (0, 125)))                             # (9,64,128)
    b1 = params["b1"].reshape(1, 64)
    b2 = params["b2"].reshape(1, 128)
    b3 = params["b3"].reshape(1, 64)
    b4 = jnp.pad(params["b4"], (0, 125)).reshape(1, 128)

    out = pl.pallas_call(
        _make_fused_kernel(H, W),
        out_shape=jax.ShapeDtypeStruct((N, 4, M1, 128), jnp.float32),
        grid=(N,),
        in_specs=[
            pl.BlockSpec((1, M1, 32), lambda n: (n, 0, 0)),      # im2col of input
            pl.BlockSpec((32, 64), lambda n: (0, 0)),            # w1
            pl.BlockSpec((1, 64), lambda n: (0, 0)),             # b1
            pl.BlockSpec((9, 64, 128), lambda n: (0, 0, 0)),     # w2 taps
            pl.BlockSpec((1, 128), lambda n: (0, 0)),            # b2
            pl.BlockSpec((9, 128, 64), lambda n: (0, 0, 0)),     # w3 taps
            pl.BlockSpec((1, 64), lambda n: (0, 0)),             # b3
            pl.BlockSpec((9, 64, 128), lambda n: (0, 0, 0)),     # w4 taps (padded)
            pl.BlockSpec((1, 128), lambda n: (0, 0)),            # b4 (padded)
        ],
        out_specs=pl.BlockSpec((1, 4, M1, 128), lambda n: (n, 0, 0, 0)),
        scratch_shapes=[
            pltpu.VMEM((H1 + 2, W1 + 2, 64), jnp.float32),       # padded h1
            pltpu.VMEM((H // 4 + 1, W // 4 + 1, 128), jnp.float32),  # padded latent
            pltpu.VMEM((H1 + 1, W1 + 1, 64), jnp.float32),       # padded decoder act
        ],
        compiler_params=pltpu.CompilerParams(
            dimension_semantics=("parallel",)),
    )(cols, w1, b1, w2, b2, w3, b3, w4, b4)

    # ---- interleave the 4 decoder phases, drop channel padding, -> NCHW ----
    o = out.reshape(N, 2, 2, H1, W1, 128)            # (n, a, b, u, v, c)
    o = jnp.transpose(o, (0, 3, 1, 4, 2, 5))         # (n, u, a, v, b, c)
    o = o.reshape(N, H, W, 128)[..., :3]             # NHWC
    return jnp.transpose(o, (0, 3, 1, 2))            # NCHW


# ----------------------------------------------------------------------------
# Parameters (deterministic, shapes match the PyTorch module)
# ----------------------------------------------------------------------------
def init_params(key):
    def conv_w(key, shape):
        fan_in = shape[1] * shape[2] * shape[3]
        return jax.random.uniform(key, shape, jnp.float32,
                                  -1.0, 1.0) / jnp.sqrt(fan_in)

    def convT_w(key, shape):
        fan_in = shape[0] * shape[2] * shape[3]
        return jax.random.uniform(key, shape, jnp.float32,
                                  -1.0, 1.0) / jnp.sqrt(fan_in)

    ks = jax.random.split(key, 8)
    return {
        # encoder
        "w1": conv_w(ks[0], (64, 3, 3, 3)),      # Conv2d(3, 64, 3, s=2, p=1)
        "b1": jax.random.uniform(ks[1], (64,), jnp.float32, -0.1, 0.1),
        "w2": conv_w(ks[2], (128, 64, 3, 3)),    # Conv2d(64, 128, 3, s=2, p=1)
        "b2": jax.random.uniform(ks[3], (128,), jnp.float32, -0.1, 0.1),
        # decoder (ConvTranspose2d weights are (Cin, Cout, kH, kW))
        "w3": convT_w(ks[4], (128, 64, 3, 3)),
        "b3": jax.random.uniform(ks[5], (64,), jnp.float32, -0.1, 0.1),
        "w4": convT_w(ks[6], (64, 3, 3, 3)),
        "b4": jax.random.uniform(ks[7], (3,), jnp.float32, -0.1, 0.1),
    }


# ----------------------------------------------------------------------------
# Pure-JAX reference (im2col formulation) used only for self-verification.
# ----------------------------------------------------------------------------
def _ref_conv2d(x, w, b, stride, pad, act):
    N, H, W, Cin = x.shape
    Cout, _, k, _ = w.shape
    OH = (H + 2 * pad - k) // stride + 1
    OW = (W + 2 * pad - k) // stride + 1
    xp = jnp.pad(x, ((0, 0), (pad, pad), (pad, pad), (0, 0)))
    cols = [xp[:, kh:kh + stride * OH:stride, kw:kw + stride * OW:stride, :]
            for kh in range(k) for kw in range(k)]
    cols = jnp.concatenate(cols, axis=-1).reshape(N * OH * OW, k * k * Cin)
    w2d = jnp.transpose(w, (2, 3, 1, 0)).reshape(k * k * Cin, Cout)
    y = jnp.dot(cols, w2d, precision=jax.lax.Precision.HIGHEST) + b
    y = jnp.maximum(y, 0.0) if act == "relu" else jax.nn.sigmoid(y)
    return y.reshape(N, OH, OW, Cout)


def _ref_conv_transpose2d(x, w, b, stride, pad, output_pad, act):
    N, H, W, Cin = x.shape
    _, Cout, k, _ = w.shape
    xd = jnp.zeros((N, (H - 1) * stride + 1, (W - 1) * stride + 1, Cin), x.dtype)
    xd = xd.at[:, ::stride, ::stride, :].set(x)
    p0 = k - 1 - pad
    p1 = k - 1 - pad + output_pad
    xp = jnp.pad(xd, ((0, 0), (p0, p1), (p0, p1), (0, 0)))
    OH, OW = xp.shape[1] - k + 1, xp.shape[2] - k + 1
    cols = [xp[:, kh:kh + OH, kw:kw + OW, :]
            for kh in range(k) for kw in range(k)]
    cols = jnp.concatenate(cols, axis=-1).reshape(N * OH * OW, k * k * Cin)
    w2d = jnp.transpose(w[:, :, ::-1, ::-1], (2, 3, 0, 1)).reshape(k * k * Cin, Cout)
    y = jnp.dot(cols, w2d, precision=jax.lax.Precision.HIGHEST) + b
    y = jnp.maximum(y, 0.0) if act == "relu" else jax.nn.sigmoid(y)
    return y.reshape(N, OH, OW, Cout)


@jax.jit
def _reference_forward(params, x_nchw):
    x = jnp.transpose(x_nchw, (0, 2, 3, 1))
    h = _ref_conv2d(x, params["w1"], params["b1"], 2, 1, "relu")
    z = _ref_conv2d(h, params["w2"], params["b2"], 2, 1, "relu")
    d = _ref_conv_transpose2d(z, params["w3"], params["b3"], 2, 1, 1, "relu")
    y = _ref_conv_transpose2d(d, params["w4"], params["b4"], 2, 1, 1, "sigmoid")
    return jnp.transpose(y, (0, 3, 1, 2))


if __name__ == "__main__":
    key = jax.random.PRNGKey(0)
    pkey, xkey = jax.random.split(key)
    params = init_params(pkey)

    x = jax.random.normal(xkey, (2, 3, 16, 16), dtype=jnp.float32)   # NCHW

    out = jax.block_until_ready(conv_autoencoder_forward(params, x))
    ref = jax.block_until_ready(_reference_forward(params, x))

    assert out.shape == (2, 3, 16, 16), out.shape
    assert bool(jnp.all(jnp.isfinite(out)))
    assert bool(jnp.all((out >= 0.0) & (out <= 1.0)))     # sigmoid output range
    err = float(jnp.max(jnp.abs(out - ref)))
    assert err < 5e-3, f"max abs error vs reference = {err}"
    print("KERNEL_OK")
</pallas_src>

<mosaic_0001>
module attributes {stable_mosaic.version = 11 : i64} {
  func.func @kernel(%arg0: i32, %arg1: memref<1x64x32xf32, #tpu.memory_space<vmem>>, %arg2: memref<32x64xf32, #tpu.memory_space<vmem>>, %arg3: memref<1x64xf32, #tpu.memory_space<vmem>>, %arg4: memref<9x64x128xf32, #tpu.memory_space<vmem>>, %arg5: memref<1x128xf32, #tpu.memory_space<vmem>>, %arg6: memref<9x128x64xf32, #tpu.memory_space<vmem>>, %arg7: memref<1x64xf32, #tpu.memory_space<vmem>>, %arg8: memref<9x64x128xf32, #tpu.memory_space<vmem>>, %arg9: memref<1x128xf32, #tpu.memory_space<vmem>>, %arg10: memref<1x4x64x128xf32, #tpu.memory_space<vmem>>, %arg11: memref<10x10x64xf32, #tpu.memory_space<vmem>>, %arg12: memref<5x5x128xf32, #tpu.memory_space<vmem>>, %arg13: memref<9x9x64xf32, #tpu.memory_space<vmem>>) attributes {dimension_semantics = [#tpu.dimension_semantics<parallel>], iteration_bounds = array<i64: 2>, scalar_prefetch = 0 : i64, scratch_operands = 3 : i64, tpu.core_type = #tpu.core_type<tc>, window_params = [{transform_indices = @transform_0, window_bounds = array<i64: 1, 64, 32>}, {pipeline_mode = #tpu.pipeline_mode<synchronous>, transform_indices = @transform_1, window_bounds = array<i64: 32, 64>}, {pipeline_mode = #tpu.pipeline_mode<synchronous>, transform_indices = @transform_2, window_bounds = array<i64: 1, 64>}, {pipeline_mode = #tpu.pipeline_mode<synchronous>, transform_indices = @transform_3, window_bounds = array<i64: 9, 64, 128>}, {pipeline_mode = #tpu.pipeline_mode<synchronous>, transform_indices = @transform_4, window_bounds = array<i64: 1, 128>}, {pipeline_mode = #tpu.pipeline_mode<synchronous>, transform_indices = @transform_5, window_bounds = array<i64: 9, 128, 64>}, {pipeline_mode = #tpu.pipeline_mode<synchronous>, transform_indices = @transform_6, window_bounds = array<i64: 1, 64>}, {pipeline_mode = #tpu.pipeline_mode<synchronous>, transform_indices = @transform_7, window_bounds = array<i64: 9, 64, 128>}, {pipeline_mode = #tpu.pipeline_mode<synchronous>, transform_indices = @transform_8, window_bounds = array<i64: 1, 128>}, {transform_indices = @transform_9, window_bounds = array<i64: 1, 4, 64, 128>}]} {
    %c0 = arith.constant 0 : index
    %c0_0 = arith.constant 0 : index
    %c0_1 = arith.constant 0 : index
    %0 = vector.load %arg1[%c0, %c0_0, %c0_1] : memref<1x64x32xf32, #tpu.memory_space<vmem>>, vector<1x64x32xf32>
    %1 = vector.shape_cast %0 : vector<1x64x32xf32> to vector<64x32xf32>
    %c0_2 = arith.constant 0 : index
    %c0_3 = arith.constant 0 : index
    %2 = vector.load %arg2[%c0_2, %c0_3] : memref<32x64xf32, #tpu.memory_space<vmem>>, vector<32x64xf32>
    %cst = arith.constant dense<0.000000e+00> : vector<64x64xf32>
    %3 = tpu.matmul %1, %2, %cst {dimension_numbers = #tpu.dot_dimension_numbers<[1], [0], [0], [1], [0, 0, 1, 1], [], []>} : vector<64x32xf32>, vector<32x64xf32>, vector<64x64xf32> -> vector<64x64xf32>
    %c0_4 = arith.constant 0 : index
    %c0_5 = arith.constant 0 : index
    %4 = vector.load %arg3[%c0_4, %c0_5] : memref<1x64xf32, #tpu.memory_space<vmem>>, vector<1x64xf32>
    %5 = vector.broadcast %4 : vector<1x64xf32> to vector<64x64xf32>
    %6 = arith.addf %3, %5 : vector<64x64xf32>
    %cst_6 = arith.constant 0.000000e+00 : f32
    %7 = vector.broadcast %cst_6 : f32 to vector<64x64xf32>
    %8 = arith.maximumf %6, %7 : vector<64x64xf32>
    %cst_7 = arith.constant 0.000000e+00 : f32
    %9 = vector.broadcast %cst_7 : f32 to vector<10x10x64xf32>
    %c0_8 = arith.constant 0 : index
    %c0_9 = arith.constant 0 : index
    %c0_10 = arith.constant 0 : index
    %10 = vector.load %arg11[%c0_8, %c0_9, %c0_10] : memref<10x10x64xf32, #tpu.memory_space<vmem>>, vector<10x10x64xf32>
    tpu.vector_store %arg11[%c0_8, %c0_9, %c0_10], %9 {strides = array<i32>} : memref<10x10x64xf32, #tpu.memory_space<vmem>>, vector<10x10x64xf32>,
    %11 = vector.shape_cast %8 : vector<64x64xf32> to vector<8x8x64xf32>
    %c1 = arith.constant 1 : index
    %c1_11 = arith.constant 1 : index
    %c0_12 = arith.constant 0 : index
    %12 = vector.load %arg11[%c1, %c1_11, %c0_12] : memref<10x10x64xf32, #tpu.memory_space<vmem>>, vector<8x8x64xf32>
    tpu.vector_store %arg11[%c1, %c1_11, %c0_12], %11 {strides = array<i32>} : memref<10x10x64xf32, #tpu.memory_space<vmem>>, vector<8x8x64xf32>,
    %c0_13 = arith.constant 0 : index
    %c0_14 = arith.constant 0 : index
    %c0_15 = arith.constant 0 : index
    %13 = vector.load %arg11[%c0_13, %c0_14, %c0_15] : memref<10x10x64xf32, #tpu.memory_space<vmem>>, vector<10x10x64xf32>
    %14 = vector.shape_cast %13 : vector<10x10x64xf32> to vector<5x2x5x2x64xf32>
    %cst_16 = arith.constant 0.000000e+00 : f32
    %15 = vector.broadcast %cst_16 : f32 to vector<16x128xf32>
    %16 = vector.extract_strided_slice %14 {offsets = [0, 0, 0, 0, 0], sizes = [4, 1, 4, 1, 64], strides = [1, 1, 1, 1, 1]} : vector<5x2x5x2x64xf32> to vector<4x1x4x1x64xf32>
    %17 = vector.shape_cast %16 : vector<4x1x4x1x64xf32> to vector<4x4x64xf32>
    %18 = vector.shape_cast %17 : vector<4x4x64xf32> to vector<16x64xf32>
    %c0_17 = arith.constant 0 : index
    %c0_18 = arith.constant 0 : index
    %c0_19 = arith.constant 0 : index
    %19 = vector.load %arg4[%c0_17, %c0_18, %c0_19] : memref<9x64x128xf32, #tpu.memory_space<vmem>>, vector<1x64x128xf32>
    %20 = vector.shape_cast %19 : vector<1x64x128xf32> to vector<64x128xf32>
    %cst_20 = arith.constant dense<0.000000e+00> : vector<16x128xf32>
    %21 = tpu.matmul %18, %20, %cst_20 {dimension_numbers = #tpu.dot_dimension_numbers<[1], [0], [0], [1], [0, 0, 1, 1], [], []>} : vector<16x64xf32>, vector<64x128xf32>, vector<16x128xf32> -> vector<16x128xf32>
    %22 = arith.addf %15, %21 : vector<16x128xf32>
    %23 = vector.extract_strided_slice %14 {offsets = [0, 0, 0, 1, 0], sizes = [4, 1, 4, 1, 64], strides = [1, 1, 1, 1, 1]} : vector<5x2x5x2x64xf32> to vector<4x1x4x1x64xf32>
    %24 = vector.shape_cast %23 : vector<4x1x4x1x64xf32> to vector<4x4x64xf32>
    %25 = vector.shape_cast %24 : vector<4x4x64xf32> to vector<16x64xf32>
    %c1_21 = arith.constant 1 : index
    %c0_22 = arith.constant 0 : index
    %c0_23 = arith.constant 0 : index
    %26 = vector.load %arg4[%c1_21, %c0_22, %c0_23] : memref<9x64x128xf32, #tpu.memory_space<vmem>>, vector<1x64x128xf32>
    %27 = vector.shape_cast %26 : vector<1x64x128xf32> to vector<64x128xf32>
    %cst_24 = arith.constant dense<0.000000e+00> : vector<16x128xf32>
    %28 = tpu.matmul %25, %27, %cst_24 {dimension_numbers = #tpu.dot_dimension_numbers<[1], [0], [0], [1], [0, 0, 1, 1], [], []>} : vector<16x64xf32>, vector<64x128xf32>, vector<16x128xf32> -> vector<16x128xf32>
    %29 = arith.addf %22, %28 : vector<16x128xf32>
    %30 = vector.extract_strided_slice %14 {offsets = [0, 0, 1, 0, 0], sizes = [4, 1, 4, 1, 64], strides = [1, 1, 1, 1, 1]} : vector<5x2x5x2x64xf32> to vector<4x1x4x1x64xf32>
    %31 = vector.shape_cast %30 : vector<4x1x4x1x64xf32> to vector<4x4x64xf32>
    %32 = vector.shape_cast %31 : vector<4x4x64xf32> to vector<16x64xf32>
    %c2 = arith.constant 2 : index
    %c0_25 = arith.constant 0 : index
    %c0_26 = arith.constant 0 : index
    %33 = vector.load %arg4[%c2, %c0_25, %c0_26] : memref<9x64x128xf32, #tpu.memory_space<vmem>>, vector<1x64x128xf32>
    %34 = vector.shape_cast %33 : vector<1x64x128xf32> to vector<64x128xf32>
    %cst_27 = arith.constant dense<0.000000e+00> : vector<16x128xf32>
    %35 = tpu.matmul %32, %34, %cst_27 {dimension_numbers = #tpu.dot_dimension_numbers<[1], [0], [0], [1], [0, 0, 1, 1], [], []>} : vector<16x64xf32>, vector<64x128xf32>, vector<16x128xf32> -> vector<16x128xf32>
    %36 = arith.addf %29, %35 : vector<16x128xf32>
    %37 = vector.extract_strided_slice %14 {offsets = [0, 1, 0, 0, 0], sizes = [4, 1, 4, 1, 64], strides = [1, 1, 1, 1, 1]} : vector<5x2x5x2x64xf32> to vector<4x1x4x1x64xf32>
    %38 = vector.shape_cast %37 : vector<4x1x4x1x64xf32> to vector<4x4x64xf32>
    %39 = vector.shape_cast %38 : vector<4x4x64xf32> to vector<16x64xf32>
    %c3 = arith.constant 3 : index
    %c0_28 = arith.constant 0 : index
    %c0_29 = arith.constant 0 : index
    %40 = vector.load %arg4[%c3, %c0_28, %c0_29] : memref<9x64x128xf32, #tpu.memory_space<vmem>>, vector<1x64x128xf32>
    %41 = vector.shape_cast %40 : vector<1x64x128xf32> to vector<64x128xf32>
    %cst_30 = arith.constant dense<0.000000e+00> : vector<16x128xf32>
    %42 = tpu.matmul %39, %41, %cst_30 {dimension_numbers = #tpu.dot_dimension_numbers<[1], [0], [0], [1], [0, 0, 1, 1], [], []>} : vector<16x64xf32>, vector<64x128xf32>, vector<16x128xf32> -> vector<16x128xf32>
    %43 = arith.addf %36, %42 : vector<16x128xf32>
    %44 = vector.extract_strided_slice %14 {offsets = [0, 1, 0, 1, 0], sizes = [4, 1, 4, 1, 64], strides = [1, 1, 1, 1, 1]} : vector<5x2x5x2x64xf32> to vector<4x1x4x1x64xf32>
    %45 = vector.shape_cast %44 : vector<4x1x4x1x64xf32> to vector<4x4x64xf32>
    %46 = vector.shape_cast %45 : vector<4x4x64xf32> to vector<16x64xf32>
    %c4 = arith.constant 4 : index
    %c0_31 = arith.constant 0 : index
    %c0_32 = arith.constant 0 : index
    %47 = vector.load %arg4[%c4, %c0_31, %c0_32] : memref<9x64x128xf32, #tpu.memory_space<vmem>>, vector<1x64x128xf32>
    %48 = vector.shape_cast %47 : vector<1x64x128xf32> to vector<64x128xf32>
    %cst_33 = arith.constant dense<0.000000e+00> : vector<16x128xf32>
    %49 = tpu.matmul %46, %48, %cst_33 {dimension_numbers = #tpu.dot_dimension_numbers<[1], [0], [0], [1], [0, 0, 1, 1], [], []>} : vector<16x64xf32>, vector<64x128xf32>, vector<16x128xf32> -> vector<16x128xf32>
    %50 = arith.addf %43, %49 : vector<16x128xf32>
    %51 = vector.extract_strided_slice %14 {offsets = [0, 1, 1, 0, 0], sizes = [4, 1, 4, 1, 64], strides = [1, 1, 1, 1, 1]} : vector<5x2x5x2x64xf32> to vector<4x1x4x1x64xf32>
    %52 = vector.shape_cast %51 : vector<4x1x4x1x64xf32> to vector<4x4x64xf32>
    %53 = vector.shape_cast %52 : vector<4x4x64xf32> to vector<16x64xf32>
    %c5 = arith.constant 5 : index
    %c0_34 = arith.constant 0 : index
    %c0_35 = arith.constant 0 : index
    %54 = vector.load %arg4[%c5, %c0_34, %c0_35] : memref<9x64x128xf32, #tpu.memory_space<vmem>>, vector<1x64x128xf32>
    %55 = vector.shape_cast %54 : vector<1x64x128xf32> to vector<64x128xf32>
    %cst_36 = arith.constant dense<0.000000e+00> : vector<16x128xf32>
    %56 = tpu.matmul %53, %55, %cst_36 {dimension_numbers = #tpu.dot_dimension_numbers<[1], [0], [0], [1], [0, 0, 1, 1], [], []>} : vector<16x64xf32>, vector<64x128xf32>, vector<16x128xf32> -> vector<16x128xf32>
    %57 = arith.addf %50, %56 : vector<16x128xf32>
    %58 = vector.extract_strided_slice %14 {offsets = [1, 0, 0, 0, 0], sizes = [4, 1, 4, 1, 64], strides = [1, 1, 1, 1, 1]} : vector<5x2x5x2x64xf32> to vector<4x1x4x1x64xf32>
    %59 = vector.shape_cast %58 : vector<4x1x4x1x64xf32> to vector<4x4x64xf32>
    %60 = vector.shape_cast %59 : vector<4x4x64xf32> to vector<16x64xf32>
    %c6 = arith.constant 6 : index
    %c0_37 = arith.constant 0 : index
    %c0_38 = arith.constant 0 : index
    %61 = vector.load %arg4[%c6, %c0_37, %c0_38] : memref<9x64x128xf32, #tpu.memory_space<vmem>>, vector<1x64x128xf32>
    %62 = vector.shape_cast %61 : vector<1x64x128xf32> to vector<64x128xf32>
    %cst_39 = arith.constant dense<0.000000e+00> : vector<16x128xf32>
    %63 = tpu.matmul %60, %62, %cst_39 {dimension_numbers = #tpu.dot_dimension_numbers<[1], [0], [0], [1], [0, 0, 1, 1], [], []>} : vector<16x64xf32>, vector<64x128xf32>, vector<16x128xf32> -> vector<16x128xf32>
    %64 = arith.addf %57, %63 : vector<16x128xf32>
    %65 = vector.extract_strided_slice %14 {offsets = [1, 0, 0, 1, 0], sizes = [4, 1, 4, 1, 64], strides = [1, 1, 1, 1, 1]} : vector<5x2x5x2x64xf32> to vector<4x1x4x1x64xf32>
    %66 = vector.shape_cast %65 : vector<4x1x4x1x64xf32> to vector<4x4x64xf32>
    %67 = vector.shape_cast %66 : vector<4x4x64xf32> to vector<16x64xf32>
    %c7 = arith.constant 7 : index
    %c0_40 = arith.constant 0 : index
    %c0_41 = arith.constant 0 : index
    %68 = vector.load %arg4[%c7, %c0_40, %c0_41] : memref<9x64x128xf32, #tpu.memory_space<vmem>>, vector<1x64x128xf32>
    %69 = vector.shape_cast %68 : vector<1x64x128xf32> to vector<64x128xf32>
    %cst_42 = arith.constant dense<0.000000e+00> : vector<16x128xf32>
    %70 = tpu.matmul %67, %69, %cst_42 {dimension_numbers = #tpu.dot_dimension_numbers<[1], [0], [0], [1], [0, 0, 1, 1], [], []>} : vector<16x64xf32>, vector<64x128xf32>, vector<16x128xf32> -> vector<16x128xf32>
    %71 = arith.addf %64, %70 : vector<16x128xf32>
    %72 = vector.extract_strided_slice %14 {offsets = [1, 0, 1, 0, 0], sizes = [4, 1, 4, 1, 64], strides = [1, 1, 1, 1, 1]} : vector<5x2x5x2x64xf32> to vector<4x1x4x1x64xf32>
    %73 = vector.shape_cast %72 : vector<4x1x4x1x64xf32> to vector<4x4x64xf32>
    %74 = vector.shape_cast %73 : vector<4x4x64xf32> to vector<16x64xf32>
    %c8 = arith.constant 8 : index
    %c0_43 = arith.constant 0 : index
    %c0_44 = arith.constant 0 : index
    %75 = vector.load %arg4[%c8, %c0_43, %c0_44] : memref<9x64x128xf32, #tpu.memory_space<vmem>>, vector<1x64x128xf32>
    %76 = vector.shape_cast %75 : vector<1x64x128xf32> to vector<64x128xf32>
    %cst_45 = arith.constant dense<0.000000e+00> : vector<16x128xf32>
    %77 = tpu.matmul %74, %76, %cst_45 {dimension_numbers = #tpu.dot_dimension_numbers<[1], [0], [0], [1], [0, 0, 1, 1], [], []>} : vector<16x64xf32>, vector<64x128xf32>, vector<16x128xf32> -> vector<16x128xf32>
    %78 = arith.addf %71, %77 : vector<16x128xf32>
    %c0_46 = arith.constant 0 : index
    %c0_47 = arith.constant 0 : index
    %79 = vector.load %arg5[%c0_46, %c0_47] : memref<1x128xf32, #tpu.memory_space<vmem>>, vector<1x128xf32>
    %80 = vector.broadcast %79 : vector<1x128xf32> to vector<16x128xf32>
    %81 = arith.addf %78, %80 : vector<16x128xf32>
    %cst_48 = arith.constant 0.000000e+00 : f32
    %82 = vector.broadcast %cst_48 : f32 to vector<16x128xf32>
    %83 = arith.maximumf %81, %82 : vector<16x128xf32>
    %cst_49 = arith.constant 0.000000e+00 : f32
    %84 = vector.broadcast %cst_49 : f32 to vector<5x5x128xf32>
    %c0_50 = arith.constant 0 : index
    %c0_51 = arith.constant 0 : index
    %c0_52 = arith.constant 0 : index
    %85 = vector.load %arg12[%c0_50, %c0_51, %c0_52] : memref<5x5x128xf32, #tpu.memory_space<vmem>>, vector<5x5x128xf32>
    tpu.vector_store %arg12[%c0_50, %c0_51, %c0_52], %84 {strides = array<i32>} : memref<5x5x128xf32, #tpu.memory_space<vmem>>, vector<5x5x128xf32>,
    %86 = vector.shape_cast %83 : vector<16x128xf32> to vector<4x4x128xf32>
    %c0_53 = arith.constant 0 : index
    %c0_54 = arith.constant 0 : index
    %c0_55 = arith.constant 0 : index
    %87 = vector.load %arg12[%c0_53, %c0_54, %c0_55] : memref<5x5x128xf32, #tpu.memory_space<vmem>>, vector<4x4x128xf32>
    tpu.vector_store %arg12[%c0_53, %c0_54, %c0_55], %86 {strides = array<i32>} : memref<5x5x128xf32, #tpu.memory_space<vmem>>, vector<4x4x128xf32>,
    %cst_56 = arith.constant 0.000000e+00 : f32
    %88 = vector.broadcast %cst_56 : f32 to vector<16x64xf32>
    %c0_57 = arith.constant 0 : index
    %c0_58 = arith.constant 0 : index
    %c0_59 = arith.constant 0 : index
    %89 = vector.load %arg12[%c0_57, %c0_58, %c0_59] : memref<5x5x128xf32, #tpu.memory_space<vmem>>, vector<4x4x128xf32>
    %90 = vector.shape_cast %89 : vector<4x4x128xf32> to vector<16x128xf32>
    %c4_60 = arith.constant 4 : index
    %c0_61 = arith.constant 0 : index
    %c0_62 = arith.constant 0 : index
    %91 = vector.load %arg6[%c4_60, %c0_61, %c0_62] : memref<9x128x64xf32, #tpu.memory_space<vmem>>, vector<1x128x64xf32>
    %92 = vector.shape_cast %91 : vector<1x128x64xf32> to vector<128x64xf32>
    %cst_63 = arith.constant dense<0.000000e+00> : vector<16x64xf32>
    %93 = tpu.matmul %90, %92, %cst_63 {dimension_numbers = #tpu.dot_dimension_numbers<[1], [0], [0], [1], [0, 0, 1, 1], [], []>} : vector<16x128xf32>, vector<128x64xf32>, vector<16x64xf32> -> vector<16x64xf32>
    %94 = arith.addf %88, %93 : vector<16x64xf32>
    %c0_64 = arith.constant 0 : index
    %c0_65 = arith.constant 0 : index
    %95 = vector.load %arg7[%c0_64, %c0_65] : memref<1x64xf32, #tpu.memory_space<vmem>>, vector<1x64xf32>
    %96 = vector.broadcast %95 : vector<1x64xf32> to vector<16x64xf32>
    %97 = arith.addf %94, %96 : vector<16x64xf32>
    %cst_66 = arith.constant 0.000000e+00 : f32
    %98 = vector.broadcast %cst_66 : f32 to vector<16x64xf32>
    %99 = arith.maximumf %97, %98 : vector<16x64xf32>
    %100 = vector.shape_cast %99 : vector<16x64xf32> to vector<4x4x64xf32>
    %cst_67 = arith.constant 0.000000e+00 : f32
    %101 = vector.broadcast %cst_67 : f32 to vector<16x64xf32>
    %c0_68 = arith.constant 0 : index
    %c0_69 = arith.constant 0 : index
    %c0_70 = arith.constant 0 : index
    %102 = vector.load %arg12[%c0_68, %c0_69, %c0_70] : memref<5x5x128xf32, #tpu.memory_space<vmem>>, vector<4x4x128xf32>
    %103 = vector.shape_cast %102 : vector<4x4x128xf32> to vector<16x128xf32>
    %c5_71 = arith.constant 5 : index
    %c0_72 = arith.constant 0 : index
    %c0_73 = arith.constant 0 : index
    %104 = vector.load %arg6[%c5_71, %c0_72, %c0_73] : memref<9x128x64xf32, #tpu.memory_space<vmem>>, vector<1x128x64xf32>
    %105 = vector.shape_cast %104 : vector<1x128x64xf32> to vector<128x64xf32>
    %cst_74 = arith.constant dense<0.000000e+00> : vector<16x64xf32>
    %106 = tpu.matmul %103, %105, %cst_74 {dimension_numbers = #tpu.dot_dimension_numbers<[1], [0], [0], [1], [0, 0, 1, 1], [], []>} : vector<16x128xf32>, vector<128x64xf32>, vector<16x64xf32> -> vector<16x64xf32>
    %107 = arith.addf %101, %106 : vector<16x64xf32>
    %c0_75 = arith.constant 0 : index
    %c1_76 = arith.constant 1 : index
    %c0_77 = arith.constant 0 : index
    %108 = vector.load %arg12[%c0_75, %c1_76, %c0_77] : memref<5x5x128xf32, #tpu.memory_space<vmem>>, vector<4x4x128xf32>
    %109 = vector.shape_cast %108 : vector<4x4x128xf32> to vector<16x128xf32>
    %c3_78 = arith.constant 3 : index
    %c0_79 = arith.constant 0 : index
    %c0_80 = arith.constant 0 : index
    %110 = vector.load %arg6[%c3_78, %c0_79, %c0_80] : memref<9x128x64xf32, #tpu.memory_space<vmem>>, vector<1x128x64xf32>
    %111 = vector.shape_cast %110 : vector<1x128x64xf32> to vector<128x64xf32>
    %cst_81 = arith.constant dense<0.000000e+00> : vector<16x64xf32>
    %112 = tpu.matmul %109, %111, %cst_81 {dimension_numbers = #tpu.dot_dimension_numbers<[1], [0], [0], [1], [0, 0, 1, 1], [], []>} : vector<16x128xf32>, vector<128x64xf32>, vector<16x64xf32> -> vector<16x64xf32>
    %113 = arith.addf %107, %112 : vector<16x64xf32>
    %c0_82 = arith.constant 0 : index
    %c0_83 = arith.constant 0 : index
    %114 = vector.load %arg7[%c0_82, %c0_83] : memref<1x64xf32, #tpu.memory_space<vmem>>, vector<1x64xf32>
    %115 = vector.broadcast %114 : vector<1x64xf32> to vector<16x64xf32>
    %116 = arith.addf %113, %115 : vector<16x64xf32>
    %cst_84 = arith.constant 0.000000e+00 : f32
    %117 = vector.broadcast %cst_84 : f32 to vector<16x64xf32>
    %118 = arith.maximumf %116, %117 : vector<16x64xf32>
    %119 = vector.shape_cast %118 : vector<16x64xf32> to vector<4x4x64xf32>
    %cst_85 = arith.constant 0.000000e+00 : f32
    %120 = vector.broadcast %cst_85 : f32 to vector<16x64xf32>
    %c0_86 = arith.constant 0 : index
    %c0_87 = arith.constant 0 : index
    %c0_88 = arith.constant 0 : index
    %121 = vector.load %arg12[%c0_86, %c0_87, %c0_88] : memref<5x5x128xf32, #tpu.memory_space<vmem>>, vector<4x4x128xf32>
    %122 = vector.shape_cast %121 : vector<4x4x128xf32> to vector<16x128xf32>
    %c7_89 = arith.constant 7 : index
    %c0_90 = arith.constant 0 : index
    %c0_91 = arith.constant 0 : index
    %123 = vector.load %arg6[%c7_89, %c0_90, %c0_91] : memref<9x128x64xf32, #tpu.memory_space<vmem>>, vector<1x128x64xf32>
    %124 = vector.shape_cast %123 : vector<1x128x64xf32> to vector<128x64xf32>
    %cst_92 = arith.constant dense<0.000000e+00> : vector<16x64xf32>
    %125 = tpu.matmul %122, %124, %cst_92 {dimension_numbers = #tpu.dot_dimension_numbers<[1], [0], [0], [1], [0, 0, 1, 1], [], []>} : vector<16x128xf32>, vector<128x64xf32>, vector<16x64xf32> -> vector<16x64xf32>
    %126 = arith.addf %120, %125 : vector<16x64xf32>
    %c1_93 = arith.constant 1 : index
    %c0_94 = arith.constant 0 : index
    %c0_95 = arith.constant 0 : index
    %127 = vector.load %arg12[%c1_93, %c0_94, %c0_95] : memref<5x5x128xf32, #tpu.memory_space<vmem>>, vector<4x4x128xf32>
    %128 = vector.shape_cast %127 : vector<4x4x128xf32> to vector<16x128xf32>
    %c1_96 = arith.constant 1 : index
    %c0_97 = arith.constant 0 : index
    %c0_98 = arith.constant 0 : index
    %129 = vector.load %arg6[%c1_96, %c0_97, %c0_98] : memref<9x128x64xf32, #tpu.memory_space<vmem>>, vector<1x128x64xf32>
    %130 = vector.shape_cast %129 : vector<1x128x64xf32> to vector<128x64xf32>
    %cst_99 = arith.constant dense<0.000000e+00> : vector<16x64xf32>
    %131 = tpu.matmul %128, %130, %cst_99 {dimension_numbers = #tpu.dot_dimension_numbers<[1], [0], [0], [1], [0, 0, 1, 1], [], []>} : vector<16x128xf32>, vector<128x64xf32>, vector<16x64xf32> -> vector<16x64xf32>
    %132 = arith.addf %126, %131 : vector<16x64xf32>
    %c0_100 = arith.constant 0 : index
    %c0_101 = arith.constant 0 : index
    %133 = vector.load %arg7[%c0_100, %c0_101] : memref<1x64xf32, #tpu.memory_space<vmem>>, vector<1x64xf32>
    %134 = vector.broadcast %133 : vector<1x64xf32> to vector<16x64xf32>
    %135 = arith.addf %132, %134 : vector<16x64xf32>
    %cst_102 = arith.constant 0.000000e+00 : f32
    %136 = vector.broadcast %cst_102 : f32 to vector<16x64xf32>
    %137 = arith.maximumf %135, %136 : vector<16x64xf32>
    %138 = vector.shape_cast %137 : vector<16x64xf32> to vector<4x4x64xf32>
    %cst_103 = arith.constant 0.000000e+00 : f32
    %139 = vector.broadcast %cst_103 : f32 to vector<16x64xf32>
    %c0_104 = arith.constant 0 : index
    %c0_105 = arith.constant 0 : index
    %c0_106 = arith.constant 0 : index
    %140 = vector.load %arg12[%c0_104, %c0_105, %c0_106] : memref<5x5x128xf32, #tpu.memory_space<vmem>>, vector<4x4x128xf32>
    %141 = vector.shape_cast %140 : vector<4x4x128xf32> to vector<16x128xf32>
    %c8_107 = arith.constant 8 : index
    %c0_108 = arith.constant 0 : index
    %c0_109 = arith.constant 0 : index
    %142 = vector.load %arg6[%c8_107, %c0_108, %c0_109] : memref<9x128x64xf32, #tpu.memory_space<vmem>>, vector<1x128x64xf32>
    %143 = vector.shape_cast %142 : vector<1x128x64xf32> to vector<128x64xf32>
    %cst_110 = arith.constant dense<0.000000e+00> : vector<16x64xf32>
    %144 = tpu.matmul %141, %143, %cst_110 {dimension_numbers = #tpu.dot_dimension_numbers<[1], [0], [0], [1], [0, 0, 1, 1], [], []>} : vector<16x128xf32>, vector<128x64xf32>, vector<16x64xf32> -> vector<16x64xf32>
    %145 = arith.addf %139, %144 : vector<16x64xf32>
    %c0_111 = arith.constant 0 : index
    %c1_112 = arith.constant 1 : index
    %c0_113 = arith.constant 0 : index
    %146 = vector.load %arg12[%c0_111, %c1_112, %c0_113] : memref<5x5x128xf32, #tpu.memory_space<vmem>>, vector<4x4x128xf32>
    %147 = vector.shape_cast %146 : vector<4x4x128xf32> to vector<16x128xf32>
    %c6_114 = arith.constant 6 : index
    %c0_115 = arith.constant 0 : index
    %c0_116 = arith.constant 0 : index
    %148 = vector.load %arg6[%c6_114, %c0_115, %c0_116] : memref<9x128x64xf32, #tpu.memory_space<vmem>>, vector<1x128x64xf32>
    %149 = vector.shape_cast %148 : vector<1x128x64xf32> to vector<128x64xf32>
    %cst_117 = arith.constant dense<0.000000e+00> : vector<16x64xf32>
    %150 = tpu.matmul %147, %149, %cst_117 {dimension_numbers = #tpu.dot_dimension_numbers<[1], [0], [0], [1], [0, 0, 1, 1], [], []>} : vector<16x128xf32>, vector<128x64xf32>, vector<16x64xf32> -> vector<16x64xf32>
    %151 = arith.addf %145, %150 : vector<16x64xf32>
    %c1_118 = arith.constant 1 : index
    %c0_119 = arith.constant 0 : index
    %c0_120 = arith.constant 0 : index
    %152 = vector.load %arg12[%c1_118, %c0_119, %c0_120] : memref<5x5x128xf32, #tpu.memory_space<vmem>>, vector<4x4x128xf32>
    %153 = vector.shape_cast %152 : vector<4x4x128xf32> to vector<16x128xf32>
    %c2_121 = arith.constant 2 : index
    %c0_122 = arith.constant 0 : index
    %c0_123 = arith.constant 0 : index
    %154 = vector.load %arg6[%c2_121, %c0_122, %c0_123] : memref<9x128x64xf32, #tpu.memory_space<vmem>>, vector<1x128x64xf32>
    %155 = vector.shape_cast %154 : vector<1x128x64xf32> to vector<128x64xf32>
    %cst_124 = arith.constant dense<0.000000e+00> : vector<16x64xf32>
    %156 = tpu.matmul %153, %155, %cst_124 {dimension_numbers = #tpu.dot_dimension_numbers<[1], [0], [0], [1], [0, 0, 1, 1], [], []>} : vector<16x128xf32>, vector<128x64xf32>, vector<16x64xf32> -> vector<16x64xf32>
    %157 = arith.addf %151, %156 : vector<16x64xf32>
    %c1_125 = arith.constant 1 : index
    %c1_126 = arith.constant 1 : index
    %c0_127 = arith.constant 0 : index
    %158 = vector.load %arg12[%c1_125, %c1_126, %c0_127] : memref<5x5x128xf32, #tpu.memory_space<vmem>>, vector<4x4x128xf32>
    %159 = vector.shape_cast %158 : vector<4x4x128xf32> to vector<16x128xf32>
    %c0_128 = arith.constant 0 : index
    %c0_129 = arith.constant 0 : index
    %c0_130 = arith.constant 0 : index
    %160 = vector.load %arg6[%c0_128, %c0_129, %c0_130] : memref<9x128x64xf32, #tpu.memory_space<vmem>>, vector<1x128x64xf32>
    %161 = vector.shape_cast %160 : vector<1x128x64xf32> to vector<128x64xf32>
    %cst_131 = arith.constant dense<0.000000e+00> : vector<16x64xf32>
    %162 = tpu.matmul %159, %161, %cst_131 {dimension_numbers = #tpu.dot_dimension_numbers<[1], [0], [0], [1], [0, 0, 1, 1], [], []>} : vector<16x128xf32>, vector<128x64xf32>, vector<16x64xf32> -> vector<16x64xf32>
    %163 = arith.addf %157, %162 : vector<16x64xf32>
    %c0_132 = arith.constant 0 : index
    %c0_133 = arith.constant 0 : index
    %164 = vector.load %arg7[%c0_132, %c0_133] : memref<1x64xf32, #tpu.memory_space<vmem>>, vector<1x64xf32>
    %165 = vector.broadcast %164 : vector<1x64xf32> to vector<16x64xf32>
    %166 = arith.addf %163, %165 : vector<16x64xf32>
    %cst_134 = arith.constant 0.000000e+00 : f32
    %167 = vector.broadcast %cst_134 : f32 to vector<16x64xf32>
    %168 = arith.maximumf %166, %167 : vector<16x64xf32>
    %169 = vector.shape_cast %168 : vector<16x64xf32> to vector<4x4x64xf32>
    %170 = vector.shape_cast %100 : vector<4x4x64xf32> to vector<4x4x1x64xf32>
    %171 = vector.shape_cast %119 : vector<4x4x64xf32> to vector<4x4x1x64xf32>
    %172 = tpu.concatenate %170, %171 in 2 : vector<4x4x1x64xf32>, vector<4x4x1x64xf32> -> vector<4x4x2x64xf32>
    %173 = vector.shape_cast %172 : vector<4x4x2x64xf32> to vector<4x8x64xf32>
    %174 = vector.shape_cast %173 : vector<4x8x64xf32> to vector<4x1x8x64xf32>
    %175 = vector.shape_cast %138 : vector<4x4x64xf32> to vector<4x4x1x64xf32>
    %176 = vector.shape_cast %169 : vector<4x4x64xf32> to vector<4x4x1x64xf32>
    %177 = tpu.concatenate %175, %176 in 2 : vector<4x4x1x64xf32>, vector<4x4x1x64xf32> -> vector<4x4x2x64xf32>
    %178 = vector.shape_cast %177 : vector<4x4x2x64xf32> to vector<4x8x64xf32>
    %179 = vector.shape_cast %178 : vector<4x8x64xf32> to vector<4x1x8x64xf32>
    %180 = tpu.concatenate %174, %179 in 1 : vector<4x1x8x64xf32>, vector<4x1x8x64xf32> -> vector<4x2x8x64xf32>
    %181 = vector.shape_cast %180 : vector<4x2x8x64xf32> to vector<8x8x64xf32>
    %cst_135 = arith.constant 0.000000e+00 : f32
    %182 = vector.broadcast %cst_135 : f32 to vector<9x9x64xf32>
    %c0_136 = arith.constant 0 : index
    %c0_137 = arith.constant 0 : index
    %c0_138 = arith.constant 0 : index
    %183 = vector.load %arg13[%c0_136, %c0_137, %c0_138] : memref<9x9x64xf32, #tpu.memory_space<vmem>>, vector<9x9x64xf32>
    tpu.vector_store %arg13[%c0_136, %c0_137, %c0_138], %182 {strides = array<i32>} : memref<9x9x64xf32, #tpu.memory_space<vmem>>, vector<9x9x64xf32>,
    %c0_139 = arith.constant 0 : index
    %c0_140 = arith.constant 0 : index
    %c0_141 = arith.constant 0 : index
    %184 = vector.load %arg13[%c0_139, %c0_140, %c0_141] : memref<9x9x64xf32, #tpu.memory_space<vmem>>, vector<8x8x64xf32>
    tpu.vector_store %arg13[%c0_139, %c0_140, %c0_141], %181 {strides = array<i32>} : memref<9x9x64xf32, #tpu.memory_space<vmem>>, vector<8x8x64xf32>,
    %cst_142 = arith.constant 0.000000e+00 : f32
    %185 = vector.broadcast %cst_142 : f32 to vector<64x128xf32>
    %c0_143 = arith.constant 0 : index
    %c0_144 = arith.constant 0 : index
    %c0_145 = arith.constant 0 : index
    %186 = vector.load %arg13[%c0_143, %c0_144, %c0_145] : memref<9x9x64xf32, #tpu.memory_space<vmem>>, vector<8x8x64xf32>
    %187 = vector.shape_cast %186 : vector<8x8x64xf32> to vector<64x64xf32>
    %c4_146 = arith.constant 4 : index
    %c0_147 = arith.constant 0 : index
    %c0_148 = arith.constant 0 : index
    %188 = vector.load %arg8[%c4_146, %c0_147, %c0_148] : memref<9x64x128xf32, #tpu.memory_space<vmem>>, vector<1x64x128xf32>
    %189 = vector.shape_cast %188 : vector<1x64x128xf32> to vector<64x128xf32>
    %cst_149 = arith.constant dense<0.000000e+00> : vector<64x128xf32>
    %190 = tpu.matmul %187, %189, %cst_149 {dimension_numbers = #tpu.dot_dimension_numbers<[1], [0], [0], [1], [0, 0, 1, 1], [], []>} : vector<64x64xf32>, vector<64x128xf32>, vector<64x128xf32> -> vector<64x128xf32>
    %191 = arith.addf %185, %190 : vector<64x128xf32>
    %c0_150 = arith.constant 0 : index
    %c0_151 = arith.constant 0 : index
    %192 = vector.load %arg9[%c0_150, %c0_151] : memref<1x128xf32, #tpu.memory_space<vmem>>, vector<1x128xf32>
    %193 = vector.broadcast %192 : vector<1x128xf32> to vector<64x128xf32>
    %194 = arith.addf %191, %193 : vector<64x128xf32>
    %cst_152 = arith.constant 0.000000e+00 : f32
    %195 = vector.broadcast %cst_152 : f32 to vector<64x128xf32>
    %196 = arith.subf %195, %194 : vector<64x128xf32>
    %197 = math.exp %196 : vector<64x128xf32>
    %cst_153 = arith.constant 1.000000e+00 : f32
    %198 = vector.broadcast %cst_153 : f32 to vector<64x128xf32>
    %199 = arith.addf %198, %197 : vector<64x128xf32>
    %cst_154 = arith.constant 1.000000e+00 : f32
    %200 = vector.broadcast %cst_154 : f32 to vector<64x128xf32>
    %201 = arith.divf %200, %199 : vector<64x128xf32>
    %c0_155 = arith.constant 0 : index
    %c0_156 = arith.constant 0 : index
    %c0_157 = arith.constant 0 : index
    %c0_158 = arith.constant 0 : index
    %202 = vector.load %arg10[%c0_155, %c0_156, %c0_157, %c0_158] : memref<1x4x64x128xf32, #tpu.memory_space<vmem>>, vector<1x1x64x128xf32>
    %203 = vector.shape_cast %202 : vector<1x1x64x128xf32> to vector<64x128xf32>
    %204 = vector.shape_cast %201 : vector<64x128xf32> to vector<1x1x64x128xf32>
    tpu.vector_store %arg10[%c0_155, %c0_156, %c0_157, %c0_158], %204 {strides = array<i32>} : memref<1x4x64x128xf32, #tpu.memory_space<vmem>>, vector<1x1x64x128xf32>,
    %cst_159 = arith.constant 0.000000e+00 : f32
    %205 = vector.broadcast %cst_159 : f32 to vector<64x128xf32>
    %c0_160 = arith.constant 0 : index
    %c0_161 = arith.constant 0 : index
    %c0_162 = arith.constant 0 : index
    %206 = vector.load %arg13[%c0_160, %c0_161, %c0_162] : memref<9x9x64xf32, #tpu.memory_space<vmem>>, vector<8x8x64xf32>
    %207 = vector.shape_cast %206 : vector<8x8x64xf32> to vector<64x64xf32>
    %c5_163 = arith.constant 5 : index
    %c0_164 = arith.constant 0 : index
    %c0_165 = arith.constant 0 : index
    %208 = vector.load %arg8[%c5_163, %c0_164, %c0_165] : memref<9x64x128xf32, #tpu.memory_space<vmem>>, vector<1x64x128xf32>
    %209 = vector.shape_cast %208 : vector<1x64x128xf32> to vector<64x128xf32>
    %cst_166 = arith.constant dense<0.000000e+00> : vector<64x128xf32>
    %210 = tpu.matmul %207, %209, %cst_166 {dimension_numbers = #tpu.dot_dimension_numbers<[1], [0], [0], [1], [0, 0, 1, 1], [], []>} : vector<64x64xf32>, vector<64x128xf32>, vector<64x128xf32> -> vector<64x128xf32>
    %211 = arith.addf %205, %210 : vector<64x128xf32>
    %c0_167 = arith.constant 0 : index
    %c1_168 = arith.constant 1 : index
    %c0_169 = arith.constant 0 : index
    %212 = vector.load %arg13[%c0_167, %c1_168, %c0_169] : memref<9x9x64xf32, #tpu.memory_space<vmem>>, vector<8x8x64xf32>
    %213 = vector.shape_cast %212 : vector<8x8x64xf32> to vector<64x64xf32>
    %c3_170 = arith.constant 3 : index
    %c0_171 = arith.constant 0 : index
    %c0_172 = arith.constant 0 : index
    %214 = vector.load %arg8[%c3_170, %c0_171, %c0_172] : memref<9x64x128xf32, #tpu.memory_space<vmem>>, vector<1x64x128xf32>
    %215 = vector.shape_cast %214 : vector<1x64x128xf32> to vector<64x128xf32>
    %cst_173 = arith.constant dense<0.000000e+00> : vector<64x128xf32>
    %216 = tpu.matmul %213, %215, %cst_173 {dimension_numbers = #tpu.dot_dimension_numbers<[1], [0], [0], [1], [0, 0, 1, 1], [], []>} : vector<64x64xf32>, vector<64x128xf32>, vector<64x128xf32> -> vector<64x128xf32>
    %217 = arith.addf %211, %216 : vector<64x128xf32>
    %c0_174 = arith.constant 0 : index
    %c0_175 = arith.constant 0 : index
    %218 = vector.load %arg9[%c0_174, %c0_175] : memref<1x128xf32, #tpu.memory_space<vmem>>, vector<1x128xf32>
    %219 = vector.broadcast %218 : vector<1x128xf32> to vector<64x128xf32>
    %220 = arith.addf %217, %219 : vector<64x128xf32>
    %cst_176 = arith.constant 0.000000e+00 : f32
    %221 = vector.broadcast %cst_176 : f32 to vector<64x128xf32>
    %222 = arith.subf %221, %220 : vector<64x128xf32>
    %223 = math.exp %222 : vector<64x128xf32>
    %cst_177 = arith.constant 1.000000e+00 : f32
    %224 = vector.broadcast %cst_177 : f32 to vector<64x128xf32>
    %225 = arith.addf %224, %223 : vector<64x128xf32>
    %cst_178 = arith.constant 1.000000e+00 : f32
    %226 = vector.broadcast %cst_178 : f32 to vector<64x128xf32>
    %227 = arith.divf %226, %225 : vector<64x128xf32>
    %c0_179 = arith.constant 0 : index
    %c1_180 = arith.constant 1 : index
    %c0_181 = arith.constant 0 : index
    %c0_182 = arith.constant 0 : index
    %228 = vector.load %arg10[%c0_179, %c1_180, %c0_181, %c0_182] : memref<1x4x64x128xf32, #tpu.memory_space<vmem>>, vector<1x1x64x128xf32>
    %229 = vector.shape_cast %228 : vector<1x1x64x128xf32> to vector<64x128xf32>
    %230 = vector.shape_cast %227 : vector<64x128xf32> to vector<1x1x64x128xf32>
    tpu.vector_store %arg10[%c0_179, %c1_180, %c0_181, %c0_182], %230 {strides = array<i32>} : memref<1x4x64x128xf32, #tpu.memory_space<vmem>>, vector<1x1x64x128xf32>,
    %cst_183 = arith.constant 0.000000e+00 : f32
    %231 = vector.broadcast %cst_183 : f32 to vector<64x128xf32>
    %c0_184 = arith.constant 0 : index
    %c0_185 = arith.constant 0 : index
    %c0_186 = arith.constant 0 : index
    %232 = vector.load %arg13[%c0_184, %c0_185, %c0_186] : memref<9x9x64xf32, #tpu.memory_space<vmem>>, vector<8x8x64xf32>
    %233 = vector.shape_cast %232 : vector<8x8x64xf32> to vector<64x64xf32>
    %c7_187 = arith.constant 7 : index
    %c0_188 = arith.constant 0 : index
    %c0_189 = arith.constant 0 : index
    %234 = vector.load %arg8[%c7_187, %c0_188, %c0_189] : memref<9x64x128xf32, #tpu.memory_space<vmem>>, vector<1x64x128xf32>
    %235 = vector.shape_cast %234 : vector<1x64x128xf32> to vector<64x128xf32>
    %cst_190 = arith.constant dense<0.000000e+00> : vector<64x128xf32>
    %236 = tpu.matmul %233, %235, %cst_190 {dimension_numbers = #tpu.dot_dimension_numbers<[1], [0], [0], [1], [0, 0, 1, 1], [], []>} : vector<64x64xf32>, vector<64x128xf32>, vector<64x128xf32> -> vector<64x128xf32>
    %237 = arith.addf %231, %236 : vector<64x128xf32>
    %c1_191 = arith.constant 1 : index
    %c0_192 = arith.constant 0 : index
    %c0_193 = arith.constant 0 : index
    %238 = vector.load %arg13[%c1_191, %c0_192, %c0_193] : memref<9x9x64xf32, #tpu.memory_space<vmem>>, vector<8x8x64xf32>
    %239 = vector.shape_cast %238 : vector<8x8x64xf32> to vector<64x64xf32>
    %c1_194 = arith.constant 1 : index
    %c0_195 = arith.constant 0 : index
    %c0_196 = arith.constant 0 : index
    %240 = vector.load %arg8[%c1_194, %c0_195, %c0_196] : memref<9x64x128xf32, #tpu.memory_space<vmem>>, vector<1x64x128xf32>
    %241 = vector.shape_cast %240 : vector<1x64x128xf32> to vector<64x128xf32>
    %cst_197 = arith.constant dense<0.000000e+00> : vector<64x128xf32>
    %242 = tpu.matmul %239, %241, %cst_197 {dimension_numbers = #tpu.dot_dimension_numbers<[1], [0], [0], [1], [0, 0, 1, 1], [], []>} : vector<64x64xf32>, vector<64x128xf32>, vector<64x128xf32> -> vector<64x128xf32>
    %243 = arith.addf %237, %242 : vector<64x128xf32>
    %c0_198 = arith.constant 0 : index
    %c0_199 = arith.constant 0 : index
    %244 = vector.load %arg9[%c0_198, %c0_199] : memref<1x128xf32, #tpu.memory_space<vmem>>, vector<1x128xf32>
    %245 = vector.broadcast %244 : vector<1x128xf32> to vector<64x128xf32>
    %246 = arith.addf %243, %245 : vector<64x128xf32>
    %cst_200 = arith.constant 0.000000e+00 : f32
    %247 = vector.broadcast %cst_200 : f32 to vector<64x128xf32>
    %248 = arith.subf %247, %246 : vector<64x128xf32>
    %249 = math.exp %248 : vector<64x128xf32>
    %cst_201 = arith.constant 1.000000e+00 : f32
    %250 = vector.broadcast %cst_201 : f32 to vector<64x128xf32>
    %251 = arith.addf %250, %249 : vector<64x128xf32>
    %cst_202 = arith.constant 1.000000e+00 : f32
    %252 = vector.broadcast %cst_202 : f32 to vector<64x128xf32>
    %253 = arith.divf %252, %251 : vector<64x128xf32>
    %c0_203 = arith.constant 0 : index
    %c2_204 = arith.constant 2 : index
    %c0_205 = arith.constant 0 : index
    %c0_206 = arith.constant 0 : index
    %254 = vector.load %arg10[%c0_203, %c2_204, %c0_205, %c0_206] : memref<1x4x64x128xf32, #tpu.memory_space<vmem>>, vector<1x1x64x128xf32>
    %255 = vector.shape_cast %254 : vector<1x1x64x128xf32> to vector<64x128xf32>
    %256 = vector.shape_cast %253 : vector<64x128xf32> to vector<1x1x64x128xf32>
    tpu.vector_store %arg10[%c0_203, %c2_204, %c0_205, %c0_206], %256 {strides = array<i32>} : memref<1x4x64x128xf32, #tpu.memory_space<vmem>>, vector<1x1x64x128xf32>,
    %cst_207 = arith.constant 0.000000e+00 : f32
    %257 = vector.broadcast %cst_207 : f32 to vector<64x128xf32>
    %c0_208 = arith.constant 0 : index
    %c0_209 = arith.constant 0 : index
    %c0_210 = arith.constant 0 : index
    %258 = vector.load %arg13[%c0_208, %c0_209, %c0_210] : memref<9x9x64xf32, #tpu.memory_space<vmem>>, vector<8x8x64xf32>
    %259 = vector.shape_cast %258 : vector<8x8x64xf32> to vector<64x64xf32>
    %c8_211 = arith.constant 8 : index
    %c0_212 = arith.constant 0 : index
    %c0_213 = arith.constant 0 : index
    %260 = vector.load %arg8[%c8_211, %c0_212, %c0_213] : memref<9x64x128xf32, #tpu.memory_space<vmem>>, vector<1x64x128xf32>
    %261 = vector.shape_cast %260 : vector<1x64x128xf32> to vector<64x128xf32>
    %cst_214 = arith.constant dense<0.000000e+00> : vector<64x128xf32>
    %262 = tpu.matmul %259, %261, %cst_214 {dimension_numbers = #tpu.dot_dimension_numbers<[1], [0], [0], [1], [0, 0, 1, 1], [], []>} : vector<64x64xf32>, vector<64x128xf32>, vector<64x128xf32> -> vector<64x128xf32>
    %263 = arith.addf %257, %262 : vector<64x128xf32>
    %c0_215 = arith.constant 0 : index
    %c1_216 = arith.constant 1 : index
    %c0_217 = arith.constant 0 : index
    %264 = vector.load %arg13[%c0_215, %c1_216, %c0_217] : memref<9x9x64xf32, #tpu.memory_space<vmem>>, vector<8x8x64xf32>
    %265 = vector.shape_cast %264 : vector<8x8x64xf32> to vector<64x64xf32>
    %c6_218 = arith.constant 6 : index
    %c0_219 = arith.constant 0 : index
    %c0_220 = arith.constant 0 : index
    %266 = vector.load %arg8[%c6_218, %c0_219, %c0_220] : memref<9x64x128xf32, #tpu.memory_space<vmem>>, vector<1x64x128xf32>
    %267 = vector.shape_cast %266 : vector<1x64x128xf32> to vector<64x128xf32>
    %cst_221 = arith.constant dense<0.000000e+00> : vector<64x128xf32>
    %268 = tpu.matmul %265, %267, %cst_221 {dimension_numbers = #tpu.dot_dimension_numbers<[1], [0], [0], [1], [0, 0, 1, 1], [], []>} : vector<64x64xf32>, vector<64x128xf32>, vector<64x128xf32> -> vector<64x128xf32>
    %269 = arith.addf %263, %268 : vector<64x128xf32>
    %c1_222 = arith.constant 1 : index
    %c0_223 = arith.constant 0 : index
    %c0_224 = arith.constant 0 : index
    %270 = vector.load %arg13[%c1_222, %c0_223, %c0_224] : memref<9x9x64xf32, #tpu.memory_space<vmem>>, vector<8x8x64xf32>
    %271 = vector.shape_cast %270 : vector<8x8x64xf32> to vector<64x64xf32>
    %c2_225 = arith.constant 2 : index
    %c0_226 = arith.constant 0 : index
    %c0_227 = arith.constant 0 : index
    %272 = vector.load %arg8[%c2_225, %c0_226, %c0_227] : memref<9x64x128xf32, #tpu.memory_space<vmem>>, vector<1x64x128xf32>
    %273 = vector.shape_cast %272 : vector<1x64x128xf32> to vector<64x128xf32>
    %cst_228 = arith.constant dense<0.000000e+00> : vector<64x128xf32>
    %274 = tpu.matmul %271, %273, %cst_228 {dimension_numbers = #tpu.dot_dimension_numbers<[1], [0], [0], [1], [0, 0, 1, 1], [], []>} : vector<64x64xf32>, vector<64x128xf32>, vector<64x128xf32> -> vector<64x128xf32>
    %275 = arith.addf %269, %274 : vector<64x128xf32>
    %c1_229 = arith.constant 1 : index
    %c1_230 = arith.constant 1 : index
    %c0_231 = arith.constant 0 : index
    %276 = vector.load %arg13[%c1_229, %c1_230, %c0_231] : memref<9x9x64xf32, #tpu.memory_space<vmem>>, vector<8x8x64xf32>
    %277 = vector.shape_cast %276 : vector<8x8x64xf32> to vector<64x64xf32>
    %c0_232 = arith.constant 0 : index
    %c0_233 = arith.constant 0 : index
    %c0_234 = arith.constant 0 : index
    %278 = vector.load %arg8[%c0_232, %c0_233, %c0_234] : memref<9x64x128xf32, #tpu.memory_space<vmem>>, vector<1x64x128xf32>
    %279 = vector.shape_cast %278 : vector<1x64x128xf32> to vector<64x128xf32>
    %cst_235 = arith.constant dense<0.000000e+00> : vector<64x128xf32>
    %280 = tpu.matmul %277, %279, %cst_235 {dimension_numbers = #tpu.dot_dimension_numbers<[1], [0], [0], [1], [0, 0, 1, 1], [], []>} : vector<64x64xf32>, vector<64x128xf32>, vector<64x128xf32> -> vector<64x128xf32>
    %281 = arith.addf %275, %280 : vector<64x128xf32>
    %c0_236 = arith.constant 0 : index
    %c0_237 = arith.constant 0 : index
    %282 = vector.load %arg9[%c0_236, %c0_237] : memref<1x128xf32, #tpu.memory_space<vmem>>, vector<1x128xf32>
    %283 = vector.broadcast %282 : vector<1x128xf32> to vector<64x128xf32>
    %284 = arith.addf %281, %283 : vector<64x128xf32>
    %cst_238 = arith.constant 0.000000e+00 : f32
    %285 = vector.broadcast %cst_238 : f32 to vector<64x128xf32>
    %286 = arith.subf %285, %284 : vector<64x128xf32>
    %287 = math.exp %286 : vector<64x128xf32>
    %cst_239 = arith.constant 1.000000e+00 : f32
    %288 = vector.broadcast %cst_239 : f32 to vector<64x128xf32>
    %289 = arith.addf %288, %287 : vector<64x128xf32>
    %cst_240 = arith.constant 1.000000e+00 : f32
    %290 = vector.broadcast %cst_240 : f32 to vector<64x128xf32>
    %291 = arith.divf %290, %289 : vector<64x128xf32>
    %c0_241 = arith.constant 0 : index
    %c3_242 = arith.constant 3 : index
    %c0_243 = arith.constant 0 : index
    %c0_244 = arith.constant 0 : index
    %292 = vector.load %arg10[%c0_241, %c3_242, %c0_243, %c0_244] : memref<1x4x64x128xf32, #tpu.memory_space<vmem>>, vector<1x1x64x128xf32>
    %293 = vector.shape_cast %292 : vector<1x1x64x128xf32> to vector<64x128xf32>
    %294 = vector.shape_cast %291 : vector<64x128xf32> to vector<1x1x64x128xf32>
    tpu.vector_store %arg10[%c0_241, %c3_242, %c0_243, %c0_244], %294 {strides = array<i32>} : memref<1x4x64x128xf32, #tpu.memory_space<vmem>>, vector<1x1x64x128xf32>,
    return
  }
  func.func @transform_0(%arg0: i32) -> (i32, i32, i32) {
    %c0_i32 = arith.constant 0 : i32
    %c0_i32_0 = arith.constant 0 : i32
    %c0_i32_1 = arith.constant 0 : i32
    return %arg0, %c0_i32, %c0_i32_0 : i32, i32, i32
  }
  func.func @transform_1(%arg0: i32) -> (i32, i32) {
    %c0_i32 = arith.constant 0 : i32
    %c0_i32_0 = arith.constant 0 : i32
    %c0_i32_1 = arith.constant 0 : i32
    return %c0_i32, %c0_i32_0 : i32, i32
  }
  func.func @transform_2(%arg0: i32) -> (i32, i32) {
    %c0_i32 = arith.constant 0 : i32
    %c0_i32_0 = arith.constant 0 : i32
    %c0_i32_1 = arith.constant 0 : i32
    return %c0_i32, %c0_i32_0 : i32, i32
  }
  func.func @transform_3(%arg0: i32) -> (i32, i32, i32) {
    %c0_i32 = arith.constant 0 : i32
    %c0_i32_0 = arith.constant 0 : i32
    %c0_i32_1 = arith.constant 0 : i32
    %c0_i32_2 = arith.constant 0 : i32
    return %c0_i32, %c0_i32_0, %c0_i32_1 : i32, i32, i32
  }
  func.func @transform_4(%arg0: i32) -> (i32, i32) {
    %c0_i32 = arith.constant 0 : i32
    %c0_i32_0 = arith.constant 0 : i32
    %c0_i32_1 = arith.constant 0 : i32
    return %c0_i32, %c0_i32_0 : i32, i32
  }
  func.func @transform_5(%arg0: i32) -> (i32, i32, i32) {
    %c0_i32 = arith.constant 0 : i32
    %c0_i32_0 = arith.constant 0 : i32
    %c0_i32_1 = arith.constant 0 : i32
    %c0_i32_2 = arith.constant 0 : i32
    return %c0_i32, %c0_i32_0, %c0_i32_1 : i32, i32, i32
  }
  func.func @transform_6(%arg0: i32) -> (i32, i32) {
    %c0_i32 = arith.constant 0 : i32
    %c0_i32_0 = arith.constant 0 : i32
    %c0_i32_1 = arith.constant 0 : i32
    return %c0_i32, %c0_i32_0 : i32, i32
  }
  func.func @transform_7(%arg0: i32) -> (i32, i32, i32) {
    %c0_i32 = arith.constant 0 : i32
    %c0_i32_0 = arith.constant 0 : i32
    %c0_i32_1 = arith.constant 0 : i32
    %c0_i32_2 = arith.constant 0 : i32
    return %c0_i32, %c0_i32_0, %c0_i32_1 : i32, i32, i32
  }
  func.func @transform_8(%arg0: i32) -> (i32, i32) {
    %c0_i32 = arith.constant 0 : i32
    %c0_i32_0 = arith.constant 0 : i32
    %c0_i32_1 = arith.constant 0 : i32
    return %c0_i32, %c0_i32_0 : i32, i32
  }
  func.func @transform_9(%arg0: i32) -> (i32, i32, i32, i32) {
    %c0_i32 = arith.constant 0 : i32
    %c0_i32_0 = arith.constant 0 : i32
    %c0_i32_1 = arith.constant 0 : i32
    %c0_i32_2 = arith.constant 0 : i32
    return %arg0, %c0_i32, %c0_i32_0, %c0_i32_1 : i32, i32, i32, i32
  }
}

</mosaic_0001>

<llo_original>
// kernel: conv_autoencoder_forward.1
$region0: #{conv_autoencoder_forward.1}
  #allocation0 [shape = 'u32[]', space=smem, size = 0x4, offset = 0x4, fixed_abs, tag = 'smem constant byte address 0x4 - core index']
  #allocation1 [shape = 'u32[72,128]{1,0:T(1,128)}', space=vmem, size = 0x9000, scoped, tag = 'internal scratch']
  #allocation2 [shape = 'f32[10,10,64]{2,1,0:T(8,128)}', space=vmem, size = 0x14000, scoped, tag = 'scratch operand']
  #allocation3 [shape = 'f32[5,5,128]{2,1,0:T(8,128)}', space=vmem, size = 0x5000, scoped, tag = 'scratch operand']
  #allocation4 [shape = 'f32[9,9,64]{2,1,0:T(8,128)}', space=vmem, size = 0x12000, scoped, tag = 'scratch operand']
  %s0 = inlined_call_operand.vmem [shape: f32[2,64,32], index: 0, kind: input, shape index: {}]
  %s1 = inlined_call_operand.vmem [shape: f32[32,64], index: 1, kind: input, shape index: {}]
  %s2 = inlined_call_operand.vmem [shape: f32[1,64], index: 2, kind: input, shape index: {}]
  %s3 = inlined_call_operand.vmem [shape: f32[9,64,128], index: 3, kind: input, shape index: {}]
  %s4 = inlined_call_operand.vmem [shape: f32[1,128], index: 4, kind: input, shape index: {}]
  %s5 = inlined_call_operand.vmem [shape: f32[9,128,64], index: 5, kind: input, shape index: {}]
  %s6 = inlined_call_operand.vmem [shape: f32[1,64], index: 6, kind: input, shape index: {}]
  %s7 = inlined_call_operand.vmem [shape: f32[9,64,128], index: 7, kind: input, shape index: {}]
  %s8 = inlined_call_operand.vmem [shape: f32[1,128], index: 8, kind: input, shape index: {}]
  %s9 = inlined_call_operand.vmem [shape: f32[2,4,64,128], index: 9, kind: output, shape index: {}]
  %s10 = sld [smem:[#allocation0]]
  $region69: #{conv_autoencoder_forward.1} parent=0
    _
  %s12 = ssub.s32 1, %s10
  %s13 = scalar_select 0, %s12, %s10
  loop: start=0, step=1, limit=4
  $region2: #{conv_autoencoder_forward.1} parent=0 // loop_pre_header
    _
  $region3: #{conv_autoencoder_forward.1} parent=0 // loop_header
    %s15 = sphi 0, %s19
    %p16 = scmp.ge.s32.totalorder %s15, 4
    %s25 = sphi 0, %s27
    %s28 = sphi 0, %s25
    %s29 = sphi 0, %s28
    %s45 = sphi 0, %s29
    %s49 = sphi 0, %s49
    %s51 = sphi 0, %s49
    %s52 = sphi 0, %s51
    %s66 = sphi 0, %s52
    %s70 = sphi 0, %s70
    %s72 = sphi 0, %s70
    %s73 = sphi 0, %s72
    %s87 = sphi 0, %s73
    %s91 = sphi 0, %s91
    %s93 = sphi 0, %s91
    %s94 = sphi 0, %s93
    %s108 = sphi 0, %s94
    %s112 = sphi 0, %s112
    %s114 = sphi 0, %s112
    %s115 = sphi 0, %s114
    %s129 = sphi 0, %s115
    %s133 = sphi 0, %s133
    %s135 = sphi 0, %s133
    %s136 = sphi 0, %s135
    %s150 = sphi 0, %s136
    %s154 = sphi 0, %s154
    %s156 = sphi 0, %s154
    %s157 = sphi 0, %s156
    %s171 = sphi 0, %s157
    %s175 = sphi 0, %s175
    %s177 = sphi 0, %s175
    %s178 = sphi 0, %s177
    %s192 = sphi 0, %s178
    %s196 = sphi 0, %s196
    %s198 = sphi 0, %s196
    %s199 = sphi 0, %s198
    %s213 = sphi 0, %s199
    %s219 = sphi 0, %s221
    %s222 = sphi 0, %s219
    %s223 = sphi 0, %s222
    %s239 = sphi 0, %s223
  $region4: #{conv_autoencoder_forward.1} parent=0 // loop_header_branch
    %18 = sbr.rel (%p16) target = $region8
  $region5: #{conv_autoencoder_forward.1} parent=0 // loop_body
    %s20 = ssub.s32 %s15, 1
    %s21 = ssub.s32 %s15, 2
    %s22 = sadd.s32 %s15, 1
    %s23 = ssub.s32 %s15, %s22
    %p24 = scmp.eq.s32.totalorder %s23, 0
    %s26 = sadd.s32 %s25, 1
    %s27 = scalar_select %p24, %s25, %s26
    %p30 = pneg %p24
    %p31 = scmp.eq.s32.totalorder %s15, 1
    %p32 = por %p30, %p31
    %p33 = scmp.ne.s32.totalorder %s25, %s28
    %p34 = scmp.eq.s32.totalorder %s15, 0
    %p35 = por %p33, %p34
    %p36 = scmp.ne.s32.totalorder %s25, %s28
    %p37 = scmp.eq.s32.totalorder %s20, 1
    %p38 = por %p36, %p37
    %p39 = scmp.ne.s32.totalorder %s28, %s29
    %p40 = scmp.eq.s32.totalorder %s20, 0
    %p41 = por %p39, %p40
    %p42 = scmp.ne.s32.totalorder %s28, %s29
    %p43 = scmp.eq.s32.totalorder %s21, 1
    %p44 = por %p42, %p43
    %p46 = scmp.ne.s32.totalorder %s29, %s45
    %p47 = scmp.eq.s32.totalorder %s21, 0
    %p48 = por %p46, %p47
    %s50 = sadd.s32 %s49, 1
    %p53 = scmp.eq.s32.totalorder %s15, 1
    %p54 = scmp.ne.s32.totalorder %s49, %s51
    %p55 = scmp.eq.s32.totalorder %s15, 0
    %p56 = por %p54, %p55
    %p57 = scmp.ne.s32.totalorder %s49, %s51
    %p58 = scmp.eq.s32.totalorder %s20, 1
    %p59 = por %p57, %p58
    %p60 = scmp.ne.s32.totalorder %s51, %s52
    %p61 = scmp.eq.s32.totalorder %s20, 0
    %p62 = por %p60, %p61
    %p63 = scmp.ne.s32.totalorder %s51, %s52
    %p64 = scmp.eq.s32.totalorder %s21, 1
    %p65 = por %p63, %p64
    %p67 = scmp.ne.s32.totalorder %s52, %s66
    %p68 = scmp.eq.s32.totalorder %s21, 0
    %p69 = por %p67, %p68
    %s71 = sadd.s32 %s70, 1
    %p74 = scmp.eq.s32.totalorder %s15, 1
    %p75 = scmp.ne.s32.totalorder %s70, %s72
    %p76 = scmp.eq.s32.totalorder %s15, 0
    %p77 = por %p75, %p76
    %p78 = scmp.ne.s32.totalorder %s70, %s72
    %p79 = scmp.eq.s32.totalorder %s20, 1
    %p80 = por %p78, %p79
    %p81 = scmp.ne.s32.totalorder %s72, %s73
    %p82 = scmp.eq.s32.totalorder %s20, 0
    %p83 = por %p81, %p82
    %p84 = scmp.ne.s32.totalorder %s72, %s73
    %p85 = scmp.eq.s32.totalorder %s21, 1
    %p86 = por %p84, %p85
    %p88 = scmp.ne.s32.totalorder %s73, %s87
    %p89 = scmp.eq.s32.totalorder %s21, 0
    %p90 = por %p88, %p89
    %s92 = sadd.s32 %s91, 1
    %p95 = scmp.eq.s32.totalorder %s15, 1
    %p96 = scmp.ne.s32.totalorder %s91, %s93
    %p97 = scmp.eq.s32.totalorder %s15, 0
    %p98 = por %p96, %p97
    %p99 = scmp.ne.s32.totalorder %s91, %s93
    %p100 = scmp.eq.s32.totalorder %s20, 1
    %p101 = por %p99, %p100
    %p102 = scmp.ne.s32.totalorder %s93, %s94
    %p103 = scmp.eq.s32.totalorder %s20, 0
    %p104 = por %p102, %p103
    %p105 = scmp.ne.s32.totalorder %s93, %s94
    %p106 = scmp.eq.s32.totalorder %s21, 1
    %p107 = por %p105, %p106
    %p109 = scmp.ne.s32.totalorder %s94, %s108
    %p110 = scmp.eq.s32.totalorder %s21, 0
    %p111 = por %p109, %p110
    %s113 = sadd.s32 %s112, 1
    %p116 = scmp.eq.s32.totalorder %s15, 1
    %p117 = scmp.ne.s32.totalorder %s112, %s114
    %p118 = scmp.eq.s32.totalorder %s15, 0
    %p119 = por %p117, %p118
    %p120 = scmp.ne.s32.totalorder %s112, %s114
    %p121 = scmp.eq.s32.totalorder %s20, 1
    %p122 = por %p120, %p121
    %p123 = scmp.ne.s32.totalorder %s114, %s115
    %p124 = scmp.eq.s32.totalorder %s20, 0
    %p125 = por %p123, %p124
    %p126 = scmp.ne.s32.totalorder %s114, %s115
    %p127 = scmp.eq.s32.totalorder %s21, 1
    %p128 = por %p126, %p127
    %p130 = scmp.ne.s32.totalorder %s115, %s129
    %p131 = scmp.eq.s32.totalorder %s21, 0
    %p132 = por %p130, %p131
    %s134 = sadd.s32 %s133, 1
    %p137 = scmp.eq.s32.totalorder %s15, 1
    %p138 = scmp.ne.s32.totalorder %s133, %s135
    %p139 = scmp.eq.s32.totalorder %s15, 0
    %p140 = por %p138, %p139
    %p141 = scmp.ne.s32.totalorder %s133, %s135
    %p142 = scmp.eq.s32.totalorder %s20, 1
    %p143 = por %p141, %p142
    %p144 = scmp.ne.s32.totalorder %s135, %s136
    %p145 = scmp.eq.s32.totalorder %s20, 0
    %p146 = por %p144, %p145
    %p147 = scmp.ne.s32.totalorder %s135, %s136
    %p148 = scmp.eq.s32.totalorder %s21, 1
    %p149 = por %p147, %p148
    %p151 = scmp.ne.s32.totalorder %s136, %s150
    %p152 = scmp.eq.s32.totalorder %s21, 0
    %p153 = por %p151, %p152
    %s155 = sadd.s32 %s154, 1
    %p158 = scmp.eq.s32.totalorder %s15, 1
    %p159 = scmp.ne.s32.totalorder %s154, %s156
    %p160 = scmp.eq.s32.totalorder %s15, 0
    %p161 = por %p159, %p160
    %p162 = scmp.ne.s32.totalorder %s154, %s156
    %p163 = scmp.eq.s32.totalorder %s20, 1
    %p164 = por %p162, %p163
    %p165 = scmp.ne.s32.totalorder %s156, %s157
    %p166 = scmp.eq.s32.totalorder %s20, 0
    %p167 = por %p165, %p166
    %p168 = scmp.ne.s32.totalorder %s156, %s157
    %p169 = scmp.eq.s32.totalorder %s21, 1
    %p170 = por %p168, %p169
    %p172 = scmp.ne.s32.totalorder %s157, %s171
    %p173 = scmp.eq.s32.totalorder %s21, 0
    %p174 = por %p172, %p173
    %s176 = sadd.s32 %s175, 1
    %p179 = scmp.eq.s32.totalorder %s15, 1
    %p180 = scmp.ne.s32.totalorder %s175, %s177
    %p181 = scmp.eq.s32.totalorder %s15, 0
    %p182 = por %p180, %p181
    %p183 = scmp.ne.s32.totalorder %s175, %s177
    %p184 = scmp.eq.s32.totalorder %s20, 1
    %p185 = por %p183, %p184
    %p186 = scmp.ne.s32.totalorder %s177, %s178
    %p187 = scmp.eq.s32.totalorder %s20, 0
    %p188 = por %p186, %p187
    %p189 = scmp.ne.s32.totalorder %s177, %s178
    %p190 = scmp.eq.s32.totalorder %s21, 1
    %p191 = por %p189, %p190
    %p193 = scmp.ne.s32.totalorder %s178, %s192
    %p194 = scmp.eq.s32.totalorder %s21, 0
    %p195 = por %p193, %p194
    %s197 = sadd.s32 %s196, 1
    %p200 = scmp.eq.s32.totalorder %s15, 1
    %p201 = scmp.ne.s32.totalorder %s196, %s198
    %p202 = scmp.eq.s32.totalorder %s15, 0
    %p203 = por %p201, %p202
    %p204 = scmp.ne.s32.totalorder %s196, %s198
    %p205 = scmp.eq.s32.totalorder %s20, 1
    %p206 = por %p204, %p205
    %p207 = scmp.ne.s32.totalorder %s198, %s199
    %p208 = scmp.eq.s32.totalorder %s20, 0
    %p209 = por %p207, %p208
    %p210 = scmp.ne.s32.totalorder %s198, %s199
    %p211 = scmp.eq.s32.totalorder %s21, 1
    %p212 = por %p210, %p211
    %p214 = scmp.ne.s32.totalorder %s199, %s213
    %p215 = scmp.eq.s32.totalorder %s21, 0
    %p216 = por %p214, %p215
    %s217 = ssub.s32 %s15, %s22
    %p218 = scmp.eq.s32.totalorder %s217, 0
    %s220 = sadd.s32 %s219, 1
    %s221 = scalar_select %p218, %s219, %s220
    %p224 = pneg %p218
    %p225 = scmp.eq.s32.totalorder %s15, 1
    %p226 = por %p224, %p225
    %p227 = scmp.ne.s32.totalorder %s219, %s222
    %p228 = scmp.eq.s32.totalorder %s15, 0
    %p229 = por %p227, %p228
    %p230 = scmp.ne.s32.totalorder %s219, %s222
    %p231 = scmp.eq.s32.totalorder %s20, 1
    %p232 = por %p230, %p231
    %p233 = scmp.ne.s32.totalorder %s222, %s223
    %p234 = scmp.eq.s32.totalorder %s20, 0
    %p235 = por %p233, %p234
    %p236 = scmp.ne.s32.totalorder %s222, %s223
    %p237 = scmp.eq.s32.totalorder %s21, 1
    %p238 = por %p236, %p237
    %p240 = scmp.ne.s32.totalorder %s223, %s239
    %p241 = scmp.eq.s32.totalorder %s21, 0
    %p242 = por %p240, %p241
    %p243 = scmp.le.s32.totalorder 1, %s15
    %p244 = scmp.lt.s32.totalorder %s15, 3
    %p245 = pnand %p243, %p244
    %p246 = pneg %p245
    // Predicated region
    $region9: #{conv_autoencoder_forward.1} parent=5 // pred_check
      _
    $region10: #{conv_autoencoder_forward.1} parent=5 // pred_check_branch
      %248 = sbr.rel (%p245) target = $region12
    $region11: #{conv_autoencoder_forward.1} parent=5 // pred_region
      %s249 = ssub.s32 %s15, 1
      // Predicated region
      $region13: #{conv_autoencoder_forward.1} parent=11 // pred_check
        %p250 = pneg %p62
      $region14: #{conv_autoencoder_forward.1} parent=11 // pred_check_branch
        %252 = sbr.rel (%p250) target = $region16
      $region15: #{conv_autoencoder_forward.1} parent=11 // pred_region
        _
      $region16: #{conv_autoencoder_forward.1} parent=11 // pred_fallthru
        _
      // Predicated region
      $region17: #{conv_autoencoder_forward.1} parent=11 // pred_check
        %p253 = pneg %p83
      $region18: #{conv_autoencoder_forward.1} parent=11 // pred_check_branch
        %255 = sbr.rel (%p253) target = $region20
      $region19: #{conv_autoencoder_forward.1} parent=11 // pred_region
        _
      $region20: #{conv_autoencoder_forward.1} parent=11 // pred_fallthru
        _
      // Predicated region
      $region21: #{conv_autoencoder_forward.1} parent=11 // pred_check
        %p256 = pneg %p104
      $region22: #{conv_autoencoder_forward.1} parent=11 // pred_check_branch
        %258 = sbr.rel (%p256) target = $region24
      $region23: #{conv_autoencoder_forward.1} parent=11 // pred_region
        _
      $region24: #{conv_autoencoder_forward.1} parent=11 // pred_fallthru
        _
      // Predicated region
      $region25: #{conv_autoencoder_forward.1} parent=11 // pred_check
        %p259 = pneg %p125
      $region26: #{conv_autoencoder_forward.1} parent=11 // pred_check_branch
        %261 = sbr.rel (%p259) target = $region28
      $region27: #{conv_autoencoder_forward.1} parent=11 // pred_region
        _
      $region28: #{conv_autoencoder_forward.1} parent=11 // pred_fallthru
        _
      // Predicated region
      $region29: #{conv_autoencoder_forward.1} parent=11 // pred_check
        %p262 = pneg %p146
      $region30: #{conv_autoencoder_forward.1} parent=11 // pred_check_branch
        %264 = sbr.rel (%p262) target = $region32
      $region31: #{conv_autoencoder_forward.1} parent=11 // pred_region
        _
      $region32: #{conv_autoencoder_forward.1} parent=11 // pred_fallthru
        _
      // Predicated region
      $region33: #{conv_autoencoder_forward.1} parent=11 // pred_check
        %p265 = pneg %p167
      $region34: #{conv_autoencoder_forward.1} parent=11 // pred_check_branch
        %267 = sbr.rel (%p265) target = $region36
      $region35: #{conv_autoencoder_forward.1} parent=11 // pred_region
        _
      $region36: #{conv_autoencoder_forward.1} parent=11 // pred_fallthru
        _
      // Predicated region
      $region37: #{conv_autoencoder_forward.1} parent=11 // pred_check
        %p268 = pneg %p188
      $region38: #{conv_autoencoder_forward.1} parent=11 // pred_check_branch
        %270 = sbr.rel (%p268) target = $region40
      $region39: #{conv_autoencoder_forward.1} parent=11 // pred_region
        _
      $region40: #{conv_autoencoder_forward.1} parent=11 // pred_fallthru
        _
      // Predicated region
      $region41: #{conv_autoencoder_forward.1} parent=11 // pred_check
        %p271 = pneg %p209
      $region42: #{conv_autoencoder_forward.1} parent=11 // pred_check_branch
        %273 = sbr.rel (%p271) target = $region44
      $region43: #{conv_autoencoder_forward.1} parent=11 // pred_region
        _
      $region44: #{conv_autoencoder_forward.1} parent=11 // pred_fallthru
        _
    $region12: #{conv_autoencoder_forward.1} parent=5 // pred_fallthru
      _
    %p274 = scmp.lt.s32.totalorder %s15, 2
    // Predicated region
    $region45: #{conv_autoencoder_forward.1} parent=5 // pred_check
      %p275 = pneg %p274
    $region46: #{conv_autoencoder_forward.1} parent=5 // pred_check_branch
      %277 = sbr.rel (%p275) target = $region48
    $region47: #{conv_autoencoder_forward.1} parent=5 // pred_region
      // Predicated region
      $region49: #{conv_autoencoder_forward.1} parent=47 // pred_check
        %p278 = pneg %p35
      $region50: #{conv_autoencoder_forward.1} parent=47 // pred_check_branch
        %280 = sbr.rel (%p278) target = $region52
      $region51: #{conv_autoencoder_forward.1} parent=47 // pred_region
        %p281 = scmp.lt.s32.totalorder %s15, 1
        %s282 = scalar_select %p281, %s15, 1
        %s283 = smul.addr %s282, 8
        %s284 = smul.addr %s283, 8
        %s285 = scalar_lea.vmem %s0, %s284
      $region52: #{conv_autoencoder_forward.1} parent=47 // pred_fallthru
        _
    $region48: #{conv_autoencoder_forward.1} parent=5 // pred_fallthru
      _
    %p286 = scmp.le.s32.totalorder 1, %s15
    %p287 = scmp.lt.s32.totalorder %s15, 3
    %p288 = pnand %p286, %p287
    %p289 = pneg %p288
    // Predicated region
    $region53: #{conv_autoencoder_forward.1} parent=5 // pred_check
      _
    $region54: #{conv_autoencoder_forward.1} parent=5 // pred_check_branch
      %291 = sbr.rel (%p288) target = $region56
    $region55: #{conv_autoencoder_forward.1} parent=5 // pred_region
      %s292 = ssub.s32 %s15, 1
      %p293 = scmp.lt.s32.totalorder %s20, 1
      %s294 = scalar_select %p293, %s20, 1
      %s295 = smul.addr %s294, 8
      %s296 = smul.addr %s295, 8
      %s297 = scalar_lea.vmem %s0, %s296
      %p298 = pneg %p41
      %p299 = pneg %p38
      %p300 = pneg %p62
      %p301 = pneg %p59
      %p302 = pneg %p83
      %p303 = pneg %p80
      %p304 = pneg %p104
      %p305 = pneg %p101
      %p306 = pneg %p125
      %p307 = pneg %p122
      %p308 = pneg %p146
      %p309 = pneg %p143
      %p310 = pneg %p167
      %p311 = pneg %p164
      %p312 = pneg %p188
      %p313 = pneg %p185
      %p314 = pneg %p209
      %p315 = pneg %p206
      %p316 = pneg %p235
      %p317 = pneg %p232
      %p318 = scmp.lt.s32.totalorder %s20, 1
      %s319 = scalar_select %p318, %s20, 1
      %s320 = smul.addr %s319, 32
      %s321 = smul.addr %s320, 8
      %s322 = scalar_lea.vmem %s9, %s321
      %p323 = scmp.lt.s32.totalorder %s20, 1
      %s324 = scalar_select %p323, %s20, 1
      %s325 = smul.addr %s324, 8
      %s326 = smul.addr %s325, 8
      %s327 = scalar_lea.vmem %s0, %s326
      %p328 = scmp.lt.s32.totalorder %s20, 1
      %s329 = scalar_select %p328, %s20, 1
      %s330 = smul.addr %s329, 32
      %s331 = smul.addr %s330, 8
      %s332 = scalar_lea.vmem %s9, %s331
      %v333 = vld [vmem:[%s327] sm:$0xff]
      %v334 = vld [vmem:[%s327 + $0x8] sm:$0xff]
      %v335 = vld [vmem:[%s327 + $0x10] sm:$0xff]
      %v336 = vld [vmem:[%s327 + $0x18] sm:$0xff]
      %v337 = vld [vmem:[%s327 + $0x20] sm:$0xff]
      %v338 = vld [vmem:[%s327 + $0x28] sm:$0xff]
      %v339 = vld [vmem:[%s327 + $0x30] sm:$0xff]
      %v340 = vld [vmem:[%s327 + $0x38] sm:$0xff]
      %v341 = vld [vmem:[%s1] sm:$0xff]
      %v342 = vld [vmem:[%s1 + $0x8] sm:$0xff]
      %v343 = vld [vmem:[%s1 + $0x10] sm:$0xff]
      %v344 = vld [vmem:[%s1 + $0x18] sm:$0xff]
      %v345 = vld [vmem:[%s2] sm:$0x1]
      %v347 = vperm.slane %v345, 0
      %vm349 = vcmask 261120
      %v351 = vsel %vm349, %v333, 0
      %v354 = vsel %vm349, %v334, 0
      %v357 = vsel %vm349, %v335, 0
      %v360 = vsel %vm349, %v336, 0
      %v363 = vsel %vm349, %v337, 0
      %v366 = vsel %vm349, %v338, 0
      %v369 = vsel %vm349, %v339, 0
      %v372 = vsel %vm349, %v340, 0
      %374 = vmatpush.msra.mxu0 0.0
      %375 = vmatpush.msra.mxu0 0.0
      %376 = vmatpush.msra.mxu0 0.0
      %377 = vmatpush.msra.mxu0 0.0
      %378 = vmatpush.msra.mxu0 0.0
      %379 = vmatpush.msra.mxu0 0.0
      %380 = vmatpush.msra.mxu0 0.0
      %381 = vmatpush.msra.mxu0 0.0
      %382 = vmatpush.msra.mxu0 0.0
      %383 = vmatpush.msra.mxu0 0.0
      %384 = vmatpush.msra.mxu0 0.0
      %385 = vmatpush.msra.mxu0 0.0
      %386 = vmatpush.msra.mxu0 %v344
      %387 = vmatpush.msra.mxu0 %v343
      %388 = vmatpush.msra.mxu0 %v342
      %389 = vmatpush.msra.mxu0 %v341
      %390 = vmatmul.f32.gmra.mxu0 %v351
      %v391 = vpop.f32.mrf.mxu0
      %v392 = vadd.f32 %v347, %v391
      %393 = vmatmul.f32.gmra.mxu0 %v354
      %v394 = vpop.f32.mrf.mxu0
      %v395 = vadd.f32 %v347, %v394
      %396 = vmatmul.f32.gmra.mxu0 %v357
      %v397 = vpop.f32.mrf.mxu0
      %v398 = vadd.f32 %v347, %v397
      %399 = vmatmul.f32.gmra.mxu0 %v360
      %v400 = vpop.f32.mrf.mxu0
      %v401 = vadd.f32 %v347, %v400
      %402 = vmatmul.f32.gmra.mxu0 %v363
      %v403 = vpop.f32.mrf.mxu0
      %v404 = vadd.f32 %v347, %v403
      %405 = vmatmul.f32.gmra.mxu0 %v366
      %v406 = vpop.f32.mrf.mxu0
      %v407 = vadd.f32 %v347, %v406
      %408 = vmatmul.f32.gmra.mxu0 %v369
      %v409 = vpop.f32.mrf.mxu0
      %v410 = vadd.f32 %v347, %v409
      %411 = vmatmul.f32.gmra.mxu0 %v372
      %v412 = vpop.f32.mrf.mxu0
      %v413 = vadd.f32 %v347, %v412
      %414 = vdwg.mxu0
      %v415 = vmax.f32 %v392, 0.0
      %v416 = vmax.f32 %v395, 0.0
      %v417 = vmax.f32 %v398, 0.0
      %v418 = vmax.f32 %v401, 0.0
      %v419 = vmax.f32 %v404, 0.0
      %v420 = vmax.f32 %v407, 0.0
      %v421 = vmax.f32 %v410, 0.0
      %v422 = vmax.f32 %v413, 0.0
      %vm423 = vcmask 523264
      %424 = vst.msk [vmem:[#allocation2] sm:$0xff] %vm423, 0.0
      %vm425 = vcmask 517120
      %426 = vst.msk [vmem:[#allocation2 + $0x8] sm:$0x3] %vm425, 0.0
      %427 = vst.msk [vmem:[#allocation2 + $0x10] sm:$0xff] %vm423, 0.0
      %428 = vst.msk [vmem:[#allocation2 + $0x18] sm:$0x3] %vm425, 0.0
      %429 = vst.msk [vmem:[#allocation2 + $0x20] sm:$0xff] %vm423, 0.0
      %430 = vst.msk [vmem:[#allocation2 + $0x28] sm:$0x3] %vm425, 0.0
      %431 = vst.msk [vmem:[#allocation2 + $0x30] sm:$0xff] %vm423, 0.0
      %432 = vst.msk [vmem:[#allocation2 + $0x38] sm:$0x3] %vm425, 0.0
      %433 = vst.msk [vmem:[#allocation2 + $0x40] sm:$0xff] %vm423, 0.0
      %434 = vst.msk [vmem:[#allocation2 + $0x48] sm:$0x3] %vm425, 0.0
      %435 = vst.msk [vmem:[#allocation2 + $0x50] sm:$0xff] %vm423, 0.0
      %436 = vst.msk [vmem:[#allocation2 + $0x58] sm:$0x3] %vm425, 0.0
      %437 = vst.msk [vmem:[#allocation2 + $0x60] sm:$0xff] %vm423, 0.0
      %438 = vst.msk [vmem:[#allocation2 + $0x68] sm:$0x3] %vm425, 0.0
      %439 = vst.msk [vmem:[#allocation2 + $0x70] sm:$0xff] %vm423, 0.0
      %440 = vst.msk [vmem:[#allocation2 + $0x78] sm:$0x3] %vm425, 0.0
      %441 = vst.msk [vmem:[#allocation2 + $0x80] sm:$0xff] %vm423, 0.0
      %442 = vst.msk [vmem:[#allocation2 + $0x88] sm:$0x3] %vm425, 0.0
      %443 = vst.msk [vmem:[#allocation2 + $0x90] sm:$0xff] %vm423, 0.0
      %444 = vst.msk [vmem:[#allocation2 + $0x98] sm:$0x3] %vm425, 0.0
      %s445 = scalar_lea.vmem [#allocation2], 16
      %446 = vst.msk [vmem:[%s445 + $0x1] sm:$0xff] %vm423, %v415
      %447 = vst.msk [vmem:[%s445 + $0x11] sm:$0xff] %vm423, %v416
      %448 = vst.msk [vmem:[%s445 + $0x21] sm:$0xff] %vm423, %v417
      %449 = vst.msk [vmem:[%s445 + $0x31] sm:$0xff] %vm423, %v418
      %450 = vst.msk [vmem:[%s445 + $0x41] sm:$0xff] %vm423, %v419
      %451 = vst.msk [vmem:[%s445 + $0x51] sm:$0xff] %vm423, %v420
      %452 = vst.msk [vmem:[%s445 + $0x61] sm:$0xff] %vm423, %v421
      %453 = vst.msk [vmem:[%s445 + $0x71] sm:$0xff] %vm423, %v422
      %v454 = vld [vmem:[#allocation2] sm:$0xff]
      %v455 = vld [vmem:[#allocation2 + $0x8] sm:$0x3]
      %v456 = vld [vmem:[#allocation2 + $0x10] sm:$0xff]
      %v457 = vld [vmem:[#allocation2 + $0x18] sm:$0x3]
      %v458 = vld [vmem:[#allocation2 + $0x20] sm:$0xff]
      %v459 = vld [vmem:[#allocation2 + $0x28] sm:$0x3]
      %v460 = vld [vmem:[#allocation2 + $0x30] sm:$0xff]
      %v461 = vld [vmem:[#allocation2 + $0x38] sm:$0x3]
      %v462 = vld [vmem:[#allocation2 + $0x40] sm:$0xff]
      %v463 = vld [vmem:[#allocation2 + $0x48] sm:$0x3]
      %v464 = vld [vmem:[#allocation2 + $0x50] sm:$0xff]
      %v465 = vld [vmem:[#allocation2 + $0x58] sm:$0x3]
      %v466 = vld [vmem:[#allocation2 + $0x60] sm:$0xff]
      %v467 = vld [vmem:[#allocation2 + $0x68] sm:$0x3]
      %v468 = vld [vmem:[#allocation2 + $0x70] sm:$0xff]
      %v469 = vld [vmem:[#allocation2 + $0x78] sm:$0x3]
      %v470 = vld [vmem:[#allocation2 + $0x80] sm:$0xff]
      %v471 = vld [vmem:[#allocation2 + $0x88] sm:$0x3]
      %v490 = vrot.slane %v454, 2
      %v491 = vrot.slane %v454, 4
      %v492 = vrot.slane %v454, 6
      %v493 = vrot.slane %v456, 2
      %v494 = vrot.slane %v456, 4
      %v495 = vrot.slane %v456, 6
      %v496 = vrot.slane %v458, 2
      %v497 = vrot.slane %v458, 4
      %v498 = vrot.slane %v458, 6
      %v499 = vrot.slane %v460, 2
      %v500 = vrot.slane %v460, 4
      %v501 = vrot.slane %v460, 6
      %v502 = vrot.slane %v462, 2
      %v503 = vrot.slane %v462, 4
      %v504 = vrot.slane %v462, 6
      %v505 = vrot.slane %v464, 2
      %v506 = vrot.slane %v464, 4
      %v507 = vrot.slane %v464, 6
      %v508 = vrot.slane %v466, 2
      %v509 = vrot.slane %v466, 4
      %v510 = vrot.slane %v466, 6
      %v511 = vrot.slane %v468, 2
      %v512 = vrot.slane %v468, 4
      %v513 = vrot.slane %v468, 6
      %v514 = vrot.slane %v470, 2
      %v515 = vrot.slane %v470, 4
      %v516 = vrot.slane %v470, 6
      %v517 = vld [vmem:[%s3] sm:$0xff]
      %v518 = vld [vmem:[%s3 + $0x8] sm:$0xff]
      %v519 = vld [vmem:[%s3 + $0x10] sm:$0xff]
      %v520 = vld [vmem:[%s3 + $0x18] sm:$0xff]
      %v521 = vld [vmem:[%s3 + $0x20] sm:$0xff]
      %v522 = vld [vmem:[%s3 + $0x28] sm:$0xff]
      %v523 = vld [vmem:[%s3 + $0x30] sm:$0xff]
      %v524 = vld [vmem:[%s3 + $0x38] sm:$0xff]
      %s525 = scalar_lea.vmem %s3, 64
      %v526 = vld [vmem:[%s525] sm:$0xff]
      %v527 = vld [vmem:[%s525 + $0x8] sm:$0xff]
      %v528 = vld [vmem:[%s525 + $0x10] sm:$0xff]
      %v529 = vld [vmem:[%s525 + $0x18] sm:$0xff]
      %v530 = vld [vmem:[%s525 + $0x20] sm:$0xff]
      %v531 = vld [vmem:[%s525 + $0x28] sm:$0xff]
      %v532 = vld [vmem:[%s525 + $0x30] sm:$0xff]
      %v533 = vld [vmem:[%s525 + $0x38] sm:$0xff]
      %v534 = vperm.slane %v454, 1
      %v535 = vperm.slane %v490, 1
      %v536 = vperm.slane %v491, 1
      %v537 = vperm.slane %v492, 1
      %v538 = vperm.slane %v458, 1
      %v539 = vperm.slane %v496, 1
      %v540 = vperm.slane %v497, 1
      %v541 = vperm.slane %v498, 1
      %v542 = vperm.slane %v462, 1
      %v543 = vperm.slane %v502, 1
      %v544 = vperm.slane %v503, 1
      %v545 = vperm.slane %v504, 1
      %v546 = vperm.slane %v466, 1
      %v547 = vperm.slane %v508, 1
      %v548 = vperm.slane %v509, 1
      %v549 = vperm.slane %v510, 1
      %vm550 = vcmask 1041409
      %v551 = vsel %vm550, %v535, %v534
      %vm552 = vcmask 1042434
      %v553 = vsel %vm552, %v536, %v551
      %vm554 = vcmask 1043459
      %v555 = vsel %vm554, %v537, %v553
      %vm556 = vcmask 1044484
      %v557 = vsel %vm556, %v538, %v555
      %vm558 = vcmask 1045509
      %v559 = vsel %vm558, %v539, %v557
      %vm560 = vcmask 1046534
      %v561 = vsel %vm560, %v540, %v559
      %vm562 = vcmask 1047559
      %v563 = vsel %vm562, %v541, %v561
      %v564 = vsel %vm550, %v543, %v542
      %v565 = vsel %vm552, %v544, %v564
      %v566 = vsel %vm554, %v545, %v565
      %v567 = vsel %vm556, %v546, %v566
      %v568 = vsel %vm558, %v547, %v567
      %v569 = vsel %vm560, %v548, %v568
      %v570 = vsel %vm562, %v549, %v569
      %v571 = vsel %vm423, %v563, 0
      %v573 = vsel %vm423, %v570, 0
      %575 = vmatpush.msra.mxu0 0.0
      %576 = vmatpush.msra.mxu0 0.0
      %577 = vmatpush.msra.mxu0 0.0
      %578 = vmatpush.msra.mxu0 0.0
      %579 = vmatpush.msra.mxu0 0.0
      %580 = vmatpush.msra.mxu0 0.0
      %581 = vmatpush.msra.mxu0 0.0
      %582 = vmatpush.msra.mxu0 0.0
      %583 = vmatpush.msra.mxu0 %v533
      %584 = vmatpush.msra.mxu0 %v532
      %585 = vmatpush.msra.mxu0 %v531
      %586 = vmatpush.msra.mxu0 %v530
      %587 = vmatpush.msra.mxu0 %v529
      %588 = vmatpush.msra.mxu0 %v528
      %589 = vmatpush.msra.mxu0 %v527
      %590 = vmatpush.msra.mxu0 %v526
      %591 = vmatmul.f32.gmra.mxu0 %v571
      %v592 = vpop.f32.mrf.mxu0
      %v593 = vadd.f32 0.0, %v592
      %594 = vmatmul.f32.gmra.mxu0 %v573
      %v595 = vpop.f32.mrf.mxu0
      %v596 = vadd.f32 0.0, %v595
      %597 = vdwg.mxu0
      %v598 = vperm.slane %v454, 0
      %v599 = vperm.slane %v490, 0
      %v600 = vperm.slane %v491, 0
      %v601 = vperm.slane %v492, 0
      %v602 = vperm.slane %v458, 0
      %v603 = vperm.slane %v496, 0
      %v604 = vperm.slane %v497, 0
      %v605 = vperm.slane %v498, 0
      %v606 = vperm.slane %v462, 0
      %v607 = vperm.slane %v502, 0
      %v608 = vperm.slane %v503, 0
      %v609 = vperm.slane %v504, 0
      %v610 = vperm.slane %v466, 0
      %v611 = vperm.slane %v508, 0
      %v612 = vperm.slane %v509, 0
      %v613 = vperm.slane %v510, 0
      %v614 = vsel %vm550, %v599, %v598
      %v615 = vsel %vm552, %v600, %v614
      %v616 = vsel %vm554, %v601, %v615
      %v617 = vsel %vm556, %v602, %v616
      %v618 = vsel %vm558, %v603, %v617
      %v619 = vsel %vm560, %v604, %v618
      %v620 = vsel %vm562, %v605, %v619
      %v621 = vsel %vm550, %v607, %v606
      %v622 = vsel %vm552, %v608, %v621
      %v623 = vsel %vm554, %v609, %v622
      %v624 = vsel %vm556, %v610, %v623
      %v625 = vsel %vm558, %v611, %v624
      %v626 = vsel %vm560, %v612, %v625
      %v627 = vsel %vm562, %v613, %v626
      %v628 = vsel %vm423, %v620, 0
      %v630 = vsel %vm423, %v627, 0
      %632 = vmatpush.msra.mxu0 0.0
      %633 = vmatpush.msra.mxu0 0.0
      %634 = vmatpush.msra.mxu0 0.0
      %635 = vmatpush.msra.mxu0 0.0
      %636 = vmatpush.msra.mxu0 0.0
      %637 = vmatpush.msra.mxu0 0.0
      %638 = vmatpush.msra.mxu0 0.0
      %639 = vmatpush.msra.mxu0 0.0
      %640 = vmatpush.msra.mxu0 %v524
      %641 = vmatpush.msra.mxu0 %v523
      %642 = vmatpush.msra.mxu0 %v522
      %643 = vmatpush.msra.mxu0 %v521
      %644 = vmatpush.msra.mxu0 %v520
      %645 = vmatpush.msra.mxu0 %v519
      %646 = vmatpush.msra.mxu0 %v518
      %647 = vmatpush.msra.mxu0 %v517
      %648 = vmatmul.f32.gmra.mxu0 %v628
      %v649 = vpop.f32.mrf.mxu0
      %v650 = vadd.f32 %v593, %v649
      %651 = vmatmul.f32.gmra.mxu0 %v630
      %v652 = vpop.f32.mrf.mxu0
      %v653 = vadd.f32 %v596, %v652
      %654 = vdwg.mxu0
      %s655 = scalar_lea.vmem %s3, 128
      %v656 = vld [vmem:[%s655] sm:$0xff]
      %v657 = vld [vmem:[%s655 + $0x8] sm:$0xff]
      %v658 = vld [vmem:[%s655 + $0x10] sm:$0xff]
      %v659 = vld [vmem:[%s655 + $0x18] sm:$0xff]
      %v660 = vld [vmem:[%s655 + $0x20] sm:$0xff]
      %v661 = vld [vmem:[%s655 + $0x28] sm:$0xff]
      %v662 = vld [vmem:[%s655 + $0x30] sm:$0xff]
      %v663 = vld [vmem:[%s655 + $0x38] sm:$0xff]
      %v664 = vperm.slane %v455, 0
      %v665 = vperm.slane %v459, 0
      %v666 = vperm.slane %v463, 0
      %v667 = vperm.slane %v467, 0
      %v668 = vsel %vm550, %v600, %v599
      %v669 = vsel %vm552, %v601, %v668
      %v670 = vsel %vm554, %v664, %v669
      %v671 = vsel %vm556, %v603, %v670
      %v672 = vsel %vm558, %v604, %v671
      %v673 = vsel %vm560, %v605, %v672
      %v674 = vsel %vm562, %v665, %v673
      %v675 = vsel %vm550, %v608, %v607
      %v676 = vsel %vm552, %v609, %v675
      %v677 = vsel %vm554, %v666, %v676
      %v678 = vsel %vm556, %v611, %v677
      %v679 = vsel %vm558, %v612, %v678
      %v680 = vsel %vm560, %v613, %v679
      %v681 = vsel %vm562, %v667, %v680
      %v682 = vsel %vm423, %v674, 0
      %v684 = vsel %vm423, %v681, 0
      %686 = vmatpush.msra.mxu0 0.0
      %687 = vmatpush.msra.mxu0 0.0
      %688 = vmatpush.msra.mxu0 0.0
      %689 = vmatpush.msra.mxu0 0.0
      %690 = vmatpush.msra.mxu0 0.0
      %691 = vmatpush.msra.mxu0 0.0
      %692 = vmatpush.msra.mxu0 0.0
      %693 = vmatpush.msra.mxu0 0.0
      %694 = vmatpush.msra.mxu0 %v663
      %695 = vmatpush.msra.mxu0 %v662
      %696 = vmatpush.msra.mxu0 %v661
      %697 = vmatpush.msra.mxu0 %v660
      %698 = vmatpush.msra.mxu0 %v659
      %699 = vmatpush.msra.mxu0 %v658
      %700 = vmatpush.msra.mxu0 %v657
      %701 = vmatpush.msra.mxu0 %v656
      %702 = vmatmul.f32.gmra.mxu0 %v682
      %v703 = vpop.f32.mrf.mxu0
      %v704 = vadd.f32 0.0, %v703
      %705 = vmatmul.f32.gmra.mxu0 %v684
      %v706 = vpop.f32.mrf.mxu0
      %v707 = vadd.f32 0.0, %v706
      %708 = vdwg.mxu0
      %v709 = vadd.f32 %v650, %v704
      %v710 = vadd.f32 %v653, %v707
      %s711 = scalar_lea.vmem %s3, 192
      %v712 = vld [vmem:[%s711] sm:$0xff]
      %v713 = vld [vmem:[%s711 + $0x8] sm:$0xff]
      %v714 = vld [vmem:[%s711 + $0x10] sm:$0xff]
      %v715 = vld [vmem:[%s711 + $0x18] sm:$0xff]
      %v716 = vld [vmem:[%s711 + $0x20] sm:$0xff]
      %v717 = vld [vmem:[%s711 + $0x28] sm:$0xff]
      %v718 = vld [vmem:[%s711 + $0x30] sm:$0xff]
      %v719 = vld [vmem:[%s711 + $0x38] sm:$0xff]
      %v720 = vperm.slane %v456, 0
      %v721 = vperm.slane %v493, 0
      %v722 = vperm.slane %v494, 0
      %v723 = vperm.slane %v495, 0
      %v724 = vperm.slane %v460, 0
      %v725 = vperm.slane %v499, 0
      %v726 = vperm.slane %v500, 0
      %v727 = vperm.slane %v501, 0
      %v728 = vperm.slane %v464, 0
      %v729 = vperm.slane %v505, 0
      %v730 = vperm.slane %v506, 0
      %v731 = vperm.slane %v507, 0
      %v732 = vperm.slane %v468, 0
      %v733 = vperm.slane %v511, 0
      %v734 = vperm.slane %v512, 0
      %v735 = vperm.slane %v513, 0
      %v736 = vsel %vm550, %v721, %v720
      %v737 = vsel %vm552, %v722, %v736
      %v738 = vsel %vm554, %v723, %v737
      %v739 = vsel %vm556, %v724, %v738
      %v740 = vsel %vm558, %v725, %v739
      %v741 = vsel %vm560, %v726, %v740
      %v742 = vsel %vm562, %v727, %v741
      %v743 = vsel %vm550, %v729, %v728
      %v744 = vsel %vm552, %v730, %v743
      %v745 = vsel %vm554, %v731, %v744
      %v746 = vsel %vm556, %v732, %v745
      %v747 = vsel %vm558, %v733, %v746
      %v748 = vsel %vm560, %v734, %v747
      %v749 = vsel %vm562, %v735, %v748
      %v750 = vsel %vm423, %v742, 0
      %v752 = vsel %vm423, %v749, 0
      %754 = vmatpush.msra.mxu0 0.0
      %755 = vmatpush.msra.mxu0 0.0
      %756 = vmatpush.msra.mxu0 0.0
      %757 = vmatpush.msra.mxu0 0.0
      %758 = vmatpush.msra.mxu0 0.0
      %759 = vmatpush.msra.mxu0 0.0
      %760 = vmatpush.msra.mxu0 0.0
      %761 = vmatpush.msra.mxu0 0.0
      %762 = vmatpush.msra.mxu0 %v719
      %763 = vmatpush.msra.mxu0 %v718
      %764 = vmatpush.msra.mxu0 %v717
      %765 = vmatpush.msra.mxu0 %v716
      %766 = vmatpush.msra.mxu0 %v715
      %767 = vmatpush.msra.mxu0 %v714
      %768 = vmatpush.msra.mxu0 %v713
      %769 = vmatpush.msra.mxu0 %v712
      %770 = vmatmul.f32.gmra.mxu0 %v750
      %v771 = vpop.f32.mrf.mxu0
      %v772 = vadd.f32 0.0, %v771
      %773 = vmatmul.f32.gmra.mxu0 %v752
      %v774 = vpop.f32.mrf.mxu0
      %v775 = vadd.f32 0.0, %v774
      %776 = vdwg.mxu0
      %v777 = vadd.f32 %v709, %v772
      %v778 = vadd.f32 %v710, %v775
      %s779 = scalar_lea.vmem %s3, 256
      %v780 = vld [vmem:[%s779] sm:$0xff]
      %v781 = vld [vmem:[%s779 + $0x8] sm:$0xff]
      %v782 = vld [vmem:[%s779 + $0x10] sm:$0xff]
      %v783 = vld [vmem:[%s779 + $0x18] sm:$0xff]
      %v784 = vld [vmem:[%s779 + $0x20] sm:$0xff]
      %v785 = vld [vmem:[%s779 + $0x28] sm:$0xff]
      %v786 = vld [vmem:[%s779 + $0x30] sm:$0xff]
      %v787 = vld [vmem:[%s779 + $0x38] sm:$0xff]
      %v788 = vperm.slane %v456, 1
      %v789 = vperm.slane %v493, 1
      %v790 = vperm.slane %v494, 1
      %v791 = vperm.slane %v495, 1
      %v792 = vperm.slane %v460, 1
      %v793 = vperm.slane %v499, 1
      %v794 = vperm.slane %v500, 1
      %v795 = vperm.slane %v501, 1
      %v796 = vperm.slane %v464, 1
      %v797 = vperm.slane %v505, 1
      %v798 = vperm.slane %v506, 1
      %v799 = vperm.slane %v507, 1
      %v800 = vperm.slane %v468, 1
      %v801 = vperm.slane %v511, 1
      %v802 = vperm.slane %v512, 1
      %v803 = vperm.slane %v513, 1
      %v804 = vsel %vm550, %v789, %v788
      %v805 = vsel %vm552, %v790, %v804
      %v806 = vsel %vm554, %v791, %v805
      %v807 = vsel %vm556, %v792, %v806
      %v808 = vsel %vm558, %v793, %v807
      %v809 = vsel %vm560, %v794, %v808
      %v810 = vsel %vm562, %v795, %v809
      %v811 = vsel %vm550, %v797, %v796
      %v812 = vsel %vm552, %v798, %v811
      %v813 = vsel %vm554, %v799, %v812
      %v814 = vsel %vm556, %v800, %v813
      %v815 = vsel %vm558, %v801, %v814
      %v816 = vsel %vm560, %v802, %v815
      %v817 = vsel %vm562, %v803, %v816
      %v818 = vsel %vm423, %v810, 0
      %v820 = vsel %vm423, %v817, 0
      %822 = vmatpush.msra.mxu0 0.0
      %823 = vmatpush.msra.mxu0 0.0
      %824 = vmatpush.msra.mxu0 0.0
      %825 = vmatpush.msra.mxu0 0.0
      %826 = vmatpush.msra.mxu0 0.0
      %827 = vmatpush.msra.mxu0 0.0
      %828 = vmatpush.msra.mxu0 0.0
      %829 = vmatpush.msra.mxu0 0.0
      %830 = vmatpush.msra.mxu0 %v787
      %831 = vmatpush.msra.mxu0 %v786
      %832 = vmatpush.msra.mxu0 %v785
      %833 = vmatpush.msra.mxu0 %v784
      %834 = vmatpush.msra.mxu0 %v783
      %835 = vmatpush.msra.mxu0 %v782
      %836 = vmatpush.msra.mxu0 %v781
      %837 = vmatpush.msra.mxu0 %v780
      %838 = vmatmul.f32.gmra.mxu0 %v818
      %v839 = vpop.f32.mrf.mxu0
      %v840 = vadd.f32 0.0, %v839
      %841 = vmatmul.f32.gmra.mxu0 %v820
      %v842 = vpop.f32.mrf.mxu0
      %v843 = vadd.f32 0.0, %v842
      %844 = vdwg.mxu0
      %v845 = vadd.f32 %v777, %v840
      %v846 = vadd.f32 %v778, %v843
      %s847 = scalar_lea.vmem %s3, 320
      %v848 = vld [vmem:[%s847] sm:$0xff]
      %v849 = vld [vmem:[%s847 + $0x8] sm:$0xff]
      %v850 = vld [vmem:[%s847 + $0x10] sm:$0xff]
      %v851 = vld [vmem:[%s847 + $0x18] sm:$0xff]
      %v852 = vld [vmem:[%s847 + $0x20] sm:$0xff]
      %v853 = vld [vmem:[%s847 + $0x28] sm:$0xff]
      %v854 = vld [vmem:[%s847 + $0x30] sm:$0xff]
      %v855 = vld [vmem:[%s847 + $0x38] sm:$0xff]
      %v856 = vperm.slane %v457, 0
      %v857 = vperm.slane %v461, 0
      %v858 = vperm.slane %v465, 0
      %v859 = vperm.slane %v469, 0
      %v860 = vsel %vm550, %v722, %v721
      %v861 = vsel %vm552, %v723, %v860
      %v862 = vsel %vm554, %v856, %v861
      %v863 = vsel %vm556, %v725, %v862
      %v864 = vsel %vm558, %v726, %v863
      %v865 = vsel %vm560, %v727, %v864
      %v866 = vsel %vm562, %v857, %v865
      %v867 = vsel %vm550, %v730, %v729
      %v868 = vsel %vm552, %v731, %v867
      %v869 = vsel %vm554, %v858, %v868
      %v870 = vsel %vm556, %v733, %v869
      %v871 = vsel %vm558, %v734, %v870
      %v872 = vsel %vm560, %v735, %v871
      %v873 = vsel %vm562, %v859, %v872
      %v874 = vsel %vm423, %v866, 0
      %v876 = vsel %vm423, %v873, 0
      %878 = vmatpush.msra.mxu0 0.0
      %879 = vmatpush.msra.mxu0 0.0
      %880 = vmatpush.msra.mxu0 0.0
      %881 = vmatpush.msra.mxu0 0.0
      %882 = vmatpush.msra.mxu0 0.0
      %883 = vmatpush.msra.mxu0 0.0
      %884 = vmatpush.msra.mxu0 0.0
      %885 = vmatpush.msra.mxu0 0.0
      %886 = vmatpush.msra.mxu0 %v855
      %887 = vmatpush.msra.mxu0 %v854
      %888 = vmatpush.msra.mxu0 %v853
      %889 = vmatpush.msra.mxu0 %v852
      %890 = vmatpush.msra.mxu0 %v851
      %891 = vmatpush.msra.mxu0 %v850
      %892 = vmatpush.msra.mxu0 %v849
      %893 = vmatpush.msra.mxu0 %v848
      %894 = vmatmul.f32.gmra.mxu0 %v874
      %v895 = vpop.f32.mrf.mxu0
      %v896 = vadd.f32 0.0, %v895
      %897 = vmatmul.f32.gmra.mxu0 %v876
      %v898 = vpop.f32.mrf.mxu0
      %v899 = vadd.f32 0.0, %v898
      %900 = vdwg.mxu0
      %v901 = vadd.f32 %v845, %v896
      %v902 = vadd.f32 %v846, %v899
      %s903 = scalar_lea.vmem %s3, 384
      %v904 = vld [vmem:[%s903] sm:$0xff]
      %v905 = vld [vmem:[%s903 + $0x8] sm:$0xff]
      %v906 = vld [vmem:[%s903 + $0x10] sm:$0xff]
      %v907 = vld [vmem:[%s903 + $0x18] sm:$0xff]
      %v908 = vld [vmem:[%s903 + $0x20] sm:$0xff]
      %v909 = vld [vmem:[%s903 + $0x28] sm:$0xff]
      %v910 = vld [vmem:[%s903 + $0x30] sm:$0xff]
      %v911 = vld [vmem:[%s903 + $0x38] sm:$0xff]
      %v912 = vperm.slane %v470, 0
      %v913 = vperm.slane %v514, 0
      %v914 = vperm.slane %v515, 0
      %v915 = vperm.slane %v516, 0
      %v916 = vsel %vm550, %v603, %v602
      %v917 = vsel %vm552, %v604, %v916
      %v918 = vsel %vm554, %v605, %v917
      %v919 = vsel %vm556, %v606, %v918
      %v920 = vsel %vm558, %v607, %v919
      %v921 = vsel %vm560, %v608, %v920
      %v922 = vsel %vm562, %v609, %v921
      %v923 = vsel %vm550, %v611, %v610
      %v924 = vsel %vm552, %v612, %v923
      %v925 = vsel %vm554, %v613, %v924
      %v926 = vsel %vm556, %v912, %v925
      %v927 = vsel %vm558, %v913, %v926
      %v928 = vsel %vm560, %v914, %v927
      %v929 = vsel %vm562, %v915, %v928
      %v930 = vsel %vm423, %v922, 0
      %v932 = vsel %vm423, %v929, 0
      %934 = vmatpush.msra.mxu0 0.0
      %935 = vmatpush.msra.mxu0 0.0
      %936 = vmatpush.msra.mxu0 0.0
      %937 = vmatpush.msra.mxu0 0.0
      %938 = vmatpush.msra.mxu0 0.0
      %939 = vmatpush.msra.mxu0 0.0
      %940 = vmatpush.msra.mxu0 0.0
      %941 = vmatpush.msra.mxu0 0.0
      %942 = vmatpush.msra.mxu0 %v911
      %943 = vmatpush.msra.mxu0 %v910
      %944 = vmatpush.msra.mxu0 %v909
      %945 = vmatpush.msra.mxu0 %v908
      %946 = vmatpush.msra.mxu0 %v907
      %947 = vmatpush.msra.mxu0 %v906
      %948 = vmatpush.msra.mxu0 %v905
      %949 = vmatpush.msra.mxu0 %v904
      %950 = vmatmul.f32.gmra.mxu0 %v930
      %v951 = vpop.f32.mrf.mxu0
      %v952 = vadd.f32 0.0, %v951
      %953 = vmatmul.f32.gmra.mxu0 %v932
      %v954 = vpop.f32.mrf.mxu0
      %v955 = vadd.f32 0.0, %v954
      %956 = vdwg.mxu0
      %v957 = vadd.f32 %v901, %v952
      %v958 = vadd.f32 %v902, %v955
      %s959 = scalar_lea.vmem %s3, 448
      %v960 = vld [vmem:[%s959] sm:$0xff]
      %v961 = vld [vmem:[%s959 + $0x8] sm:$0xff]
      %v962 = vld [vmem:[%s959 + $0x10] sm:$0xff]
      %v963 = vld [vmem:[%s959 + $0x18] sm:$0xff]
      %v964 = vld [vmem:[%s959 + $0x20] sm:$0xff]
      %v965 = vld [vmem:[%s959 + $0x28] sm:$0xff]
      %v966 = vld [vmem:[%s959 + $0x30] sm:$0xff]
      %v967 = vld [vmem:[%s959 + $0x38] sm:$0xff]
      %v968 = vperm.slane %v470, 1
      %v969 = vperm.slane %v514, 1
      %v970 = vperm.slane %v515, 1
      %v971 = vperm.slane %v516, 1
      %v972 = vsel %vm550, %v539, %v538
      %v973 = vsel %vm552, %v540, %v972
      %v974 = vsel %vm554, %v541, %v973
      %v975 = vsel %vm556, %v542, %v974
      %v976 = vsel %vm558, %v543, %v975
      %v977 = vsel %vm560, %v544, %v976
      %v978 = vsel %vm562, %v545, %v977
      %v979 = vsel %vm550, %v547, %v546
      %v980 = vsel %vm552, %v548, %v979
      %v981 = vsel %vm554, %v549, %v980
      %v982 = vsel %vm556, %v968, %v981
      %v983 = vsel %vm558, %v969, %v982
      %v984 = vsel %vm560, %v970, %v983
      %v985 = vsel %vm562, %v971, %v984
      %v986 = vsel %vm423, %v978, 0
      %v988 = vsel %vm423, %v985, 0
      %990 = vmatpush.msra.mxu0 0.0
      %991 = vmatpush.msra.mxu0 0.0
      %992 = vmatpush.msra.mxu0 0.0
      %993 = vmatpush.msra.mxu0 0.0
      %994 = vmatpush.msra.mxu0 0.0
      %995 = vmatpush.msra.mxu0 0.0
      %996 = vmatpush.msra.mxu0 0.0
      %997 = vmatpush.msra.mxu0 0.0
      %998 = vmatpush.msra.mxu0 %v967
      %999 = vmatpush.msra.mxu0 %v966
      %1000 = vmatpush.msra.mxu0 %v965
      %1001 = vmatpush.msra.mxu0 %v964
      %1002 = vmatpush.msra.mxu0 %v963
      %1003 = vmatpush.msra.mxu0 %v962
      %1004 = vmatpush.msra.mxu0 %v961
      %1005 = vmatpush.msra.mxu0 %v960
      %1006 = vmatmul.f32.gmra.mxu0 %v986
      %v1007 = vpop.f32.mrf.mxu0
      %v1008 = vadd.f32 0.0, %v1007
      %1009 = vmatmul.f32.gmra.mxu0 %v988
      %v1010 = vpop.f32.mrf.mxu0
      %v1011 = vadd.f32 0.0, %v1010
      %1012 = vdwg.mxu0
      %v1013 = vadd.f32 %v957, %v1008
      %v1014 = vadd.f32 %v958, %v1011
      %s1015 = scalar_lea.vmem %s3, 512
      %v1016 = vld [vmem:[%s1015] sm:$0xff]
      %v1017 = vld [vmem:[%s1015 + $0x8] sm:$0xff]
      %v1018 = vld [vmem:[%s1015 + $0x10] sm:$0xff]
      %v1019 = vld [vmem:[%s1015 + $0x18] sm:$0xff]
      %v1020 = vld [vmem:[%s1015 + $0x20] sm:$0xff]
      %v1021 = vld [vmem:[%s1015 + $0x28] sm:$0xff]
      %v1022 = vld [vmem:[%s1015 + $0x30] sm:$0xff]
      %v1023 = vld [vmem:[%s1015 + $0x38] sm:$0xff]
      %v1024 = vperm.slane %v471, 0
      %v1025 = vsel %vm550, %v604, %v603
      %v1026 = vsel %vm552, %v605, %v1025
      %v1027 = vsel %vm554, %v665, %v1026
      %v1028 = vsel %vm556, %v607, %v1027
      %v1029 = vsel %vm558, %v608, %v1028
      %v1030 = vsel %vm560, %v609, %v1029
      %v1031 = vsel %vm562, %v666, %v1030
      %v1032 = vsel %vm550, %v612, %v611
      %v1033 = vsel %vm552, %v613, %v1032
      %v1034 = vsel %vm554, %v667, %v1033
      %v1035 = vsel %vm556, %v913, %v1034
      %v1036 = vsel %vm558, %v914, %v1035
      %v1037 = vsel %vm560, %v915, %v1036
      %v1038 = vsel %vm562, %v1024, %v1037
      %v1039 = vsel %vm423, %v1031, 0
      %v1041 = vsel %vm423, %v1038, 0
      %1043 = vmatpush.msra.mxu0 0.0
      %1044 = vmatpush.msra.mxu0 0.0
      %1045 = vmatpush.msra.mxu0 0.0
      %1046 = vmatpush.msra.mxu0 0.0
      %1047 = vmatpush.msra.mxu0 0.0
      %1048 = vmatpush.msra.mxu0 0.0
      %1049 = vmatpush.msra.mxu0 0.0
      %1050 = vmatpush.msra.mxu0 0.0
      %1051 = vmatpush.msra.mxu0 %v1023
      %1052 = vmatpush.msra.mxu0 %v1022
      %1053 = vmatpush.msra.mxu0 %v1021
      %1054 = vmatpush.msra.mxu0 %v1020
      %1055 = vmatpush.msra.mxu0 %v1019
      %1056 = vmatpush.msra.mxu0 %v1018
      %1057 = vmatpush.msra.mxu0 %v1017
      %1058 = vmatpush.msra.mxu0 %v1016
      %1059 = vmatmul.f32.gmra.mxu0 %v1039
      %v1060 = vpop.f32.mrf.mxu0
      %v1061 = vadd.f32 0.0, %v1060
      %1062 = vmatmul.f32.gmra.mxu0 %v1041
      %v1063 = vpop.f32.mrf.mxu0
      %v1064 = vadd.f32 0.0, %v1063
      %1065 = vdwg.mxu0
      %v1066 = vadd.f32 %v1013, %v1061
      %v1067 = vadd.f32 %v1014, %v1064
      %v1068 = vld [vmem:[%s4] sm:$0x1]
      %v1070 = vperm.slane %v1068, 0
      %v1072 = vadd.f32 %v1066, %v1070
      %v1073 = vadd.f32 %v1067, %v1070
      %v1074 = vmax.f32 %v1072, 0.0
      %v1075 = vmax.f32 %v1073, 0.0
      %1076 = vst [vmem:[#allocation3] sm:$0x1f] 0.0
      %1077 = vst [vmem:[#allocation3 + $0x8] sm:$0x1f] 0.0
      %1078 = vst [vmem:[#allocation3 + $0x10] sm:$0x1f] 0.0
      %1079 = vst [vmem:[#allocation3 + $0x18] sm:$0x1f] 0.0
      %1080 = vst [vmem:[#allocation3 + $0x20] sm:$0x1f] 0.0
      %v1083 = vrot.slane %v1074, 4
      %v1084 = vrot.slane %v1075, 4
      %1087 = vst [vmem:[#allocation3] sm:$0xf] %v1074
      %1088 = vst [vmem:[#allocation3 + $0x8] sm:$0xf] %v1083
      %1089 = vst [vmem:[#allocation3 + $0x10] sm:$0xf] %v1075
      %1090 = vst [vmem:[#allocation3 + $0x18] sm:$0xf] %v1084
      %v1091 = vld [vmem:[#allocation3] sm:$0xf]
      %v1092 = vld [vmem:[#allocation3 + $0x8] sm:$0xf]
      %v1093 = vld [vmem:[#allocation3 + $0x10] sm:$0xf]
      %v1094 = vld [vmem:[#allocation3 + $0x18] sm:$0xf]
      %s1095 = scalar_lea.vmem %s5, 512
      %v1096 = vld [vmem:[%s1095] sm:$0xff]
      %v1097 = vld [vmem:[%s1095 + $0x8] sm:$0xff]
      %v1098 = vld [vmem:[%s1095 + $0x10] sm:$0xff]
      %v1099 = vld [vmem:[%s1095 + $0x18] sm:$0xff]
      %v1100 = vld [vmem:[%s1095 + $0x20] sm:$0xff]
      %v1101 = vld [vmem:[%s1095 + $0x28] sm:$0xff]
      %v1102 = vld [vmem:[%s1095 + $0x30] sm:$0xff]
      %v1103 = vld [vmem:[%s1095 + $0x38] sm:$0xff]
      %v1104 = vld [vmem:[%s1095 + $0x40] sm:$0xff]
      %v1105 = vld [vmem:[%s1095 + $0x48] sm:$0xff]
      %v1106 = vld [vmem:[%s1095 + $0x50] sm:$0xff]
      %v1107 = vld [vmem:[%s1095 + $0x58] sm:$0xff]
      %v1108 = vld [vmem:[%s1095 + $0x60] sm:$0xff]
      %v1109 = vld [vmem:[%s1095 + $0x68] sm:$0xff]
      %v1110 = vld [vmem:[%s1095 + $0x70] sm:$0xff]
      %v1111 = vld [vmem:[%s1095 + $0x78] sm:$0xff]
      %v1112 = vld [vmem:[%s6] sm:$0x1]
      %v1114 = vperm.slane %v1112, 0
      %1120 = vst [vmem:[#allocation1] ss:$2 sm:$0xff] %v1091
      %s1121 = scalar_lea.vmem [#allocation1], 1
      %1122 = vst [vmem:[%s1121] ss:$2 sm:$0xff] %v1092
      %s1123 = scalar_lea.vmem [#allocation1], 16
      %1124 = vst [vmem:[%s1123] ss:$2 sm:$0xff] %v1093
      %s1125 = scalar_lea.vmem [#allocation1], 17
      %1126 = vst [vmem:[%s1125] ss:$2 sm:$0xff] %v1094
      %v1127 = vld.sshfl [vmem:[#allocation1] sm:$0xff pattern:$0x75316420]
      %v1128 = vld.sshfl [vmem:[#allocation1 + $0x10] sm:$0xff pattern:$0x75316420]
      %1131 = vmatpush.msra.mxu0 %v1111
      %1132 = vmatpush.msra.mxu0 %v1110
      %1133 = vmatpush.msra.mxu0 %v1109
      %1134 = vmatpush.msra.mxu0 %v1108
      %1135 = vmatpush.msra.mxu0 %v1107
      %1136 = vmatpush.msra.mxu0 %v1106
      %1137 = vmatpush.msra.mxu0 %v1105
      %1138 = vmatpush.msra.mxu0 %v1104
      %1139 = vmatpush.msra.mxu0 %v1103
      %1140 = vmatpush.msra.mxu0 %v1102
      %1141 = vmatpush.msra.mxu0 %v1101
      %1142 = vmatpush.msra.mxu0 %v1100
      %1143 = vmatpush.msra.mxu0 %v1099
      %1144 = vmatpush.msra.mxu0 %v1098
      %1145 = vmatpush.msra.mxu0 %v1097
      %1146 = vmatpush.msra.mxu0 %v1096
      %1147 = vmatmul.f32.gmra.mxu0 %v1127
      %v1148 = vpop.f32.mrf.mxu0
      %v1149 = vadd.f32 %v1114, %v1148
      %1150 = vmatmul.f32.gmra.mxu0 %v1128
      %v1151 = vpop.f32.mrf.mxu0
      %v1152 = vadd.f32 %v1114, %v1151
      %1153 = vdwg.mxu0
      %v1154 = vmax.f32 %v1149, 0.0
      %v1155 = vmax.f32 %v1152, 0.0
      %s1156 = scalar_lea.vmem %s5, 640
      %v1157 = vld [vmem:[%s1156] sm:$0xff]
      %v1158 = vld [vmem:[%s1156 + $0x8] sm:$0xff]
      %v1159 = vld [vmem:[%s1156 + $0x10] sm:$0xff]
      %v1160 = vld [vmem:[%s1156 + $0x18] sm:$0xff]
      %v1161 = vld [vmem:[%s1156 + $0x20] sm:$0xff]
      %v1162 = vld [vmem:[%s1156 + $0x28] sm:$0xff]
      %v1163 = vld [vmem:[%s1156 + $0x30] sm:$0xff]
      %v1164 = vld [vmem:[%s1156 + $0x38] sm:$0xff]
      %v1165 = vld [vmem:[%s1156 + $0x40] sm:$0xff]
      %v1166 = vld [vmem:[%s1156 + $0x48] sm:$0xff]
      %v1167 = vld [vmem:[%s1156 + $0x50] sm:$0xff]
      %v1168 = vld [vmem:[%s1156 + $0x58] sm:$0xff]
      %v1169 = vld [vmem:[%s1156 + $0x60] sm:$0xff]
      %v1170 = vld [vmem:[%s1156 + $0x68] sm:$0xff]
      %v1171 = vld [vmem:[%s1156 + $0x70] sm:$0xff]
      %v1172 = vld [vmem:[%s1156 + $0x78] sm:$0xff]
      %v1173 = vld [vmem:[#allocation3 + $0x1] sm:$0xf]
      %v1174 = vld [vmem:[#allocation3 + $0x9] sm:$0xf]
      %v1175 = vld [vmem:[#allocation3 + $0x11] sm:$0xf]
      %v1176 = vld [vmem:[#allocation3 + $0x19] sm:$0xf]
      %s1177 = scalar_lea.vmem %s5, 384
      %v1178 = vld [vmem:[%s1177] sm:$0xff]
      %v1179 = vld [vmem:[%s1177 + $0x8] sm:$0xff]
      %v1180 = vld [vmem:[%s1177 + $0x10] sm:$0xff]
      %v1181 = vld [vmem:[%s1177 + $0x18] sm:$0xff]
      %v1182 = vld [vmem:[%s1177 + $0x20] sm:$0xff]
      %v1183 = vld [vmem:[%s1177 + $0x28] sm:$0xff]
      %v1184 = vld [vmem:[%s1177 + $0x30] sm:$0xff]
      %v1185 = vld [vmem:[%s1177 + $0x38] sm:$0xff]
      %v1186 = vld [vmem:[%s1177 + $0x40] sm:$0xff]
      %v1187 = vld [vmem:[%s1177 + $0x48] sm:$0xff]
      %v1188 = vld [vmem:[%s1177 + $0x50] sm:$0xff]
      %v1189 = vld [vmem:[%s1177 + $0x58] sm:$0xff]
      %v1190 = vld [vmem:[%s1177 + $0x60] sm:$0xff]
      %v1191 = vld [vmem:[%s1177 + $0x68] sm:$0xff]
      %v1192 = vld [vmem:[%s1177 + $0x70] sm:$0xff]
      %v1193 = vld [vmem:[%s1177 + $0x78] sm:$0xff]
      %1198 = vst [vmem:[#allocation1] ss:$2 sm:$0xff] %v1173
      %s1199 = scalar_lea.vmem [#allocation1], 1
      %1200 = vst [vmem:[%s1199] ss:$2 sm:$0xff] %v1174
      %s1201 = scalar_lea.vmem [#allocation1], 16
      %1202 = vst [vmem:[%s1201] ss:$2 sm:$0xff] %v1175
      %s1203 = scalar_lea.vmem [#allocation1], 17
      %1204 = vst [vmem:[%s1203] ss:$2 sm:$0xff] %v1176
      %v1205 = vld.sshfl [vmem:[#allocation1] sm:$0xff pattern:$0x75316420]
      %v1206 = vld.sshfl [vmem:[#allocation1 + $0x10] sm:$0xff pattern:$0x75316420]
      %1209 = vmatpush.msra.mxu0 %v1193
      %1210 = vmatpush.msra.mxu0 %v1192
      %1211 = vmatpush.msra.mxu0 %v1191
      %1212 = vmatpush.msra.mxu0 %v1190
      %1213 = vmatpush.msra.mxu0 %v1189
      %1214 = vmatpush.msra.mxu0 %v1188
      %1215 = vmatpush.msra.mxu0 %v1187
      %1216 = vmatpush.msra.mxu0 %v1186
      %1217 = vmatpush.msra.mxu0 %v1185
      %1218 = vmatpush.msra.mxu0 %v1184
      %1219 = vmatpush.msra.mxu0 %v1183
      %1220 = vmatpush.msra.mxu0 %v1182
      %1221 = vmatpush.msra.mxu0 %v1181
      %1222 = vmatpush.msra.mxu0 %v1180
      %1223 = vmatpush.msra.mxu0 %v1179
      %1224 = vmatpush.msra.mxu0 %v1178
      %1225 = vmatmul.f32.gmra.mxu0 %v1205
      %v1226 = vpop.f32.mrf.mxu0
      %v1227 = vadd.f32 0.0, %v1226
      %1228 = vmatmul.f32.gmra.mxu0 %v1206
      %v1229 = vpop.f32.mrf.mxu0
      %v1230 = vadd.f32 0.0, %v1229
      %1231 = vdwg.mxu0
      %1232 = vst [vmem:[#allocation1] ss:$2 sm:$0xff] %v1091
      %s1233 = scalar_lea.vmem [#allocation1], 1
      %1234 = vst [vmem:[%s1233] ss:$2 sm:$0xff] %v1092
      %s1235 = scalar_lea.vmem [#allocation1], 16
      %1236 = vst [vmem:[%s1235] ss:$2 sm:$0xff] %v1093
      %s1237 = scalar_lea.vmem [#allocation1], 17
      %1238 = vst [vmem:[%s1237] ss:$2 sm:$0xff] %v1094
      %v1239 = vld.sshfl [vmem:[#allocation1] sm:$0xff pattern:$0x75316420]
      %v1240 = vld.sshfl [vmem:[#allocation1 + $0x10] sm:$0xff pattern:$0x75316420]
      %1243 = vmatpush.msra.mxu0 %v1172
      %1244 = vmatpush.msra.mxu0 %v1171
      %1245 = vmatpush.msra.mxu0 %v1170
      %1246 = vmatpush.msra.mxu0 %v1169
      %1247 = vmatpush.msra.mxu0 %v1168
      %1248 = vmatpush.msra.mxu0 %v1167
      %1249 = vmatpush.msra.mxu0 %v1166
      %1250 = vmatpush.msra.mxu0 %v1165
      %1251 = vmatpush.msra.mxu0 %v1164
      %1252 = vmatpush.msra.mxu0 %v1163
      %1253 = vmatpush.msra.mxu0 %v1162
      %1254 = vmatpush.msra.mxu0 %v1161
      %1255 = vmatpush.msra.mxu0 %v1160
      %1256 = vmatpush.msra.mxu0 %v1159
      %1257 = vmatpush.msra.mxu0 %v1158
      %1258 = vmatpush.msra.mxu0 %v1157
      %1259 = vmatmul.f32.gmra.mxu0 %v1239
      %v1260 = vpop.f32.mrf.mxu0
      %v1261 = vadd.f32 %v1227, %v1260
      %1262 = vmatmul.f32.gmra.mxu0 %v1240
      %v1263 = vpop.f32.mrf.mxu0
      %v1264 = vadd.f32 %v1230, %v1263
      %1265 = vdwg.mxu0
      %v1266 = vadd.f32 %v1261, %v1114
      %v1267 = vadd.f32 %v1264, %v1114
      %v1268 = vmax.f32 %v1266, 0.0
      %v1269 = vmax.f32 %v1267, 0.0
      %s1270 = scalar_lea.vmem %s5, 896
      %v1271 = vld [vmem:[%s1270] sm:$0xff]
      %v1272 = vld [vmem:[%s1270 + $0x8] sm:$0xff]
      %v1273 = vld [vmem:[%s1270 + $0x10] sm:$0xff]
      %v1274 = vld [vmem:[%s1270 + $0x18] sm:$0xff]
      %v1275 = vld [vmem:[%s1270 + $0x20] sm:$0xff]
      %v1276 = vld [vmem:[%s1270 + $0x28] sm:$0xff]
      %v1277 = vld [vmem:[%s1270 + $0x30] sm:$0xff]
      %v1278 = vld [vmem:[%s1270 + $0x38] sm:$0xff]
      %v1279 = vld [vmem:[%s1270 + $0x40] sm:$0xff]
      %v1280 = vld [vmem:[%s1270 + $0x48] sm:$0xff]
      %v1281 = vld [vmem:[%s1270 + $0x50] sm:$0xff]
      %v1282 = vld [vmem:[%s1270 + $0x58] sm:$0xff]
      %v1283 = vld [vmem:[%s1270 + $0x60] sm:$0xff]
      %v1284 = vld [vmem:[%s1270 + $0x68] sm:$0xff]
      %v1285 = vld [vmem:[%s1270 + $0x70] sm:$0xff]
      %v1286 = vld [vmem:[%s1270 + $0x78] sm:$0xff]
      %s1287 = scalar_lea.vmem [#allocation3], 8
      %v1288 = vld [vmem:[%s1287] sm:$0xf]
      %v1289 = vld [vmem:[%s1287 + $0x8] sm:$0xf]
      %v1290 = vld [vmem:[%s1287 + $0x10] sm:$0xf]
      %v1291 = vld [vmem:[%s1287 + $0x18] sm:$0xf]
      %s1292 = scalar_lea.vmem %s5, 128
      %v1293 = vld [vmem:[%s1292] sm:$0xff]
      %v1294 = vld [vmem:[%s1292 + $0x8] sm:$0xff]
      %v1295 = vld [vmem:[%s1292 + $0x10] sm:$0xff]
      %v1296 = vld [vmem:[%s1292 + $0x18] sm:$0xff]
      %v1297 = vld [vmem:[%s1292 + $0x20] sm:$0xff]
      %v1298 = vld [vmem:[%s1292 + $0x28] sm:$0xff]
      %v1299 = vld [vmem:[%s1292 + $0x30] sm:$0xff]
      %v1300 = vld [vmem:[%s1292 + $0x38] sm:$0xff]
      %v1301 = vld [vmem:[%s1292 + $0x40] sm:$0xff]
      %v1302 = vld [vmem:[%s1292 + $0x48] sm:$0xff]
      %v1303 = vld [vmem:[%s1292 + $0x50] sm:$0xff]
      %v1304 = vld [vmem:[%s1292 + $0x58] sm:$0xff]
      %v1305 = vld [vmem:[%s1292 + $0x60] sm:$0xff]
      %v1306 = vld [vmem:[%s1292 + $0x68] sm:$0xff]
      %v1307 = vld [vmem:[%s1292 + $0x70] sm:$0xff]
      %v1308 = vld [vmem:[%s1292 + $0x78] sm:$0xff]
      %1313 = vst [vmem:[#allocation1] ss:$2 sm:$0xff] %v1288
      %s1314 = scalar_lea.vmem [#allocation1], 1
      %1315 = vst [vmem:[%s1314] ss:$2 sm:$0xff] %v1289
      %s1316 = scalar_lea.vmem [#allocation1], 16
      %1317 = vst [vmem:[%s1316] ss:$2 sm:$0xff] %v1290
      %s1318 = scalar_lea.vmem [#allocation1], 17
      %1319 = vst [vmem:[%s1318] ss:$2 sm:$0xff] %v1291
      %v1320 = vld.sshfl [vmem:[#allocation1] sm:$0xff pattern:$0x75316420]
      %v1321 = vld.sshfl [vmem:[#allocation1 + $0x10] sm:$0xff pattern:$0x75316420]
      %1324 = vmatpush.msra.mxu0 %v1308
      %1325 = vmatpush.msra.mxu0 %v1307
      %1326 = vmatpush.msra.mxu0 %v1306
      %1327 = vmatpush.msra.mxu0 %v1305
      %1328 = vmatpush.msra.mxu0 %v1304
      %1329 = vmatpush.msra.mxu0 %v1303
      %1330 = vmatpush.msra.mxu0 %v1302
      %1331 = vmatpush.msra.mxu0 %v1301
      %1332 = vmatpush.msra.mxu0 %v1300
      %1333 = vmatpush.msra.mxu0 %v1299
      %1334 = vmatpush.msra.mxu0 %v1298
      %1335 = vmatpush.msra.mxu0 %v1297
      %1336 = vmatpush.msra.mxu0 %v1296
      %1337 = vmatpush.msra.mxu0 %v1295
      %1338 = vmatpush.msra.mxu0 %v1294
      %1339 = vmatpush.msra.mxu0 %v1293
      %1340 = vmatmul.f32.gmra.mxu0 %v1320
      %v1341 = vpop.f32.mrf.mxu0
      %v1342 = vadd.f32 0.0, %v1341
      %1343 = vmatmul.f32.gmra.mxu0 %v1321
      %v1344 = vpop.f32.mrf.mxu0
      %v1345 = vadd.f32 0.0, %v1344
      %1346 = vdwg.mxu0
      %1347 = vst [vmem:[#allocation1] ss:$2 sm:$0xff] %v1091
      %s1348 = scalar_lea.vmem [#allocation1], 1
      %1349 = vst [vmem:[%s1348] ss:$2 sm:$0xff] %v1092
      %s1350 = scalar_lea.vmem [#allocation1], 16
      %1351 = vst [vmem:[%s1350] ss:$2 sm:$0xff] %v1093
      %s1352 = scalar_lea.vmem [#allocation1], 17
      %1353 = vst [vmem:[%s1352] ss:$2 sm:$0xff] %v1094
      %v1354 = vld.sshfl [vmem:[#allocation1] sm:$0xff pattern:$0x75316420]
      %v1355 = vld.sshfl [vmem:[#allocation1 + $0x10] sm:$0xff pattern:$0x75316420]
      %1358 = vmatpush.msra.mxu0 %v1286
      %1359 = vmatpush.msra.mxu0 %v1285
      %1360 = vmatpush.msra.mxu0 %v1284
      %1361 = vmatpush.msra.mxu0 %v1283
      %1362 = vmatpush.msra.mxu0 %v1282
      %1363 = vmatpush.msra.mxu0 %v1281
      %1364 = vmatpush.msra.mxu0 %v1280
      %1365 = vmatpush.msra.mxu0 %v1279
      %1366 = vmatpush.msra.mxu0 %v1278
      %1367 = vmatpush.msra.mxu0 %v1277
      %1368 = vmatpush.msra.mxu0 %v1276
      %1369 = vmatpush.msra.mxu0 %v1275
      %1370 = vmatpush.msra.mxu0 %v1274
      %1371 = vmatpush.msra.mxu0 %v1273
      %1372 = vmatpush.msra.mxu0 %v1272
      %1373 = vmatpush.msra.mxu0 %v1271
      %1374 = vmatmul.f32.gmra.mxu0 %v1354
      %v1375 = vpop.f32.mrf.mxu0
      %v1376 = vadd.f32 %v1342, %v1375
      %1377 = vmatmul.f32.gmra.mxu0 %v1355
      %v1378 = vpop.f32.mrf.mxu0
      %v1379 = vadd.f32 %v1345, %v1378
      %1380 = vdwg.mxu0
      %v1381 = vadd.f32 %v1376, %v1114
      %v1382 = vadd.f32 %v1379, %v1114
      %v1383 = vmax.f32 %v1381, 0.0
      %v1384 = vmax.f32 %v1382, 0.0
      %s1385 = scalar_lea.vmem %s5, 1024
      %v1386 = vld [vmem:[%s1385] sm:$0xff]
      %v1387 = vld [vmem:[%s1385 + $0x8] sm:$0xff]
      %v1388 = vld [vmem:[%s1385 + $0x10] sm:$0xff]
      %v1389 = vld [vmem:[%s1385 + $0x18] sm:$0xff]
      %v1390 = vld [vmem:[%s1385 + $0x20] sm:$0xff]
      %v1391 = vld [vmem:[%s1385 + $0x28] sm:$0xff]
      %v1392 = vld [vmem:[%s1385 + $0x30] sm:$0xff]
      %v1393 = vld [vmem:[%s1385 + $0x38] sm:$0xff]
      %v1394 = vld [vmem:[%s1385 + $0x40] sm:$0xff]
      %v1395 = vld [vmem:[%s1385 + $0x48] sm:$0xff]
      %v1396 = vld [vmem:[%s1385 + $0x50] sm:$0xff]
      %v1397 = vld [vmem:[%s1385 + $0x58] sm:$0xff]
      %v1398 = vld [vmem:[%s1385 + $0x60] sm:$0xff]
      %v1399 = vld [vmem:[%s1385 + $0x68] sm:$0xff]
      %v1400 = vld [vmem:[%s1385 + $0x70] sm:$0xff]
      %v1401 = vld [vmem:[%s1385 + $0x78] sm:$0xff]
      %s1402 = scalar_lea.vmem %s5, 768
      %v1403 = vld [vmem:[%s1402] sm:$0xff]
      %v1404 = vld [vmem:[%s1402 + $0x8] sm:$0xff]
      %v1405 = vld [vmem:[%s1402 + $0x10] sm:$0xff]
      %v1406 = vld [vmem:[%s1402 + $0x18] sm:$0xff]
      %v1407 = vld [vmem:[%s1402 + $0x20] sm:$0xff]
      %v1408 = vld [vmem:[%s1402 + $0x28] sm:$0xff]
      %v1409 = vld [vmem:[%s1402 + $0x30] sm:$0xff]
      %v1410 = vld [vmem:[%s1402 + $0x38] sm:$0xff]
      %v1411 = vld [vmem:[%s1402 + $0x40] sm:$0xff]
      %v1412 = vld [vmem:[%s1402 + $0x48] sm:$0xff]
      %v1413 = vld [vmem:[%s1402 + $0x50] sm:$0xff]
      %v1414 = vld [vmem:[%s1402 + $0x58] sm:$0xff]
      %v1415 = vld [vmem:[%s1402 + $0x60] sm:$0xff]
      %v1416 = vld [vmem:[%s1402 + $0x68] sm:$0xff]
      %v1417 = vld [vmem:[%s1402 + $0x70] sm:$0xff]
      %v1418 = vld [vmem:[%s1402 + $0x78] sm:$0xff]
      %1419 = vst [vmem:[#allocation1] ss:$2 sm:$0xff] %v1173
      %s1420 = scalar_lea.vmem [#allocation1], 1
      %1421 = vst [vmem:[%s1420] ss:$2 sm:$0xff] %v1174
      %s1422 = scalar_lea.vmem [#allocation1], 16
      %1423 = vst [vmem:[%s1422] ss:$2 sm:$0xff] %v1175
      %s1424 = scalar_lea.vmem [#allocation1], 17
      %1425 = vst [vmem:[%s1424] ss:$2 sm:$0xff] %v1176
      %v1426 = vld.sshfl [vmem:[#allocation1] sm:$0xff pattern:$0x75316420]
      %v1427 = vld.sshfl [vmem:[#allocation1 + $0x10] sm:$0xff pattern:$0x75316420]
      %1430 = vmatpush.msra.mxu0 %v1418
      %1431 = vmatpush.msra.mxu0 %v1417
      %1432 = vmatpush.msra.mxu0 %v1416
      %1433 = vmatpush.msra.mxu0 %v1415
      %1434 = vmatpush.msra.mxu0 %v1414
      %1435 = vmatpush.msra.mxu0 %v1413
      %1436 = vmatpush.msra.mxu0 %v1412
      %1437 = vmatpush.msra.mxu0 %v1411
      %1438 = vmatpush.msra.mxu0 %v1410
      %1439 = vmatpush.msra.mxu0 %v1409
      %1440 = vmatpush.msra.mxu0 %v1408
      %1441 = vmatpush.msra.mxu0 %v1407
      %1442 = vmatpush.msra.mxu0 %v1406
      %1443 = vmatpush.msra.mxu0 %v1405
      %1444 = vmatpush.msra.mxu0 %v1404
      %1445 = vmatpush.msra.mxu0 %v1403
      %1446 = vmatmul.f32.gmra.mxu0 %v1426
      %v1447 = vpop.f32.mrf.mxu0
      %v1448 = vadd.f32 0.0, %v1447
      %1449 = vmatmul.f32.gmra.mxu0 %v1427
      %v1450 = vpop.f32.mrf.mxu0
      %v1451 = vadd.f32 0.0, %v1450
      %1452 = vdwg.mxu0
      %1453 = vst [vmem:[#allocation1] ss:$2 sm:$0xff] %v1091
      %s1454 = scalar_lea.vmem [#allocation1], 1
      %1455 = vst [vmem:[%s1454] ss:$2 sm:$0xff] %v1092
      %s1456 = scalar_lea.vmem [#allocation1], 16
      %1457 = vst [vmem:[%s1456] ss:$2 sm:$0xff] %v1093
      %s1458 = scalar_lea.vmem [#allocation1], 17
      %1459 = vst [vmem:[%s1458] ss:$2 sm:$0xff] %v1094
      %v1460 = vld.sshfl [vmem:[#allocation1] sm:$0xff pattern:$0x75316420]
      %v1461 = vld.sshfl [vmem:[#allocation1 + $0x10] sm:$0xff pattern:$0x75316420]
      %1464 = vmatpush.msra.mxu0 %v1401
      %1465 = vmatpush.msra.mxu0 %v1400
      %1466 = vmatpush.msra.mxu0 %v1399
      %1467 = vmatpush.msra.mxu0 %v1398
      %1468 = vmatpush.msra.mxu0 %v1397
      %1469 = vmatpush.msra.mxu0 %v1396
      %1470 = vmatpush.msra.mxu0 %v1395
      %1471 = vmatpush.msra.mxu0 %v1394
      %1472 = vmatpush.msra.mxu0 %v1393
      %1473 = vmatpush.msra.mxu0 %v1392
      %1474 = vmatpush.msra.mxu0 %v1391
      %1475 = vmatpush.msra.mxu0 %v1390
      %1476 = vmatpush.msra.mxu0 %v1389
      %1477 = vmatpush.msra.mxu0 %v1388
      %1478 = vmatpush.msra.mxu0 %v1387
      %1479 = vmatpush.msra.mxu0 %v1386
      %1480 = vmatmul.f32.gmra.mxu0 %v1460
      %v1481 = vpop.f32.mrf.mxu0
      %v1482 = vadd.f32 %v1448, %v1481
      %1483 = vmatmul.f32.gmra.mxu0 %v1461
      %v1484 = vpop.f32.mrf.mxu0
      %v1485 = vadd.f32 %v1451, %v1484
      %1486 = vdwg.mxu0
      %s1487 = scalar_lea.vmem %s5, 256
      %v1488 = vld [vmem:[%s1487] sm:$0xff]
      %v1489 = vld [vmem:[%s1487 + $0x8] sm:$0xff]
      %v1490 = vld [vmem:[%s1487 + $0x10] sm:$0xff]
      %v1491 = vld [vmem:[%s1487 + $0x18] sm:$0xff]
      %v1492 = vld [vmem:[%s1487 + $0x20] sm:$0xff]
      %v1493 = vld [vmem:[%s1487 + $0x28] sm:$0xff]
      %v1494 = vld [vmem:[%s1487 + $0x30] sm:$0xff]
      %v1495 = vld [vmem:[%s1487 + $0x38] sm:$0xff]
      %v1496 = vld [vmem:[%s1487 + $0x40] sm:$0xff]
      %v1497 = vld [vmem:[%s1487 + $0x48] sm:$0xff]
      %v1498 = vld [vmem:[%s1487 + $0x50] sm:$0xff]
      %v1499 = vld [vmem:[%s1487 + $0x58] sm:$0xff]
      %v1500 = vld [vmem:[%s1487 + $0x60] sm:$0xff]
      %v1501 = vld [vmem:[%s1487 + $0x68] sm:$0xff]
      %v1502 = vld [vmem:[%s1487 + $0x70] sm:$0xff]
      %v1503 = vld [vmem:[%s1487 + $0x78] sm:$0xff]
      %1504 = vst [vmem:[#allocation1] ss:$2 sm:$0xff] %v1288
      %s1505 = scalar_lea.vmem [#allocation1], 1
      %1506 = vst [vmem:[%s1505] ss:$2 sm:$0xff] %v1289
      %s1507 = scalar_lea.vmem [#allocation1], 16
      %1508 = vst [vmem:[%s1507] ss:$2 sm:$0xff] %v1290
      %s1509 = scalar_lea.vmem [#allocation1], 17
      %1510 = vst [vmem:[%s1509] ss:$2 sm:$0xff] %v1291
      %v1511 = vld.sshfl [vmem:[#allocation1] sm:$0xff pattern:$0x75316420]
      %v1512 = vld.sshfl [vmem:[#allocation1 + $0x10] sm:$0xff pattern:$0x75316420]
      %1515 = vmatpush.msra.mxu0 %v1503
      %1516 = vmatpush.msra.mxu0 %v1502
      %1517 = vmatpush.msra.mxu0 %v1501
      %1518 = vmatpush.msra.mxu0 %v1500
      %1519 = vmatpush.msra.mxu0 %v1499
      %1520 = vmatpush.msra.mxu0 %v1498
      %1521 = vmatpush.msra.mxu0 %v1497
      %1522 = vmatpush.msra.mxu0 %v1496
      %1523 = vmatpush.msra.mxu0 %v1495
      %1524 = vmatpush.msra.mxu0 %v1494
      %1525 = vmatpush.msra.mxu0 %v1493
      %1526 = vmatpush.msra.mxu0 %v1492
      %1527 = vmatpush.msra.mxu0 %v1491
      %1528 = vmatpush.msra.mxu0 %v1490
      %1529 = vmatpush.msra.mxu0 %v1489
      %1530 = vmatpush.msra.mxu0 %v1488
      %1531 = vmatmul.f32.gmra.mxu0 %v1511
      %v1532 = vpop.f32.mrf.mxu0
      %v1533 = vadd.f32 0.0, %v1532
      %1534 = vmatmul.f32.gmra.mxu0 %v1512
      %v1535 = vpop.f32.mrf.mxu0
      %v1536 = vadd.f32 0.0, %v1535
      %1537 = vdwg.mxu0
      %v1538 = vadd.f32 %v1482, %v1533
      %v1539 = vadd.f32 %v1485, %v1536
      %v1540 = vld [vmem:[%s1287 + $0x1] sm:$0xf]
      %v1541 = vld [vmem:[%s1287 + $0x9] sm:$0xf]
      %v1542 = vld [vmem:[%s1287 + $0x11] sm:$0xf]
      %v1543 = vld [vmem:[%s1287 + $0x19] sm:$0xf]
      %v1544 = vld [vmem:[%s5] sm:$0xff]
      %v1545 = vld [vmem:[%s5 + $0x8] sm:$0xff]
      %v1546 = vld [vmem:[%s5 + $0x10] sm:$0xff]
      %v1547 = vld [vmem:[%s5 + $0x18] sm:$0xff]
      %v1548 = vld [vmem:[%s5 + $0x20] sm:$0xff]
      %v1549 = vld [vmem:[%s5 + $0x28] sm:$0xff]
      %v1550 = vld [vmem:[%s5 + $0x30] sm:$0xff]
      %v1551 = vld [vmem:[%s5 + $0x38] sm:$0xff]
      %v1552 = vld [vmem:[%s5 + $0x40] sm:$0xff]
      %v1553 = vld [vmem:[%s5 + $0x48] sm:$0xff]
      %v1554 = vld [vmem:[%s5 + $0x50] sm:$0xff]
      %v1555 = vld [vmem:[%s5 + $0x58] sm:$0xff]
      %v1556 = vld [vmem:[%s5 + $0x60] sm:$0xff]
      %v1557 = vld [vmem:[%s5 + $0x68] sm:$0xff]
      %v1558 = vld [vmem:[%s5 + $0x70] sm:$0xff]
      %v1559 = vld [vmem:[%s5 + $0x78] sm:$0xff]
      %1564 = vst [vmem:[#allocation1] ss:$2 sm:$0xff] %v1540
      %s1565 = scalar_lea.vmem [#allocation1], 1
      %1566 = vst [vmem:[%s1565] ss:$2 sm:$0xff] %v1541
      %s1567 = scalar_lea.vmem [#allocation1], 16
      %1568 = vst [vmem:[%s1567] ss:$2 sm:$0xff] %v1542
      %s1569 = scalar_lea.vmem [#allocation1], 17
      %1570 = vst [vmem:[%s1569] ss:$2 sm:$0xff] %v1543
      %v1571 = vld.sshfl [vmem:[#allocation1] sm:$0xff pattern:$0x75316420]
      %v1572 = vld.sshfl [vmem:[#allocation1 + $0x10] sm:$0xff pattern:$0x75316420]
      %1575 = vmatpush.msra.mxu0 %v1559
      %1576 = vmatpush.msra.mxu0 %v1558
      %1577 = vmatpush.msra.mxu0 %v1557
      %1578 = vmatpush.msra.mxu0 %v1556
      %1579 = vmatpush.msra.mxu0 %v1555
      %1580 = vmatpush.msra.mxu0 %v1554
      %1581 = vmatpush.msra.mxu0 %v1553
      %1582 = vmatpush.msra.mxu0 %v1552
      %1583 = vmatpush.msra.mxu0 %v1551
      %1584 = vmatpush.msra.mxu0 %v1550
      %1585 = vmatpush.msra.mxu0 %v1549
      %1586 = vmatpush.msra.mxu0 %v1548
      %1587 = vmatpush.msra.mxu0 %v1547
      %1588 = vmatpush.msra.mxu0 %v1546
      %1589 = vmatpush.msra.mxu0 %v1545
      %1590 = vmatpush.msra.mxu0 %v1544
      %1591 = vmatmul.f32.gmra.mxu0 %v1571
      %v1592 = vpop.f32.mrf.mxu0
      %v1593 = vadd.f32 0.0, %v1592
      %1594 = vmatmul.f32.gmra.mxu0 %v1572
      %v1595 = vpop.f32.mrf.mxu0
      %v1596 = vadd.f32 0.0, %v1595
      %1597 = vdwg.mxu0
      %v1598 = vadd.f32 %v1538, %v1593
      %v1599 = vadd.f32 %v1539, %v1596
      %v1600 = vadd.f32 %v1598, %v1114
      %v1601 = vadd.f32 %v1599, %v1114
      %v1602 = vmax.f32 %v1600, 0.0
      %v1603 = vmax.f32 %v1601, 0.0
      %v1606 = vrot.slane %v1154, 1
      %v1607 = vrot.slane %v1154, 2
      %v1608 = vrot.slane %v1154, 3
      %v1609 = vrot.slane %v1154, 4
      %v1610 = vrot.slane %v1154, 5
      %v1611 = vrot.slane %v1154, 6
      %v1612 = vrot.slane %v1154, 7
      %v1613 = vrot.slane %v1155, 1
      %v1614 = vrot.slane %v1155, 2
      %v1615 = vrot.slane %v1155, 3
      %v1616 = vrot.slane %v1155, 4
      %v1617 = vrot.slane %v1155, 5
      %v1618 = vrot.slane %v1155, 6
      %v1619 = vrot.slane %v1155, 7
      %v1636 = vrot.slane %v1268, 1
      %v1637 = vrot.slane %v1268, 2
      %v1638 = vrot.slane %v1268, 3
      %v1639 = vrot.slane %v1268, 4
      %v1640 = vrot.slane %v1268, 5
      %v1641 = vrot.slane %v1268, 6
      %v1642 = vrot.slane %v1268, 7
      %v1643 = vrot.slane %v1269, 1
      %v1644 = vrot.slane %v1269, 2
      %v1645 = vrot.slane %v1269, 3
      %v1646 = vrot.slane %v1269, 4
      %v1647 = vrot.slane %v1269, 5
      %v1648 = vrot.slane %v1269, 6
      %v1649 = vrot.slane %v1269, 7
      %v1650 = vperm.slane %v1268, 0
      %v1651 = vperm.slane %v1636, 0
      %v1652 = vperm.slane %v1637, 0
      %v1653 = vperm.slane %v1638, 0
      %v1654 = vperm.slane %v1639, 0
      %v1655 = vperm.slane %v1640, 0
      %v1656 = vperm.slane %v1641, 0
      %v1657 = vperm.slane %v1642, 0
      %v1658 = vperm.slane %v1269, 0
      %v1659 = vperm.slane %v1643, 0
      %v1660 = vperm.slane %v1644, 0
      %v1661 = vperm.slane %v1645, 0
      %v1662 = vperm.slane %v1646, 0
      %v1663 = vperm.slane %v1647, 0
      %v1664 = vperm.slane %v1648, 0
      %v1665 = vperm.slane %v1649, 0
      %vm1682 = vcmask 1040384
      %v1683 = vsel %vm1682, %v1154, %v1650
      %v1684 = vsel %vm1682, %v1606, %v1651
      %v1685 = vsel %vm1682, %v1607, %v1652
      %v1686 = vsel %vm1682, %v1608, %v1653
      %v1687 = vsel %vm1682, %v1609, %v1654
      %v1688 = vsel %vm1682, %v1610, %v1655
      %v1689 = vsel %vm1682, %v1611, %v1656
      %v1690 = vsel %vm1682, %v1612, %v1657
      %v1691 = vsel %vm1682, %v1155, %v1658
      %v1692 = vsel %vm1682, %v1613, %v1659
      %v1693 = vsel %vm1682, %v1614, %v1660
      %v1694 = vsel %vm1682, %v1615, %v1661
      %v1695 = vsel %vm1682, %v1616, %v1662
      %v1696 = vsel %vm1682, %v1617, %v1663
      %v1697 = vsel %vm1682, %v1618, %v1664
      %v1698 = vsel %vm1682, %v1619, %v1665
      %v1701 = vrot.slane %v1383, 1
      %v1702 = vrot.slane %v1383, 2
      %v1703 = vrot.slane %v1383, 3
      %v1704 = vrot.slane %v1383, 4
      %v1705 = vrot.slane %v1383, 5
      %v1706 = vrot.slane %v1383, 6
      %v1707 = vrot.slane %v1383, 7
      %v1708 = vrot.slane %v1384, 1
      %v1709 = vrot.slane %v1384, 2
      %v1710 = vrot.slane %v1384, 3
      %v1711 = vrot.slane %v1384, 4
      %v1712 = vrot.slane %v1384, 5
      %v1713 = vrot.slane %v1384, 6
      %v1714 = vrot.slane %v1384, 7
      %v1731 = vrot.slane %v1602, 1
      %v1732 = vrot.slane %v1602, 2
      %v1733 = vrot.slane %v1602, 3
      %v1734 = vrot.slane %v1602, 4
      %v1735 = vrot.slane %v1602, 5
      %v1736 = vrot.slane %v1602, 6
      %v1737 = vrot.slane %v1602, 7
      %v1738 = vrot.slane %v1603, 1
      %v1739 = vrot.slane %v1603, 2
      %v1740 = vrot.slane %v1603, 3
      %v1741 = vrot.slane %v1603, 4
      %v1742 = vrot.slane %v1603, 5
      %v1743 = vrot.slane %v1603, 6
      %v1744 = vrot.slane %v1603, 7
      %v1745 = vperm.slane %v1602, 0
      %v1746 = vperm.slane %v1731, 0
      %v1747 = vperm.slane %v1732, 0
      %v1748 = vperm.slane %v1733, 0
      %v1749 = vperm.slane %v1734, 0
      %v1750 = vperm.slane %v1735, 0
      %v1751 = vperm.slane %v1736, 0
      %v1752 = vperm.slane %v1737, 0
      %v1753 = vperm.slane %v1603, 0
      %v1754 = vperm.slane %v1738, 0
      %v1755 = vperm.slane %v1739, 0
      %v1756 = vperm.slane %v1740, 0
      %v1757 = vperm.slane %v1741, 0
      %v1758 = vperm.slane %v1742, 0
      %v1759 = vperm.slane %v1743, 0
      %v1760 = vperm.slane %v1744, 0
      %v1777 = vsel %vm1682, %v1383, %v1745
      %v1778 = vsel %vm1682, %v1701, %v1746
      %v1779 = vsel %vm1682, %v1702, %v1747
      %v1780 = vsel %vm1682, %v1703, %v1748
      %v1781 = vsel %vm1682, %v1704, %v1749
      %v1782 = vsel %vm1682, %v1705, %v1750
      %v1783 = vsel %vm1682, %v1706, %v1751
      %v1784 = vsel %vm1682, %v1707, %v1752
      %v1785 = vsel %vm1682, %v1384, %v1753
      %v1786 = vsel %vm1682, %v1708, %v1754
      %v1787 = vsel %vm1682, %v1709, %v1755
      %v1788 = vsel %vm1682, %v1710, %v1756
      %v1789 = vsel %vm1682, %v1711, %v1757
      %v1790 = vsel %vm1682, %v1712, %v1758
      %v1791 = vsel %vm1682, %v1713, %v1759
      %v1792 = vsel %vm1682, %v1714, %v1760
      %1793 = vst.msk [vmem:[#allocation4] sm:$0xff] %vm423, 0.0
      %vm1794 = vcmask 516096
      %1795 = vst.msk [vmem:[#allocation4 + $0x8] sm:$0x1] %vm1794, 0.0
      %1796 = vst.msk [vmem:[#allocation4 + $0x10] sm:$0xff] %vm423, 0.0
      %1797 = vst.msk [vmem:[#allocation4 + $0x18] sm:$0x1] %vm1794, 0.0
      %1798 = vst.msk [vmem:[#allocation4 + $0x20] sm:$0xff] %vm423, 0.0
      %1799 = vst.msk [vmem:[#allocation4 + $0x28] sm:$0x1] %vm1794, 0.0
      %1800 = vst.msk [vmem:[#allocation4 + $0x30] sm:$0xff] %vm423, 0.0
      %1801 = vst.msk [vmem:[#allocation4 + $0x38] sm:$0x1] %vm1794, 0.0
      %1802 = vst.msk [vmem:[#allocation4 + $0x40] sm:$0xff] %vm423, 0.0
      %1803 = vst.msk [vmem:[#allocation4 + $0x48] sm:$0x1] %vm1794, 0.0
      %1804 = vst.msk [vmem:[#allocation4 + $0x50] sm:$0xff] %vm423, 0.0
      %1805 = vst.msk [vmem:[#allocation4 + $0x58] sm:$0x1] %vm1794, 0.0
      %1806 = vst.msk [vmem:[#allocation4 + $0x60] sm:$0xff] %vm423, 0.0
      %1807 = vst.msk [vmem:[#allocation4 + $0x68] sm:$0x1] %vm1794, 0.0
      %1808 = vst.msk [vmem:[#allocation4 + $0x70] sm:$0xff] %vm423, 0.0
      %1809 = vst.msk [vmem:[#allocation4 + $0x78] sm:$0x1] %vm1794, 0.0
      %1810 = vst.msk [vmem:[#allocation4 + $0x80] sm:$0xff] %vm423, 0.0
      %1811 = vst.msk [vmem:[#allocation4 + $0x88] sm:$0x1] %vm1794, 0.0
      %1844 = vst [vmem:[#allocation1] ss:$4 sm:$0xff] %v1683
      %s1845 = scalar_lea.vmem [#allocation1], 1
      %1846 = vst [vmem:[%s1845] ss:$4 sm:$0xff] %v1684
      %s1847 = scalar_lea.vmem [#allocation1], 2
      %1848 = vst [vmem:[%s1847] ss:$4 sm:$0xff] %v1685
      %s1849 = scalar_lea.vmem [#allocation1], 3
      %1850 = vst [vmem:[%s1849] ss:$4 sm:$0xff] %v1686
      %v1851 = vld.sshfl [vmem:[#allocation1] sm:$0xff pattern:$0x73625140]
      %s1852 = scalar_lea.vmem [#allocation1], 32
      %1853 = vst [vmem:[%s1852] ss:$4 sm:$0xff] %v1777
      %s1854 = scalar_lea.vmem [#allocation1], 33
      %1855 = vst [vmem:[%s1854] ss:$4 sm:$0xff] %v1778
      %s1856 = scalar_lea.vmem [#allocation1], 34
      %1857 = vst [vmem:[%s1856] ss:$4 sm:$0xff] %v1779
      %s1858 = scalar_lea.vmem [#allocation1], 35
      %1859 = vst [vmem:[%s1858] ss:$4 sm:$0xff] %v1780
      %v1860 = vld.sshfl [vmem:[#allocation1 + $0x20] sm:$0xff pattern:$0x73625140]
      %1861 = vst [vmem:[#allocation1] ss:$4 sm:$0xff] %v1687
      %1862 = vst [vmem:[%s1845] ss:$4 sm:$0xff] %v1688
      %1863 = vst [vmem:[%s1847] ss:$4 sm:$0xff] %v1689
      %1864 = vst [vmem:[%s1849] ss:$4 sm:$0xff] %v1690
      %v1865 = vld.sshfl [vmem:[#allocation1] sm:$0xff pattern:$0x73625140]
      %1866 = vst [vmem:[%s1852] ss:$4 sm:$0xff] %v1781
      %1867 = vst [vmem:[%s1854] ss:$4 sm:$0xff] %v1782
      %1868 = vst [vmem:[%s1856] ss:$4 sm:$0xff] %v1783
      %1869 = vst [vmem:[%s1858] ss:$4 sm:$0xff] %v1784
      %v1870 = vld.sshfl [vmem:[#allocation1 + $0x20] sm:$0xff pattern:$0x73625140]
      %1871 = vst [vmem:[#allocation1] ss:$4 sm:$0xff] %v1691
      %1872 = vst [vmem:[%s1845] ss:$4 sm:$0xff] %v1692
      %1873 = vst [vmem:[%s1847] ss:$4 sm:$0xff] %v1693
      %1874 = vst [vmem:[%s1849] ss:$4 sm:$0xff] %v1694
      %v1875 = vld.sshfl [vmem:[#allocation1] sm:$0xff pattern:$0x73625140]
      %1876 = vst [vmem:[%s1852] ss:$4 sm:$0xff] %v1785
      %1877 = vst [vmem:[%s1854] ss:$4 sm:$0xff] %v1786
      %1878 = vst [vmem:[%s1856] ss:$4 sm:$0xff] %v1787
      %1879 = vst [vmem:[%s1858] ss:$4 sm:$0xff] %v1788
      %v1880 = vld.sshfl [vmem:[#allocation1 + $0x20] sm:$0xff pattern:$0x73625140]
      %1881 = vst [vmem:[#allocation1] ss:$4 sm:$0xff] %v1695
      %1882 = vst [vmem:[%s1845] ss:$4 sm:$0xff] %v1696
      %1883 = vst [vmem:[%s1847] ss:$4 sm:$0xff] %v1697
      %1884 = vst [vmem:[%s1849] ss:$4 sm:$0xff] %v1698
      %v1885 = vld.sshfl [vmem:[#allocation1] sm:$0xff pattern:$0x73625140]
      %1886 = vst [vmem:[%s1852] ss:$4 sm:$0xff] %v1789
      %1887 = vst [vmem:[%s1854] ss:$4 sm:$0xff] %v1790
      %1888 = vst [vmem:[%s1856] ss:$4 sm:$0xff] %v1791
      %1889 = vst [vmem:[%s1858] ss:$4 sm:$0xff] %v1792
      %v1890 = vld.sshfl [vmem:[#allocation1 + $0x20] sm:$0xff pattern:$0x73625140]
      %1899 = vst.msk [vmem:[#allocation4] sm:$0xff] %vm423, %v1851
      %1900 = vst.msk [vmem:[#allocation4 + $0x10] sm:$0xff] %vm423, %v1860
      %1901 = vst.msk [vmem:[#allocation4 + $0x20] sm:$0xff] %vm423, %v1865
      %1902 = vst.msk [vmem:[#allocation4 + $0x30] sm:$0xff] %vm423, %v1870
      %1903 = vst.msk [vmem:[#allocation4 + $0x40] sm:$0xff] %vm423, %v1875
      %1904 = vst.msk [vmem:[#allocation4 + $0x50] sm:$0xff] %vm423, %v1880
      %1905 = vst.msk [vmem:[#allocation4 + $0x60] sm:$0xff] %vm423, %v1885
      %1906 = vst.msk [vmem:[#allocation4 + $0x70] sm:$0xff] %vm423, %v1890
      %v1907 = vld [vmem:[#allocation4] sm:$0xff]
      %v1908 = vld [vmem:[#allocation4 + $0x10] sm:$0xff]
      %v1909 = vld [vmem:[#allocation4 + $0x20] sm:$0xff]
      %v1910 = vld [vmem:[#allocation4 + $0x30] sm:$0xff]
      %v1911 = vld [vmem:[#allocation4 + $0x40] sm:$0xff]
      %v1912 = vld [vmem:[#allocation4 + $0x50] sm:$0xff]
      %v1913 = vld [vmem:[#allocation4 + $0x60] sm:$0xff]
      %v1914 = vld [vmem:[#allocation4 + $0x70] sm:$0xff]
      %s1915 = scalar_lea.vmem %s7, 256
      %v1916 = vld [vmem:[%s1915] sm:$0xff]
      %v1917 = vld [vmem:[%s1915 + $0x8] sm:$0xff]
      %v1918 = vld [vmem:[%s1915 + $0x10] sm:$0xff]
      %v1919 = vld [vmem:[%s1915 + $0x18] sm:$0xff]
      %v1920 = vld [vmem:[%s1915 + $0x20] sm:$0xff]
      %v1921 = vld [vmem:[%s1915 + $0x28] sm:$0xff]
      %v1922 = vld [vmem:[%s1915 + $0x30] sm:$0xff]
      %v1923 = vld [vmem:[%s1915 + $0x38] sm:$0xff]
      %v1924 = vld [vmem:[%s8] sm:$0x1]
      %v1926 = vperm.slane %v1924, 0
      %v1929 = vsel %vm423, %v1907, 0
      %v1932 = vsel %vm423, %v1908, 0
      %v1935 = vsel %vm423, %v1909, 0
      %v1938 = vsel %vm423, %v1910, 0
      %v1941 = vsel %vm423, %v1911, 0
      %v1944 = vsel %vm423, %v1912, 0
      %v1947 = vsel %vm423, %v1913, 0
      %v1950 = vsel %vm423, %v1914, 0
      %1952 = vmatpush.msra.mxu0 0.0
      %1953 = vmatpush.msra.mxu0 0.0
      %1954 = vmatpush.msra.mxu0 0.0
      %1955 = vmatpush.msra.mxu0 0.0
      %1956 = vmatpush.msra.mxu0 0.0
      %1957 = vmatpush.msra.mxu0 0.0
      %1958 = vmatpush.msra.mxu0 0.0
      %1959 = vmatpush.msra.mxu0 0.0
      %1960 = vmatpush.msra.mxu0 %v1923
      %1961 = vmatpush.msra.mxu0 %v1922
      %1962 = vmatpush.msra.mxu0 %v1921
      %1963 = vmatpush.msra.mxu0 %v1920
      %1964 = vmatpush.msra.mxu0 %v1919
      %1965 = vmatpush.msra.mxu0 %v1918
      %1966 = vmatpush.msra.mxu0 %v1917
      %1967 = vmatpush.msra.mxu0 %v1916
      %1968 = vmatmul.f32.gmra.mxu0 %v1929
      %v1969 = vpop.f32.mrf.mxu0
      %v1970 = vadd.f32 %v1926, %v1969
      %1971 = vmatmul.f32.gmra.mxu0 %v1932
      %v1972 = vpop.f32.mrf.mxu0
      %v1973 = vadd.f32 %v1926, %v1972
      %1974 = vmatmul.f32.gmra.mxu0 %v1935
      %v1975 = vpop.f32.mrf.mxu0
      %v1976 = vadd.f32 %v1926, %v1975
      %1977 = vmatmul.f32.gmra.mxu0 %v1938
      %v1978 = vpop.f32.mrf.mxu0
      %v1979 = vadd.f32 %v1926, %v1978
      %1980 = vmatmul.f32.gmra.mxu0 %v1941
      %v1981 = vpop.f32.mrf.mxu0
      %v1982 = vadd.f32 %v1926, %v1981
      %1983 = vmatmul.f32.gmra.mxu0 %v1944
      %v1984 = vpop.f32.mrf.mxu0
      %v1985 = vadd.f32 %v1926, %v1984
      %1986 = vmatmul.f32.gmra.mxu0 %v1947
      %v1987 = vpop.f32.mrf.mxu0
      %v1988 = vadd.f32 %v1926, %v1987
      %1989 = vmatmul.f32.gmra.mxu0 %v1950
      %v1990 = vpop.f32.mrf.mxu0
      %v1991 = vadd.f32 %v1926, %v1990
      %1992 = vdwg.mxu0
      %v1993 = vsub.f32 0.0, %v1970
      %v1994 = vsub.f32 0.0, %v1973
      %v1995 = vsub.f32 0.0, %v1976
      %v1996 = vsub.f32 0.0, %v1979
      %v1997 = vsub.f32 0.0, %v1982
      %v1998 = vsub.f32 0.0, %v1985
      %v1999 = vsub.f32 0.0, %v1988
      %v2000 = vsub.f32 0.0, %v1991
      %v2001 = vmul.f32 %v1993, 1.442695
      %v2002 = vpow.pop %v2001
      %v2003 = vmul.f32 %v1994, 1.442695
      %v2004 = vpow.pop %v2003
      %v2005 = vmul.f32 %v1995, 1.442695
      %v2006 = vpow.pop %v2005
      %v2007 = vmul.f32 %v1996, 1.442695
      %v2008 = vpow.pop %v2007
      %v2009 = vmul.f32 %v1997, 1.442695
      %v2010 = vpow.pop %v2009
      %v2011 = vmul.f32 %v1998, 1.442695
      %v2012 = vpow.pop %v2011
      %v2013 = vmul.f32 %v1999, 1.442695
      %v2014 = vpow.pop %v2013
      %v2015 = vmul.f32 %v2000, 1.442695
      %v2016 = vpow.pop %v2015
      %v2017 = vadd.f32 %v2002, 1.0
      %v2018 = vadd.f32 %v2004, 1.0
      %v2019 = vadd.f32 %v2006, 1.0
      %v2020 = vadd.f32 %v2008, 1.0
      %v2021 = vadd.f32 %v2010, 1.0
      %v2022 = vadd.f32 %v2012, 1.0
      %v2023 = vadd.f32 %v2014, 1.0
      %v2024 = vadd.f32 %v2016, 1.0
      %v2025 = vrcp.pop %v2017
      %v2026 = vmul.f32 %v2017, %v2025
      %v2027 = vsub.f32 1.0, %v2026
      %v2028 = vmul.f32 %v2025, %v2027
      %v2029 = vadd.f32 %v2025, %v2028
      %vm2030 = vweird.f32 %v2017
      %vm2031 = vweird.f32 %v2025
      %vm2032 = vmor %vm2030, %vm2031
      %v2033 = vsel %vm2032, %v2025, %v2029
      %v2034 = vand.u32 2147483647, %v2017
      %vm2035 = vcmp.eq.f32.partialorder %v2034, 8.507059e+37
      %v2036 = vand.u32 %v2017, 2147483648
      %v2037 = vor.u32 1.1754944e-38, %v2036
      %v2038 = vsel %vm2035, %v2037, %v2033
      %v2039 = vmul.f32 1.0, %v2038
      %v2040 = vrcp.pop %v2018
      %v2041 = vmul.f32 %v2018, %v2040
      %v2042 = vsub.f32 1.0, %v2041
      %v2043 = vmul.f32 %v2040, %v2042
      %v2044 = vadd.f32 %v2040, %v2043
      %vm2045 = vweird.f32 %v2018
      %vm2046 = vweird.f32 %v2040
      %vm2047 = vmor %vm2045, %vm2046
      %v2048 = vsel %vm2047, %v2040, %v2044
      %v2049 = vand.u32 2147483647, %v2018
      %vm2050 = vcmp.eq.f32.partialorder %v2049, 8.507059e+37
      %v2051 = vand.u32 %v2018, 2147483648
      %v2052 = vor.u32 1.1754944e-38, %v2051
      %v2053 = vsel %vm2050, %v2052, %v2048
      %v2054 = vmul.f32 1.0, %v2053
      %v2055 = vrcp.pop %v2019
      %v2056 = vmul.f32 %v2019, %v2055
      %v2057 = vsub.f32 1.0, %v2056
      %v2058 = vmul.f32 %v2055, %v2057
      %v2059 = vadd.f32 %v2055, %v2058
      %vm2060 = vweird.f32 %v2019
      %vm2061 = vweird.f32 %v2055
      %vm2062 = vmor %vm2060, %vm2061
      %v2063 = vsel %vm2062, %v2055, %v2059
      %v2064 = vand.u32 2147483647, %v2019
      %vm2065 = vcmp.eq.f32.partialorder %v2064, 8.507059e+37
      %v2066 = vand.u32 %v2019, 2147483648
      %v2067 = vor.u32 1.1754944e-38, %v2066
      %v2068 = vsel %vm2065, %v2067, %v2063
      %v2069 = vmul.f32 1.0, %v2068
      %v2070 = vrcp.pop %v2020
      %v2071 = vmul.f32 %v2020, %v2070
      %v2072 = vsub.f32 1.0, %v2071
      %v2073 = vmul.f32 %v2070, %v2072
      %v2074 = vadd.f32 %v2070, %v2073
      %vm2075 = vweird.f32 %v2020
      %vm2076 = vweird.f32 %v2070
      %vm2077 = vmor %vm2075, %vm2076
      %v2078 = vsel %vm2077, %v2070, %v2074
      %v2079 = vand.u32 2147483647, %v2020
      %vm2080 = vcmp.eq.f32.partialorder %v2079, 8.507059e+37
      %v2081 = vand.u32 %v2020, 2147483648
      %v2082 = vor.u32 1.1754944e-38, %v2081
      %v2083 = vsel %vm2080, %v2082, %v2078
      %v2084 = vmul.f32 1.0, %v2083
      %v2085 = vrcp.pop %v2021
      %v2086 = vmul.f32 %v2021, %v2085
      %v2087 = vsub.f32 1.0, %v2086
      %v2088 = vmul.f32 %v2085, %v2087
      %v2089 = vadd.f32 %v2085, %v2088
      %vm2090 = vweird.f32 %v2021
      %vm2091 = vweird.f32 %v2085
      %vm2092 = vmor %vm2090, %vm2091
      %v2093 = vsel %vm2092, %v2085, %v2089
      %v2094 = vand.u32 2147483647, %v2021
      %vm2095 = vcmp.eq.f32.partialorder %v2094, 8.507059e+37
      %v2096 = vand.u32 %v2021, 2147483648
      %v2097 = vor.u32 1.1754944e-38, %v2096
      %v2098 = vsel %vm2095, %v2097, %v2093
      %v2099 = vmul.f32 1.0, %v2098
      %v2100 = vrcp.pop %v2022
      %v2101 = vmul.f32 %v2022, %v2100
      %v2102 = vsub.f32 1.0, %v2101
      %v2103 = vmul.f32 %v2100, %v2102
      %v2104 = vadd.f32 %v2100, %v2103
      %vm2105 = vweird.f32 %v2022
      %vm2106 = vweird.f32 %v2100
      %vm2107 = vmor %vm2105, %vm2106
      %v2108 = vsel %vm2107, %v2100, %v2104
      %v2109 = vand.u32 2147483647, %v2022
      %vm2110 = vcmp.eq.f32.partialorder %v2109, 8.507059e+37
      %v2111 = vand.u32 %v2022, 2147483648
      %v2112 = vor.u32 1.1754944e-38, %v2111
      %v2113 = vsel %vm2110, %v2112, %v2108
      %v2114 = vmul.f32 1.0, %v2113
      %v2115 = vrcp.pop %v2023
      %v2116 = vmul.f32 %v2023, %v2115
      %v2117 = vsub.f32 1.0, %v2116
      %v2118 = vmul.f32 %v2115, %v2117
      %v2119 = vadd.f32 %v2115, %v2118
      %vm2120 = vweird.f32 %v2023
      %vm2121 = vweird.f32 %v2115
      %vm2122 = vmor %vm2120, %vm2121
      %v2123 = vsel %vm2122, %v2115, %v2119
      %v2124 = vand.u32 2147483647, %v2023
      %vm2125 = vcmp.eq.f32.partialorder %v2124, 8.507059e+37
      %v2126 = vand.u32 %v2023, 2147483648
      %v2127 = vor.u32 1.1754944e-38, %v2126
      %v2128 = vsel %vm2125, %v2127, %v2123
      %v2129 = vmul.f32 1.0, %v2128
      %v2130 = vrcp.pop %v2024
      %v2131 = vmul.f32 %v2024, %v2130
      %v2132 = vsub.f32 1.0, %v2131
      %v2133 = vmul.f32 %v2130, %v2132
      %v2134 = vadd.f32 %v2130, %v2133
      %vm2135 = vweird.f32 %v2024
      %vm2136 = vweird.f32 %v2130
      %vm2137 = vmor %vm2135, %vm2136
      %v2138 = vsel %vm2137, %v2130, %v2134
      %v2139 = vand.u32 2147483647, %v2024
      %vm2140 = vcmp.eq.f32.partialorder %v2139, 8.507059e+37
      %v2141 = vand.u32 %v2024, 2147483648
      %v2142 = vor.u32 1.1754944e-38, %v2141
      %v2143 = vsel %vm2140, %v2142, %v2138
      %v2144 = vmul.f32 1.0, %v2143
      %2145 = vst [vmem:[%s332] sm:$0xff] %v2039
      %2146 = vst [vmem:[%s332 + $0x8] sm:$0xff] %v2054
      %2147 = vst [vmem:[%s332 + $0x10] sm:$0xff] %v2069
      %2148 = vst [vmem:[%s332 + $0x18] sm:$0xff] %v2084
      %2149 = vst [vmem:[%s332 + $0x20] sm:$0xff] %v2099
      %2150 = vst [vmem:[%s332 + $0x28] sm:$0xff] %v2114
      %2151 = vst [vmem:[%s332 + $0x30] sm:$0xff] %v2129
      %2152 = vst [vmem:[%s332 + $0x38] sm:$0xff] %v2144
      %v2153 = vld [vmem:[#allocation4] sm:$0xff]
      %v2154 = vld [vmem:[#allocation4 + $0x10] sm:$0xff]
      %v2155 = vld [vmem:[#allocation4 + $0x20] sm:$0xff]
      %v2156 = vld [vmem:[#allocation4 + $0x30] sm:$0xff]
      %v2157 = vld [vmem:[#allocation4 + $0x40] sm:$0xff]
      %v2158 = vld [vmem:[#allocation4 + $0x50] sm:$0xff]
      %v2159 = vld [vmem:[#allocation4 + $0x60] sm:$0xff]
      %v2160 = vld [vmem:[#allocation4 + $0x70] sm:$0xff]
      %s2161 = scalar_lea.vmem %s7, 320
      %v2162 = vld [vmem:[%s2161] sm:$0xff]
      %v2163 = vld [vmem:[%s2161 + $0x8] sm:$0xff]
      %v2164 = vld [vmem:[%s2161 + $0x10] sm:$0xff]
      %v2165 = vld [vmem:[%s2161 + $0x18] sm:$0xff]
      %v2166 = vld [vmem:[%s2161 + $0x20] sm:$0xff]
      %v2167 = vld [vmem:[%s2161 + $0x28] sm:$0xff]
      %v2168 = vld [vmem:[%s2161 + $0x30] sm:$0xff]
      %v2169 = vld [vmem:[%s2161 + $0x38] sm:$0xff]
      %v2170 = vld [vmem:[#allocation4 + $0x1] sm:$0xff]
      %v2171 = vld [vmem:[#allocation4 + $0x11] sm:$0xff]
      %v2172 = vld [vmem:[#allocation4 + $0x21] sm:$0xff]
      %v2173 = vld [vmem:[#allocation4 + $0x31] sm:$0xff]
      %v2174 = vld [vmem:[#allocation4 + $0x41] sm:$0xff]
      %v2175 = vld [vmem:[#allocation4 + $0x51] sm:$0xff]
      %v2176 = vld [vmem:[#allocation4 + $0x61] sm:$0xff]
      %v2177 = vld [vmem:[#allocation4 + $0x71] sm:$0xff]
      %s2178 = scalar_lea.vmem %s7, 192
      %v2179 = vld [vmem:[%s2178] sm:$0xff]
      %v2180 = vld [vmem:[%s2178 + $0x8] sm:$0xff]
      %v2181 = vld [vmem:[%s2178 + $0x10] sm:$0xff]
      %v2182 = vld [vmem:[%s2178 + $0x18] sm:$0xff]
      %v2183 = vld [vmem:[%s2178 + $0x20] sm:$0xff]
      %v2184 = vld [vmem:[%s2178 + $0x28] sm:$0xff]
      %v2185 = vld [vmem:[%s2178 + $0x30] sm:$0xff]
      %v2186 = vld [vmem:[%s2178 + $0x38] sm:$0xff]
      %v2188 = vsel %vm423, %v2170, 0
      %v2191 = vsel %vm423, %v2171, 0
      %v2194 = vsel %vm423, %v2172, 0
      %v2197 = vsel %vm423, %v2173, 0
      %v2200 = vsel %vm423, %v2174, 0
      %v2203 = vsel %vm423, %v2175, 0
      %v2206 = vsel %vm423, %v2176, 0
      %v2209 = vsel %vm423, %v2177, 0
      %2211 = vmatpush.msra.mxu0 0.0
      %2212 = vmatpush.msra.mxu0 0.0
      %2213 = vmatpush.msra.mxu0 0.0
      %2214 = vmatpush.msra.mxu0 0.0
      %2215 = vmatpush.msra.mxu0 0.0
      %2216 = vmatpush.msra.mxu0 0.0
      %2217 = vmatpush.msra.mxu0 0.0
      %2218 = vmatpush.msra.mxu0 0.0
      %2219 = vmatpush.msra.mxu0 %v2186
      %2220 = vmatpush.msra.mxu0 %v2185
      %2221 = vmatpush.msra.mxu0 %v2184
      %2222 = vmatpush.msra.mxu0 %v2183
      %2223 = vmatpush.msra.mxu0 %v2182
      %2224 = vmatpush.msra.mxu0 %v2181
      %2225 = vmatpush.msra.mxu0 %v2180
      %2226 = vmatpush.msra.mxu0 %v2179
      %2227 = vmatmul.f32.gmra.mxu0 %v2188
      %v2228 = vpop.f32.mrf.mxu0
      %v2229 = vadd.f32 0.0, %v2228
      %2230 = vmatmul.f32.gmra.mxu0 %v2191
      %v2231 = vpop.f32.mrf.mxu0
      %v2232 = vadd.f32 0.0, %v2231
      %2233 = vmatmul.f32.gmra.mxu0 %v2194
      %v2234 = vpop.f32.mrf.mxu0
      %v2235 = vadd.f32 0.0, %v2234
      %2236 = vmatmul.f32.gmra.mxu0 %v2197
      %v2237 = vpop.f32.mrf.mxu0
      %v2238 = vadd.f32 0.0, %v2237
      %2239 = vmatmul.f32.gmra.mxu0 %v2200
      %v2240 = vpop.f32.mrf.mxu0
      %v2241 = vadd.f32 0.0, %v2240
      %2242 = vmatmul.f32.gmra.mxu0 %v2203
      %v2243 = vpop.f32.mrf.mxu0
      %v2244 = vadd.f32 0.0, %v2243
      %2245 = vmatmul.f32.gmra.mxu0 %v2206
      %v2246 = vpop.f32.mrf.mxu0
      %v2247 = vadd.f32 0.0, %v2246
      %2248 = vmatmul.f32.gmra.mxu0 %v2209
      %v2249 = vpop.f32.mrf.mxu0
      %v2250 = vadd.f32 0.0, %v2249
      %2251 = vdwg.mxu0
      %v2253 = vsel %vm423, %v2153, 0
      %v2256 = vsel %vm423, %v2154, 0
      %v2259 = vsel %vm423, %v2155, 0
      %v2262 = vsel %vm423, %v2156, 0
      %v2265 = vsel %vm423, %v2157, 0
      %v2268 = vsel %vm423, %v2158, 0
      %v2271 = vsel %vm423, %v2159, 0
      %v2274 = vsel %vm423, %v2160, 0
      %2276 = vmatpush.msra.mxu0 0.0
      %2277 = vmatpush.msra.mxu0 0.0
      %2278 = vmatpush.msra.mxu0 0.0
      %2279 = vmatpush.msra.mxu0 0.0
      %2280 = vmatpush.msra.mxu0 0.0
      %2281 = vmatpush.msra.mxu0 0.0
      %2282 = vmatpush.msra.mxu0 0.0
      %2283 = vmatpush.msra.mxu0 0.0
      %2284 = vmatpush.msra.mxu0 %v2169
      %2285 = vmatpush.msra.mxu0 %v2168
      %2286 = vmatpush.msra.mxu0 %v2167
      %2287 = vmatpush.msra.mxu0 %v2166
      %2288 = vmatpush.msra.mxu0 %v2165
      %2289 = vmatpush.msra.mxu0 %v2164
      %2290 = vmatpush.msra.mxu0 %v2163
      %2291 = vmatpush.msra.mxu0 %v2162
      %2292 = vmatmul.f32.gmra.mxu0 %v2253
      %v2293 = vpop.f32.mrf.mxu0
      %v2294 = vadd.f32 %v2229, %v2293
      %2295 = vmatmul.f32.gmra.mxu0 %v2256
      %v2296 = vpop.f32.mrf.mxu0
      %v2297 = vadd.f32 %v2232, %v2296
      %2298 = vmatmul.f32.gmra.mxu0 %v2259
      %v2299 = vpop.f32.mrf.mxu0
      %v2300 = vadd.f32 %v2235, %v2299
      %2301 = vmatmul.f32.gmra.mxu0 %v2262
      %v2302 = vpop.f32.mrf.mxu0
      %v2303 = vadd.f32 %v2238, %v2302
      %2304 = vmatmul.f32.gmra.mxu0 %v2265
      %v2305 = vpop.f32.mrf.mxu0
      %v2306 = vadd.f32 %v2241, %v2305
      %2307 = vmatmul.f32.gmra.mxu0 %v2268
      %v2308 = vpop.f32.mrf.mxu0
      %v2309 = vadd.f32 %v2244, %v2308
      %2310 = vmatmul.f32.gmra.mxu0 %v2271
      %v2311 = vpop.f32.mrf.mxu0
      %v2312 = vadd.f32 %v2247, %v2311
      %2313 = vmatmul.f32.gmra.mxu0 %v2274
      %v2314 = vpop.f32.mrf.mxu0
      %v2315 = vadd.f32 %v2250, %v2314
      %2316 = vdwg.mxu0
      %v2317 = vld [vmem:[%s8] sm:$0x1]
      %v2319 = vperm.slane %v2317, 0
      %v2321 = vadd.f32 %v2294, %v2319
      %v2322 = vadd.f32 %v2297, %v2319
      %v2323 = vadd.f32 %v2300, %v2319
      %v2324 = vadd.f32 %v2303, %v2319
      %v2325 = vadd.f32 %v2306, %v2319
      %v2326 = vadd.f32 %v2309, %v2319
      %v2327 = vadd.f32 %v2312, %v2319
      %v2328 = vadd.f32 %v2315, %v2319
      %v2329 = vsub.f32 0.0, %v2321
      %v2330 = vsub.f32 0.0, %v2322
      %v2331 = vsub.f32 0.0, %v2323
      %v2332 = vsub.f32 0.0, %v2324
      %v2333 = vsub.f32 0.0, %v2325
      %v2334 = vsub.f32 0.0, %v2326
      %v2335 = vsub.f32 0.0, %v2327
      %v2336 = vsub.f32 0.0, %v2328
      %v2337 = vmul.f32 %v2329, 1.442695
      %v2338 = vpow.pop %v2337
      %v2339 = vmul.f32 %v2330, 1.442695
      %v2340 = vpow.pop %v2339
      %v2341 = vmul.f32 %v2331, 1.442695
      %v2342 = vpow.pop %v2341
      %v2343 = vmul.f32 %v2332, 1.442695
      %v2344 = vpow.pop %v2343
      %v2345 = vmul.f32 %v2333, 1.442695
      %v2346 = vpow.pop %v2345
      %v2347 = vmul.f32 %v2334, 1.442695
      %v2348 = vpow.pop %v2347
      %v2349 = vmul.f32 %v2335, 1.442695
      %v2350 = vpow.pop %v2349
      %v2351 = vmul.f32 %v2336, 1.442695
      %v2352 = vpow.pop %v2351
      %v2353 = vadd.f32 %v2338, 1.0
      %v2354 = vadd.f32 %v2340, 1.0
      %v2355 = vadd.f32 %v2342, 1.0
      %v2356 = vadd.f32 %v2344, 1.0
      %v2357 = vadd.f32 %v2346, 1.0
      %v2358 = vadd.f32 %v2348, 1.0
      %v2359 = vadd.f32 %v2350, 1.0
      %v2360 = vadd.f32 %v2352, 1.0
      %v2361 = vrcp.pop %v2353
      %v2362 = vmul.f32 %v2353, %v2361
      %v2363 = vsub.f32 1.0, %v2362
      %v2364 = vmul.f32 %v2361, %v2363
      %v2365 = vadd.f32 %v2361, %v2364
      %vm2366 = vweird.f32 %v2353
      %vm2367 = vweird.f32 %v2361
      %vm2368 = vmor %vm2366, %vm2367
      %v2369 = vsel %vm2368, %v2361, %v2365
      %v2370 = vand.u32 2147483647, %v2353
      %vm2371 = vcmp.eq.f32.partialorder %v2370, 8.507059e+37
      %v2372 = vand.u32 %v2353, 2147483648
      %v2373 = vor.u32 1.1754944e-38, %v2372
      %v2374 = vsel %vm2371, %v2373, %v2369
      %v2375 = vmul.f32 1.0, %v2374
      %v2376 = vrcp.pop %v2354
      %v2377 = vmul.f32 %v2354, %v2376
      %v2378 = vsub.f32 1.0, %v2377
      %v2379 = vmul.f32 %v2376, %v2378
      %v2380 = vadd.f32 %v2376, %v2379
      %vm2381 = vweird.f32 %v2354
      %vm2382 = vweird.f32 %v2376
      %vm2383 = vmor %vm2381, %vm2382
      %v2384 = vsel %vm2383, %v2376, %v2380
      %v2385 = vand.u32 2147483647, %v2354
      %vm2386 = vcmp.eq.f32.partialorder %v2385, 8.507059e+37
      %v2387 = vand.u32 %v2354, 2147483648
      %v2388 = vor.u32 1.1754944e-38, %v2387
      %v2389 = vsel %vm2386, %v2388, %v2384
      %v2390 = vmul.f32 1.0, %v2389
      %v2391 = vrcp.pop %v2355
      %v2392 = vmul.f32 %v2355, %v2391
      %v2393 = vsub.f32 1.0, %v2392
      %v2394 = vmul.f32 %v2391, %v2393
      %v2395 = vadd.f32 %v2391, %v2394
      %vm2396 = vweird.f32 %v2355
      %vm2397 = vweird.f32 %v2391
      %vm2398 = vmor %vm2396, %vm2397
      %v2399 = vsel %vm2398, %v2391, %v2395
      %v2400 = vand.u32 2147483647, %v2355
      %vm2401 = vcmp.eq.f32.partialorder %v2400, 8.507059e+37
      %v2402 = vand.u32 %v2355, 2147483648
      %v2403 = vor.u32 1.1754944e-38, %v2402
      %v2404 = vsel %vm2401, %v2403, %v2399
      %v2405 = vmul.f32 1.0, %v2404
      %v2406 = vrcp.pop %v2356
      %v2407 = vmul.f32 %v2356, %v2406
      %v2408 = vsub.f32 1.0, %v2407
      %v2409 = vmul.f32 %v2406, %v2408
      %v2410 = vadd.f32 %v2406, %v2409
      %vm2411 = vweird.f32 %v2356
      %vm2412 = vweird.f32 %v2406
      %vm2413 = vmor %vm2411, %vm2412
      %v2414 = vsel %vm2413, %v2406, %v2410
      %v2415 = vand.u32 2147483647, %v2356
      %vm2416 = vcmp.eq.f32.partialorder %v2415, 8.507059e+37
      %v2417 = vand.u32 %v2356, 2147483648
      %v2418 = vor.u32 1.1754944e-38, %v2417
      %v2419 = vsel %vm2416, %v2418, %v2414
      %v2420 = vmul.f32 1.0, %v2419
      %v2421 = vrcp.pop %v2357
      %v2422 = vmul.f32 %v2357, %v2421
      %v2423 = vsub.f32 1.0, %v2422
      %v2424 = vmul.f32 %v2421, %v2423
      %v2425 = vadd.f32 %v2421, %v2424
      %vm2426 = vweird.f32 %v2357
      %vm2427 = vweird.f32 %v2421
      %vm2428 = vmor %vm2426, %vm2427
      %v2429 = vsel %vm2428, %v2421, %v2425
      %v2430 = vand.u32 2147483647, %v2357
      %vm2431 = vcmp.eq.f32.partialorder %v2430, 8.507059e+37
      %v2432 = vand.u32 %v2357, 2147483648
      %v2433 = vor.u32 1.1754944e-38, %v2432
      %v2434 = vsel %vm2431, %v2433, %v2429
      %v2435 = vmul.f32 1.0, %v2434
      %v2436 = vrcp.pop %v2358
      %v2437 = vmul.f32 %v2358, %v2436
      %v2438 = vsub.f32 1.0, %v2437
      %v2439 = vmul.f32 %v2436, %v2438
      %v2440 = vadd.f32 %v2436, %v2439
      %vm2441 = vweird.f32 %v2358
      %vm2442 = vweird.f32 %v2436
      %vm2443 = vmor %vm2441, %vm2442
      %v2444 = vsel %vm2443, %v2436, %v2440
      %v2445 = vand.u32 2147483647, %v2358
      %vm2446 = vcmp.eq.f32.partialorder %v2445, 8.507059e+37
      %v2447 = vand.u32 %v2358, 2147483648
      %v2448 = vor.u32 1.1754944e-38, %v2447
      %v2449 = vsel %vm2446, %v2448, %v2444
      %v2450 = vmul.f32 1.0, %v2449
      %v2451 = vrcp.pop %v2359
      %v2452 = vmul.f32 %v2359, %v2451
      %v2453 = vsub.f32 1.0, %v2452
      %v2454 = vmul.f32 %v2451, %v2453
      %v2455 = vadd.f32 %v2451, %v2454
      %vm2456 = vweird.f32 %v2359
      %vm2457 = vweird.f32 %v2451
      %vm2458 = vmor %vm2456, %vm2457
      %v2459 = vsel %vm2458, %v2451, %v2455
      %v2460 = vand.u32 2147483647, %v2359
      %vm2461 = vcmp.eq.f32.partialorder %v2460, 8.507059e+37
      %v2462 = vand.u32 %v2359, 2147483648
      %v2463 = vor.u32 1.1754944e-38, %v2462
      %v2464 = vsel %vm2461, %v2463, %v2459
      %v2465 = vmul.f32 1.0, %v2464
      %v2466 = vrcp.pop %v2360
      %v2467 = vmul.f32 %v2360, %v2466
      %v2468 = vsub.f32 1.0, %v2467
      %v2469 = vmul.f32 %v2466, %v2468
      %v2470 = vadd.f32 %v2466, %v2469
      %vm2471 = vweird.f32 %v2360
      %vm2472 = vweird.f32 %v2466
      %vm2473 = vmor %vm2471, %vm2472
      %v2474 = vsel %vm2473, %v2466, %v2470
      %v2475 = vand.u32 2147483647, %v2360
      %vm2476 = vcmp.eq.f32.partialorder %v2475, 8.507059e+37
      %v2477 = vand.u32 %v2360, 2147483648
      %v2478 = vor.u32 1.1754944e-38, %v2477
      %v2479 = vsel %vm2476, %v2478, %v2474
      %v2480 = vmul.f32 1.0, %v2479
      %s2481 = scalar_lea.vmem %s332, 64
      %2482 = vst [vmem:[%s2481] sm:$0xff] %v2375
      %2483 = vst [vmem:[%s2481 + $0x8] sm:$0xff] %v2390
      %2484 = vst [vmem:[%s2481 + $0x10] sm:$0xff] %v2405
      %2485 = vst [vmem:[%s2481 + $0x18] sm:$0xff] %v2420
      %2486 = vst [vmem:[%s2481 + $0x20] sm:$0xff] %v2435
      %2487 = vst [vmem:[%s2481 + $0x28] sm:$0xff] %v2450
      %2488 = vst [vmem:[%s2481 + $0x30] sm:$0xff] %v2465
      %2489 = vst [vmem:[%s2481 + $0x38] sm:$0xff] %v2480
      %v2490 = vld [vmem:[#allocation4] sm:$0xff]
      %v2491 = vld [vmem:[#allocation4 + $0x10] sm:$0xff]
      %v2492 = vld [vmem:[#allocation4 + $0x20] sm:$0xff]
      %v2493 = vld [vmem:[#allocation4 + $0x30] sm:$0xff]
      %v2494 = vld [vmem:[#allocation4 + $0x40] sm:$0xff]
      %v2495 = vld [vmem:[#allocation4 + $0x50] sm:$0xff]
      %v2496 = vld [vmem:[#allocation4 + $0x60] sm:$0xff]
      %v2497 = vld [vmem:[#allocation4 + $0x70] sm:$0xff]
      %s2498 = scalar_lea.vmem %s7, 448
      %v2499 = vld [vmem:[%s2498] sm:$0xff]
      %v2500 = vld [vmem:[%s2498 + $0x8] sm:$0xff]
      %v2501 = vld [vmem:[%s2498 + $0x10] sm:$0xff]
      %v2502 = vld [vmem:[%s2498 + $0x18] sm:$0xff]
      %v2503 = vld [vmem:[%s2498 + $0x20] sm:$0xff]
      %v2504 = vld [vmem:[%s2498 + $0x28] sm:$0xff]
      %v2505 = vld [vmem:[%s2498 + $0x30] sm:$0xff]
      %v2506 = vld [vmem:[%s2498 + $0x38] sm:$0xff]
      %s2507 = scalar_lea.vmem [#allocation4], 16
      %v2508 = vld [vmem:[%s2507] sm:$0xff]
      %v2509 = vld [vmem:[%s2507 + $0x10] sm:$0xff]
      %v2510 = vld [vmem:[%s2507 + $0x20] sm:$0xff]
      %v2511 = vld [vmem:[%s2507 + $0x30] sm:$0xff]
      %v2512 = vld [vmem:[%s2507 + $0x40] sm:$0xff]
      %v2513 = vld [vmem:[%s2507 + $0x50] sm:$0xff]
      %v2514 = vld [vmem:[%s2507 + $0x60] sm:$0xff]
      %v2515 = vld [vmem:[%s2507 + $0x70] sm:$0xff]
      %s2516 = scalar_lea.vmem %s7, 64
      %v2517 = vld [vmem:[%s2516] sm:$0xff]
      %v2518 = vld [vmem:[%s2516 + $0x8] sm:$0xff]
      %v2519 = vld [vmem:[%s2516 + $0x10] sm:$0xff]
      %v2520 = vld [vmem:[%s2516 + $0x18] sm:$0xff]
      %v2521 = vld [vmem:[%s2516 + $0x20] sm:$0xff]
      %v2522 = vld [vmem:[%s2516 + $0x28] sm:$0xff]
      %v2523 = vld [vmem:[%s2516 + $0x30] sm:$0xff]
      %v2524 = vld [vmem:[%s2516 + $0x38] sm:$0xff]
      %v2526 = vsel %vm423, %v2508, 0
      %v2529 = vsel %vm423, %v2509, 0
      %v2532 = vsel %vm423, %v2510, 0
      %v2535 = vsel %vm423, %v2511, 0
      %v2538 = vsel %vm423, %v2512, 0
      %v2541 = vsel %vm423, %v2513, 0
      %v2544 = vsel %vm423, %v2514, 0
      %v2547 = vsel %vm423, %v2515, 0
      %2549 = vmatpush.msra.mxu0 0.0
      %2550 = vmatpush.msra.mxu0 0.0
      %2551 = vmatpush.msra.mxu0 0.0
      %2552 = vmatpush.msra.mxu0 0.0
      %2553 = vmatpush.msra.mxu0 0.0
      %2554 = vmatpush.msra.mxu0 0.0
      %2555 = vmatpush.msra.mxu0 0.0
      %2556 = vmatpush.msra.mxu0 0.0
      %2557 = vmatpush.msra.mxu0 %v2524
      %2558 = vmatpush.msra.mxu0 %v2523
      %2559 = vmatpush.msra.mxu0 %v2522
      %2560 = vmatpush.msra.mxu0 %v2521
      %2561 = vmatpush.msra.mxu0 %v2520
      %2562 = vmatpush.msra.mxu0 %v2519
      %2563 = vmatpush.msra.mxu0 %v2518
      %2564 = vmatpush.msra.mxu0 %v2517
      %2565 = vmatmul.f32.gmra.mxu0 %v2526
      %v2566 = vpop.f32.mrf.mxu0
      %v2567 = vadd.f32 0.0, %v2566
      %2568 = vmatmul.f32.gmra.mxu0 %v2529
      %v2569 = vpop.f32.mrf.mxu0
      %v2570 = vadd.f32 0.0, %v2569
      %2571 = vmatmul.f32.gmra.mxu0 %v2532
      %v2572 = vpop.f32.mrf.mxu0
      %v2573 = vadd.f32 0.0, %v2572
      %2574 = vmatmul.f32.gmra.mxu0 %v2535
      %v2575 = vpop.f32.mrf.mxu0
      %v2576 = vadd.f32 0.0, %v2575
      %2577 = vmatmul.f32.gmra.mxu0 %v2538
      %v2578 = vpop.f32.mrf.mxu0
      %v2579 = vadd.f32 0.0, %v2578
      %2580 = vmatmul.f32.gmra.mxu0 %v2541
      %v2581 = vpop.f32.mrf.mxu0
      %v2582 = vadd.f32 0.0, %v2581
      %2583 = vmatmul.f32.gmra.mxu0 %v2544
      %v2584 = vpop.f32.mrf.mxu0
      %v2585 = vadd.f32 0.0, %v2584
      %2586 = vmatmul.f32.gmra.mxu0 %v2547
      %v2587 = vpop.f32.mrf.mxu0
      %v2588 = vadd.f32 0.0, %v2587
      %2589 = vdwg.mxu0
      %v2591 = vsel %vm423, %v2490, 0
      %v2594 = vsel %vm423, %v2491, 0
      %v2597 = vsel %vm423, %v2492, 0
      %v2600 = vsel %vm423, %v2493, 0
      %v2603 = vsel %vm423, %v2494, 0
      %v2606 = vsel %vm423, %v2495, 0
      %v2609 = vsel %vm423, %v2496, 0
      %v2612 = vsel %vm423, %v2497, 0
      %2614 = vmatpush.msra.mxu0 0.0
      %2615 = vmatpush.msra.mxu0 0.0
      %2616 = vmatpush.msra.mxu0 0.0
      %2617 = vmatpush.msra.mxu0 0.0
      %2618 = vmatpush.msra.mxu0 0.0
      %2619 = vmatpush.msra.mxu0 0.0
      %2620 = vmatpush.msra.mxu0 0.0
      %2621 = vmatpush.msra.mxu0 0.0
      %2622 = vmatpush.msra.mxu0 %v2506
      %2623 = vmatpush.msra.mxu0 %v2505
      %2624 = vmatpush.msra.mxu0 %v2504
      %2625 = vmatpush.msra.mxu0 %v2503
      %2626 = vmatpush.msra.mxu0 %v2502
      %2627 = vmatpush.msra.mxu0 %v2501
      %2628 = vmatpush.msra.mxu0 %v2500
      %2629 = vmatpush.msra.mxu0 %v2499
      %2630 = vmatmul.f32.gmra.mxu0 %v2591
      %v2631 = vpop.f32.mrf.mxu0
      %v2632 = vadd.f32 %v2567, %v2631
      %2633 = vmatmul.f32.gmra.mxu0 %v2594
      %v2634 = vpop.f32.mrf.mxu0
      %v2635 = vadd.f32 %v2570, %v2634
      %2636 = vmatmul.f32.gmra.mxu0 %v2597
      %v2637 = vpop.f32.mrf.mxu0
      %v2638 = vadd.f32 %v2573, %v2637
      %2639 = vmatmul.f32.gmra.mxu0 %v2600
      %v2640 = vpop.f32.mrf.mxu0
      %v2641 = vadd.f32 %v2576, %v2640
      %2642 = vmatmul.f32.gmra.mxu0 %v2603
      %v2643 = vpop.f32.mrf.mxu0
      %v2644 = vadd.f32 %v2579, %v2643
      %2645 = vmatmul.f32.gmra.mxu0 %v2606
      %v2646 = vpop.f32.mrf.mxu0
      %v2647 = vadd.f32 %v2582, %v2646
      %2648 = vmatmul.f32.gmra.mxu0 %v2609
      %v2649 = vpop.f32.mrf.mxu0
      %v2650 = vadd.f32 %v2585, %v2649
      %2651 = vmatmul.f32.gmra.mxu0 %v2612
      %v2652 = vpop.f32.mrf.mxu0
      %v2653 = vadd.f32 %v2588, %v2652
      %2654 = vdwg.mxu0
      %v2655 = vld [vmem:[%s8] sm:$0x1]
      %v2657 = vperm.slane %v2655, 0
      %v2659 = vadd.f32 %v2632, %v2657
      %v2660 = vadd.f32 %v2635, %v2657
      %v2661 = vadd.f32 %v2638, %v2657
      %v2662 = vadd.f32 %v2641, %v2657
      %v2663 = vadd.f32 %v2644, %v2657
      %v2664 = vadd.f32 %v2647, %v2657
      %v2665 = vadd.f32 %v2650, %v2657
      %v2666 = vadd.f32 %v2653, %v2657
      %v2667 = vsub.f32 0.0, %v2659
      %v2668 = vsub.f32 0.0, %v2660
      %v2669 = vsub.f32 0.0, %v2661
      %v2670 = vsub.f32 0.0, %v2662
      %v2671 = vsub.f32 0.0, %v2663
      %v2672 = vsub.f32 0.0, %v2664
      %v2673 = vsub.f32 0.0, %v2665
      %v2674 = vsub.f32 0.0, %v2666
      %v2675 = vmul.f32 %v2667, 1.442695
      %v2676 = vpow.pop %v2675
      %v2677 = vmul.f32 %v2668, 1.442695
      %v2678 = vpow.pop %v2677
      %v2679 = vmul.f32 %v2669, 1.442695
      %v2680 = vpow.pop %v2679
      %v2681 = vmul.f32 %v2670, 1.442695
      %v2682 = vpow.pop %v2681
      %v2683 = vmul.f32 %v2671, 1.442695
      %v2684 = vpow.pop %v2683
      %v2685 = vmul.f32 %v2672, 1.442695
      %v2686 = vpow.pop %v2685
      %v2687 = vmul.f32 %v2673, 1.442695
      %v2688 = vpow.pop %v2687
      %v2689 = vmul.f32 %v2674, 1.442695
      %v2690 = vpow.pop %v2689
      %v2691 = vadd.f32 %v2676, 1.0
      %v2692 = vadd.f32 %v2678, 1.0
      %v2693 = vadd.f32 %v2680, 1.0
      %v2694 = vadd.f32 %v2682, 1.0
      %v2695 = vadd.f32 %v2684, 1.0
      %v2696 = vadd.f32 %v2686, 1.0
      %v2697 = vadd.f32 %v2688, 1.0
      %v2698 = vadd.f32 %v2690, 1.0
      %v2699 = vrcp.pop %v2691
      %v2700 = vmul.f32 %v2691, %v2699
      %v2701 = vsub.f32 1.0, %v2700
      %v2702 = vmul.f32 %v2699, %v2701
      %v2703 = vadd.f32 %v2699, %v2702
      %vm2704 = vweird.f32 %v2691
      %vm2705 = vweird.f32 %v2699
      %vm2706 = vmor %vm2704, %vm2705
      %v2707 = vsel %vm2706, %v2699, %v2703
      %v2708 = vand.u32 2147483647, %v2691
      %vm2709 = vcmp.eq.f32.partialorder %v2708, 8.507059e+37
      %v2710 = vand.u32 %v2691, 2147483648
      %v2711 = vor.u32 1.1754944e-38, %v2710
      %v2712 = vsel %vm2709, %v2711, %v2707
      %v2713 = vmul.f32 1.0, %v2712
      %v2714 = vrcp.pop %v2692
      %v2715 = vmul.f32 %v2692, %v2714
      %v2716 = vsub.f32 1.0, %v2715
      %v2717 = vmul.f32 %v2714, %v2716
      %v2718 = vadd.f32 %v2714, %v2717
      %vm2719 = vweird.f32 %v2692
      %vm2720 = vweird.f32 %v2714
      %vm2721 = vmor %vm2719, %vm2720
      %v2722 = vsel %vm2721, %v2714, %v2718
      %v2723 = vand.u32 2147483647, %v2692
      %vm2724 = vcmp.eq.f32.partialorder %v2723, 8.507059e+37
      %v2725 = vand.u32 %v2692, 2147483648
      %v2726 = vor.u32 1.1754944e-38, %v2725
      %v2727 = vsel %vm2724, %v2726, %v2722
      %v2728 = vmul.f32 1.0, %v2727
      %v2729 = vrcp.pop %v2693
      %v2730 = vmul.f32 %v2693, %v2729
      %v2731 = vsub.f32 1.0, %v2730
      %v2732 = vmul.f32 %v2729, %v2731
      %v2733 = vadd.f32 %v2729, %v2732
      %vm2734 = vweird.f32 %v2693
      %vm2735 = vweird.f32 %v2729
      %vm2736 = vmor %vm2734, %vm2735
      %v2737 = vsel %vm2736, %v2729, %v2733
      %v2738 = vand.u32 2147483647, %v2693
      %vm2739 = vcmp.eq.f32.partialorder %v2738, 8.507059e+37
      %v2740 = vand.u32 %v2693, 2147483648
      %v2741 = vor.u32 1.1754944e-38, %v2740
      %v2742 = vsel %vm2739, %v2741, %v2737
      %v2743 = vmul.f32 1.0, %v2742
      %v2744 = vrcp.pop %v2694
      %v2745 = vmul.f32 %v2694, %v2744
      %v2746 = vsub.f32 1.0, %v2745
      %v2747 = vmul.f32 %v2744, %v2746
      %v2748 = vadd.f32 %v2744, %v2747
      %vm2749 = vweird.f32 %v2694
      %vm2750 = vweird.f32 %v2744
      %vm2751 = vmor %vm2749, %vm2750
      %v2752 = vsel %vm2751, %v2744, %v2748
      %v2753 = vand.u32 2147483647, %v2694
      %vm2754 = vcmp.eq.f32.partialorder %v2753, 8.507059e+37
      %v2755 = vand.u32 %v2694, 2147483648
      %v2756 = vor.u32 1.1754944e-38, %v2755
      %v2757 = vsel %vm2754, %v2756, %v2752
      %v2758 = vmul.f32 1.0, %v2757
      %v2759 = vrcp.pop %v2695
      %v2760 = vmul.f32 %v2695, %v2759
      %v2761 = vsub.f32 1.0, %v2760
      %v2762 = vmul.f32 %v2759, %v2761
      %v2763 = vadd.f32 %v2759, %v2762
      %vm2764 = vweird.f32 %v2695
      %vm2765 = vweird.f32 %v2759
      %vm2766 = vmor %vm2764, %vm2765
      %v2767 = vsel %vm2766, %v2759, %v2763
      %v2768 = vand.u32 2147483647, %v2695
      %vm2769 = vcmp.eq.f32.partialorder %v2768, 8.507059e+37
      %v2770 = vand.u32 %v2695, 2147483648
      %v2771 = vor.u32 1.1754944e-38, %v2770
      %v2772 = vsel %vm2769, %v2771, %v2767
      %v2773 = vmul.f32 1.0, %v2772
      %v2774 = vrcp.pop %v2696
      %v2775 = vmul.f32 %v2696, %v2774
      %v2776 = vsub.f32 1.0, %v2775
      %v2777 = vmul.f32 %v2774, %v2776
      %v2778 = vadd.f32 %v2774, %v2777
      %vm2779 = vweird.f32 %v2696
      %vm2780 = vweird.f32 %v2774
      %vm2781 = vmor %vm2779, %vm2780
      %v2782 = vsel %vm2781, %v2774, %v2778
      %v2783 = vand.u32 2147483647, %v2696
      %vm2784 = vcmp.eq.f32.partialorder %v2783, 8.507059e+37
      %v2785 = vand.u32 %v2696, 2147483648
      %v2786 = vor.u32 1.1754944e-38, %v2785
      %v2787 = vsel %vm2784, %v2786, %v2782
      %v2788 = vmul.f32 1.0, %v2787
      %v2789 = vrcp.pop %v2697
      %v2790 = vmul.f32 %v2697, %v2789
      %v2791 = vsub.f32 1.0, %v2790
      %v2792 = vmul.f32 %v2789, %v2791
      %v2793 = vadd.f32 %v2789, %v2792
      %vm2794 = vweird.f32 %v2697
      %vm2795 = vweird.f32 %v2789
      %vm2796 = vmor %vm2794, %vm2795
      %v2797 = vsel %vm2796, %v2789, %v2793
      %v2798 = vand.u32 2147483647, %v2697
      %vm2799 = vcmp.eq.f32.partialorder %v2798, 8.507059e+37
      %v2800 = vand.u32 %v2697, 2147483648
      %v2801 = vor.u32 1.1754944e-38, %v2800
      %v2802 = vsel %vm2799, %v2801, %v2797
      %v2803 = vmul.f32 1.0, %v2802
      %v2804 = vrcp.pop %v2698
      %v2805 = vmul.f32 %v2698, %v2804
      %v2806 = vsub.f32 1.0, %v2805
      %v2807 = vmul.f32 %v2804, %v2806
      %v2808 = vadd.f32 %v2804, %v2807
      %vm2809 = vweird.f32 %v2698
      %vm2810 = vweird.f32 %v2804
      %vm2811 = vmor %vm2809, %vm2810
      %v2812 = vsel %vm2811, %v2804, %v2808
      %v2813 = vand.u32 2147483647, %v2698
      %vm2814 = vcmp.eq.f32.partialorder %v2813, 8.507059e+37
      %v2815 = vand.u32 %v2698, 2147483648
      %v2816 = vor.u32 1.1754944e-38, %v2815
      %v2817 = vsel %vm2814, %v2816, %v2812
      %v2818 = vmul.f32 1.0, %v2817
      %s2819 = scalar_lea.vmem %s332, 128
      %2820 = vst [vmem:[%s2819] sm:$0xff] %v2713
      %2821 = vst [vmem:[%s2819 + $0x8] sm:$0xff] %v2728
      %2822 = vst [vmem:[%s2819 + $0x10] sm:$0xff] %v2743
      %2823 = vst [vmem:[%s2819 + $0x18] sm:$0xff] %v2758
      %2824 = vst [vmem:[%s2819 + $0x20] sm:$0xff] %v2773
      %2825 = vst [vmem:[%s2819 + $0x28] sm:$0xff] %v2788
      %2826 = vst [vmem:[%s2819 + $0x30] sm:$0xff] %v2803
      %2827 = vst [vmem:[%s2819 + $0x38] sm:$0xff] %v2818
      %v2828 = vld [vmem:[#allocation4] sm:$0xff]
      %v2829 = vld [vmem:[#allocation4 + $0x10] sm:$0xff]
      %v2830 = vld [vmem:[#allocation4 + $0x20] sm:$0xff]
      %v2831 = vld [vmem:[#allocation4 + $0x30] sm:$0xff]
      %v2832 = vld [vmem:[#allocation4 + $0x40] sm:$0xff]
      %v2833 = vld [vmem:[#allocation4 + $0x50] sm:$0xff]
      %v2834 = vld [vmem:[#allocation4 + $0x60] sm:$0xff]
      %v2835 = vld [vmem:[#allocation4 + $0x70] sm:$0xff]
      %s2836 = scalar_lea.vmem %s7, 512
      %v2837 = vld [vmem:[%s2836] sm:$0xff]
      %v2838 = vld [vmem:[%s2836 + $0x8] sm:$0xff]
      %v2839 = vld [vmem:[%s2836 + $0x10] sm:$0xff]
      %v2840 = vld [vmem:[%s2836 + $0x18] sm:$0xff]
      %v2841 = vld [vmem:[%s2836 + $0x20] sm:$0xff]
      %v2842 = vld [vmem:[%s2836 + $0x28] sm:$0xff]
      %v2843 = vld [vmem:[%s2836 + $0x30] sm:$0xff]
      %v2844 = vld [vmem:[%s2836 + $0x38] sm:$0xff]
      %v2845 = vld [vmem:[#allocation4 + $0x1] sm:$0xff]
      %v2846 = vld [vmem:[#allocation4 + $0x11] sm:$0xff]
      %v2847 = vld [vmem:[#allocation4 + $0x21] sm:$0xff]
      %v2848 = vld [vmem:[#allocation4 + $0x31] sm:$0xff]
      %v2849 = vld [vmem:[#allocation4 + $0x41] sm:$0xff]
      %v2850 = vld [vmem:[#allocation4 + $0x51] sm:$0xff]
      %v2851 = vld [vmem:[#allocation4 + $0x61] sm:$0xff]
      %v2852 = vld [vmem:[#allocation4 + $0x71] sm:$0xff]
      %s2853 = scalar_lea.vmem %s7, 384
      %v2854 = vld [vmem:[%s2853] sm:$0xff]
      %v2855 = vld [vmem:[%s2853 + $0x8] sm:$0xff]
      %v2856 = vld [vmem:[%s2853 + $0x10] sm:$0xff]
      %v2857 = vld [vmem:[%s2853 + $0x18] sm:$0xff]
      %v2858 = vld [vmem:[%s2853 + $0x20] sm:$0xff]
      %v2859 = vld [vmem:[%s2853 + $0x28] sm:$0xff]
      %v2860 = vld [vmem:[%s2853 + $0x30] sm:$0xff]
      %v2861 = vld [vmem:[%s2853 + $0x38] sm:$0xff]
      %v2863 = vsel %vm423, %v2845, 0
      %v2866 = vsel %vm423, %v2846, 0
      %v2869 = vsel %vm423, %v2847, 0
      %v2872 = vsel %vm423, %v2848, 0
      %v2875 = vsel %vm423, %v2849, 0
      %v2878 = vsel %vm423, %v2850, 0
      %v2881 = vsel %vm423, %v2851, 0
      %v2884 = vsel %vm423, %v2852, 0
      %2886 = vmatpush.msra.mxu0 0.0
      %2887 = vmatpush.msra.mxu0 0.0
      %2888 = vmatpush.msra.mxu0 0.0
      %2889 = vmatpush.msra.mxu0 0.0
      %2890 = vmatpush.msra.mxu0 0.0
      %2891 = vmatpush.msra.mxu0 0.0
      %2892 = vmatpush.msra.mxu0 0.0
      %2893 = vmatpush.msra.mxu0 0.0
      %2894 = vmatpush.msra.mxu0 %v2861
      %2895 = vmatpush.msra.mxu0 %v2860
      %2896 = vmatpush.msra.mxu0 %v2859
      %2897 = vmatpush.msra.mxu0 %v2858
      %2898 = vmatpush.msra.mxu0 %v2857
      %2899 = vmatpush.msra.mxu0 %v2856
      %2900 = vmatpush.msra.mxu0 %v2855
      %2901 = vmatpush.msra.mxu0 %v2854
      %2902 = vmatmul.f32.gmra.mxu0 %v2863
      %v2903 = vpop.f32.mrf.mxu0
      %v2904 = vadd.f32 0.0, %v2903
      %2905 = vmatmul.f32.gmra.mxu0 %v2866
      %v2906 = vpop.f32.mrf.mxu0
      %v2907 = vadd.f32 0.0, %v2906
      %2908 = vmatmul.f32.gmra.mxu0 %v2869
      %v2909 = vpop.f32.mrf.mxu0
      %v2910 = vadd.f32 0.0, %v2909
      %2911 = vmatmul.f32.gmra.mxu0 %v2872
      %v2912 = vpop.f32.mrf.mxu0
      %v2913 = vadd.f32 0.0, %v2912
      %2914 = vmatmul.f32.gmra.mxu0 %v2875
      %v2915 = vpop.f32.mrf.mxu0
      %v2916 = vadd.f32 0.0, %v2915
      %2917 = vmatmul.f32.gmra.mxu0 %v2878
      %v2918 = vpop.f32.mrf.mxu0
      %v2919 = vadd.f32 0.0, %v2918
      %2920 = vmatmul.f32.gmra.mxu0 %v2881
      %v2921 = vpop.f32.mrf.mxu0
      %v2922 = vadd.f32 0.0, %v2921
      %2923 = vmatmul.f32.gmra.mxu0 %v2884
      %v2924 = vpop.f32.mrf.mxu0
      %v2925 = vadd.f32 0.0, %v2924
      %2926 = vdwg.mxu0
      %v2928 = vsel %vm423, %v2828, 0
      %v2931 = vsel %vm423, %v2829, 0
      %v2934 = vsel %vm423, %v2830, 0
      %v2937 = vsel %vm423, %v2831, 0
      %v2940 = vsel %vm423, %v2832, 0
      %v2943 = vsel %vm423, %v2833, 0
      %v2946 = vsel %vm423, %v2834, 0
      %v2949 = vsel %vm423, %v2835, 0
      %2951 = vmatpush.msra.mxu0 0.0
      %2952 = vmatpush.msra.mxu0 0.0
      %2953 = vmatpush.msra.mxu0 0.0
      %2954 = vmatpush.msra.mxu0 0.0
      %2955 = vmatpush.msra.mxu0 0.0
      %2956 = vmatpush.msra.mxu0 0.0
      %2957 = vmatpush.msra.mxu0 0.0
      %2958 = vmatpush.msra.mxu0 0.0
      %2959 = vmatpush.msra.mxu0 %v2844
      %2960 = vmatpush.msra.mxu0 %v2843
      %2961 = vmatpush.msra.mxu0 %v2842
      %2962 = vmatpush.msra.mxu0 %v2841
      %2963 = vmatpush.msra.mxu0 %v2840
      %2964 = vmatpush.msra.mxu0 %v2839
      %2965 = vmatpush.msra.mxu0 %v2838
      %2966 = vmatpush.msra.mxu0 %v2837
      %2967 = vmatmul.f32.gmra.mxu0 %v2928
      %v2968 = vpop.f32.mrf.mxu0
      %v2969 = vadd.f32 %v2904, %v2968
      %2970 = vmatmul.f32.gmra.mxu0 %v2931
      %v2971 = vpop.f32.mrf.mxu0
      %v2972 = vadd.f32 %v2907, %v2971
      %2973 = vmatmul.f32.gmra.mxu0 %v2934
      %v2974 = vpop.f32.mrf.mxu0
      %v2975 = vadd.f32 %v2910, %v2974
      %2976 = vmatmul.f32.gmra.mxu0 %v2937
      %v2977 = vpop.f32.mrf.mxu0
      %v2978 = vadd.f32 %v2913, %v2977
      %2979 = vmatmul.f32.gmra.mxu0 %v2940
      %v2980 = vpop.f32.mrf.mxu0
      %v2981 = vadd.f32 %v2916, %v2980
      %2982 = vmatmul.f32.gmra.mxu0 %v2943
      %v2983 = vpop.f32.mrf.mxu0
      %v2984 = vadd.f32 %v2919, %v2983
      %2985 = vmatmul.f32.gmra.mxu0 %v2946
      %v2986 = vpop.f32.mrf.mxu0
      %v2987 = vadd.f32 %v2922, %v2986
      %2988 = vmatmul.f32.gmra.mxu0 %v2949
      %v2989 = vpop.f32.mrf.mxu0
      %v2990 = vadd.f32 %v2925, %v2989
      %2991 = vdwg.mxu0
      %v2992 = vld [vmem:[%s2507] sm:$0xff]
      %v2993 = vld [vmem:[%s2507 + $0x10] sm:$0xff]
      %v2994 = vld [vmem:[%s2507 + $0x20] sm:$0xff]
      %v2995 = vld [vmem:[%s2507 + $0x30] sm:$0xff]
      %v2996 = vld [vmem:[%s2507 + $0x40] sm:$0xff]
      %v2997 = vld [vmem:[%s2507 + $0x50] sm:$0xff]
      %v2998 = vld [vmem:[%s2507 + $0x60] sm:$0xff]
      %v2999 = vld [vmem:[%s2507 + $0x70] sm:$0xff]
      %s3000 = scalar_lea.vmem %s7, 128
      %v3001 = vld [vmem:[%s3000] sm:$0xff]
      %v3002 = vld [vmem:[%s3000 + $0x8] sm:$0xff]
      %v3003 = vld [vmem:[%s3000 + $0x10] sm:$0xff]
      %v3004 = vld [vmem:[%s3000 + $0x18] sm:$0xff]
      %v3005 = vld [vmem:[%s3000 + $0x20] sm:$0xff]
      %v3006 = vld [vmem:[%s3000 + $0x28] sm:$0xff]
      %v3007 = vld [vmem:[%s3000 + $0x30] sm:$0xff]
      %v3008 = vld [vmem:[%s3000 + $0x38] sm:$0xff]
      %v3010 = vsel %vm423, %v2992, 0
      %v3013 = vsel %vm423, %v2993, 0
      %v3016 = vsel %vm423, %v2994, 0
      %v3019 = vsel %vm423, %v2995, 0
      %v3022 = vsel %vm423, %v2996, 0
      %v3025 = vsel %vm423, %v2997, 0
      %v3028 = vsel %vm423, %v2998, 0
      %v3031 = vsel %vm423, %v2999, 0
      %3033 = vmatpush.msra.mxu0 0.0
      %3034 = vmatpush.msra.mxu0 0.0
      %3035 = vmatpush.msra.mxu0 0.0
      %3036 = vmatpush.msra.mxu0 0.0
      %3037 = vmatpush.msra.mxu0 0.0
      %3038 = vmatpush.msra.mxu0 0.0
      %3039 = vmatpush.msra.mxu0 0.0
      %3040 = vmatpush.msra.mxu0 0.0
      %3041 = vmatpush.msra.mxu0 %v3008
      %3042 = vmatpush.msra.mxu0 %v3007
      %3043 = vmatpush.msra.mxu0 %v3006
      %3044 = vmatpush.msra.mxu0 %v3005
      %3045 = vmatpush.msra.mxu0 %v3004
      %3046 = vmatpush.msra.mxu0 %v3003
      %3047 = vmatpush.msra.mxu0 %v3002
      %3048 = vmatpush.msra.mxu0 %v3001
      %3049 = vmatmul.f32.gmra.mxu0 %v3010
      %v3050 = vpop.f32.mrf.mxu0
      %v3051 = vadd.f32 0.0, %v3050
      %3052 = vmatmul.f32.gmra.mxu0 %v3013
      %v3053 = vpop.f32.mrf.mxu0
      %v3054 = vadd.f32 0.0, %v3053
      %3055 = vmatmul.f32.gmra.mxu0 %v3016
      %v3056 = vpop.f32.mrf.mxu0
      %v3057 = vadd.f32 0.0, %v3056
      %3058 = vmatmul.f32.gmra.mxu0 %v3019
      %v3059 = vpop.f32.mrf.mxu0
      %v3060 = vadd.f32 0.0, %v3059
      %3061 = vmatmul.f32.gmra.mxu0 %v3022
      %v3062 = vpop.f32.mrf.mxu0
      %v3063 = vadd.f32 0.0, %v3062
      %3064 = vmatmul.f32.gmra.mxu0 %v3025
      %v3065 = vpop.f32.mrf.mxu0
      %v3066 = vadd.f32 0.0, %v3065
      %3067 = vmatmul.f32.gmra.mxu0 %v3028
      %v3068 = vpop.f32.mrf.mxu0
      %v3069 = vadd.f32 0.0, %v3068
      %3070 = vmatmul.f32.gmra.mxu0 %v3031
      %v3071 = vpop.f32.mrf.mxu0
      %v3072 = vadd.f32 0.0, %v3071
      %3073 = vdwg.mxu0
      %v3074 = vadd.f32 %v2969, %v3051
      %v3075 = vadd.f32 %v2972, %v3054
      %v3076 = vadd.f32 %v2975, %v3057
      %v3077 = vadd.f32 %v2978, %v3060
      %v3078 = vadd.f32 %v2981, %v3063
      %v3079 = vadd.f32 %v2984, %v3066
      %v3080 = vadd.f32 %v2987, %v3069
      %v3081 = vadd.f32 %v2990, %v3072
      %v3082 = vld [vmem:[%s2507 + $0x1] sm:$0xff]
      %v3083 = vld [vmem:[%s2507 + $0x11] sm:$0xff]
      %v3084 = vld [vmem:[%s2507 + $0x21] sm:$0xff]
      %v3085 = vld [vmem:[%s2507 + $0x31] sm:$0xff]
      %v3086 = vld [vmem:[%s2507 + $0x41] sm:$0xff]
      %v3087 = vld [vmem:[%s2507 + $0x51] sm:$0xff]
      %v3088 = vld [vmem:[%s2507 + $0x61] sm:$0xff]
      %v3089 = vld [vmem:[%s2507 + $0x71] sm:$0xff]
      %v3090 = vld [vmem:[%s7] sm:$0xff]
      %v3091 = vld [vmem:[%s7 + $0x8] sm:$0xff]
      %v3092 = vld [vmem:[%s7 + $0x10] sm:$0xff]
      %v3093 = vld [vmem:[%s7 + $0x18] sm:$0xff]
      %v3094 = vld [vmem:[%s7 + $0x20] sm:$0xff]
      %v3095 = vld [vmem:[%s7 + $0x28] sm:$0xff]
      %v3096 = vld [vmem:[%s7 + $0x30] sm:$0xff]
      %v3097 = vld [vmem:[%s7 + $0x38] sm:$0xff]
      %v3099 = vsel %vm423, %v3082, 0
      %v3102 = vsel %vm423, %v3083, 0
      %v3105 = vsel %vm423, %v3084, 0
      %v3108 = vsel %vm423, %v3085, 0
      %v3111 = vsel %vm423, %v3086, 0
      %v3114 = vsel %vm423, %v3087, 0
      %v3117 = vsel %vm423, %v3088, 0
      %v3120 = vsel %vm423, %v3089, 0
      %3122 = vmatpush.msra.mxu0 0.0
      %3123 = vmatpush.msra.mxu0 0.0
      %3124 = vmatpush.msra.mxu0 0.0
      %3125 = vmatpush.msra.mxu0 0.0
      %3126 = vmatpush.msra.mxu0 0.0
      %3127 = vmatpush.msra.mxu0 0.0
      %3128 = vmatpush.msra.mxu0 0.0
      %3129 = vmatpush.msra.mxu0 0.0
      %3130 = vmatpush.msra.mxu0 %v3097
      %3131 = vmatpush.msra.mxu0 %v3096
      %3132 = vmatpush.msra.mxu0 %v3095
      %3133 = vmatpush.msra.mxu0 %v3094
      %3134 = vmatpush.msra.mxu0 %v3093
      %3135 = vmatpush.msra.mxu0 %v3092
      %3136 = vmatpush.msra.mxu0 %v3091
      %3137 = vmatpush.msra.mxu0 %v3090
      %3138 = vmatmul.f32.gmra.mxu0 %v3099
      %v3139 = vpop.f32.mrf.mxu0
      %v3140 = vadd.f32 0.0, %v3139
      %3141 = vmatmul.f32.gmra.mxu0 %v3102
      %v3142 = vpop.f32.mrf.mxu0
      %v3143 = vadd.f32 0.0, %v3142
      %3144 = vmatmul.f32.gmra.mxu0 %v3105
      %v3145 = vpop.f32.mrf.mxu0
      %v3146 = vadd.f32 0.0, %v3145
      %3147 = vmatmul.f32.gmra.mxu0 %v3108
      %v3148 = vpop.f32.mrf.mxu0
      %v3149 = vadd.f32 0.0, %v3148
      %3150 = vmatmul.f32.gmra.mxu0 %v3111
      %v3151 = vpop.f32.mrf.mxu0
      %v3152 = vadd.f32 0.0, %v3151
      %3153 = vmatmul.f32.gmra.mxu0 %v3114
      %v3154 = vpop.f32.mrf.mxu0
      %v3155 = vadd.f32 0.0, %v3154
      %3156 = vmatmul.f32.gmra.mxu0 %v3117
      %v3157 = vpop.f32.mrf.mxu0
      %v3158 = vadd.f32 0.0, %v3157
      %3159 = vmatmul.f32.gmra.mxu0 %v3120
      %v3160 = vpop.f32.mrf.mxu0
      %v3161 = vadd.f32 0.0, %v3160
      %3162 = vdwg.mxu0
      %v3163 = vadd.f32 %v3074, %v3140
      %v3164 = vadd.f32 %v3075, %v3143
      %v3165 = vadd.f32 %v3076, %v3146
      %v3166 = vadd.f32 %v3077, %v3149
      %v3167 = vadd.f32 %v3078, %v3152
      %v3168 = vadd.f32 %v3079, %v3155
      %v3169 = vadd.f32 %v3080, %v3158
      %v3170 = vadd.f32 %v3081, %v3161
      %v3171 = vld [vmem:[%s8] sm:$0x1]
      %v3173 = vperm.slane %v3171, 0
      %v3175 = vadd.f32 %v3163, %v3173
      %v3176 = vadd.f32 %v3164, %v3173
      %v3177 = vadd.f32 %v3165, %v3173
      %v3178 = vadd.f32 %v3166, %v3173
      %v3179 = vadd.f32 %v3167, %v3173
      %v3180 = vadd.f32 %v3168, %v3173
      %v3181 = vadd.f32 %v3169, %v3173
      %v3182 = vadd.f32 %v3170, %v3173
      %v3183 = vsub.f32 0.0, %v3175
      %v3184 = vsub.f32 0.0, %v3176
      %v3185 = vsub.f32 0.0, %v3177
      %v3186 = vsub.f32 0.0, %v3178
      %v3187 = vsub.f32 0.0, %v3179
      %v3188 = vsub.f32 0.0, %v3180
      %v3189 = vsub.f32 0.0, %v3181
      %v3190 = vsub.f32 0.0, %v3182
      %v3191 = vmul.f32 %v3183, 1.442695
      %v3192 = vpow.pop %v3191
      %v3193 = vmul.f32 %v3184, 1.442695
      %v3194 = vpow.pop %v3193
      %v3195 = vmul.f32 %v3185, 1.442695
      %v3196 = vpow.pop %v3195
      %v3197 = vmul.f32 %v3186, 1.442695
      %v3198 = vpow.pop %v3197
      %v3199 = vmul.f32 %v3187, 1.442695
      %v3200 = vpow.pop %v3199
      %v3201 = vmul.f32 %v3188, 1.442695
      %v3202 = vpow.pop %v3201
      %v3203 = vmul.f32 %v3189, 1.442695
      %v3204 = vpow.pop %v3203
      %v3205 = vmul.f32 %v3190, 1.442695
      %v3206 = vpow.pop %v3205
      %v3207 = vadd.f32 %v3192, 1.0
      %v3208 = vadd.f32 %v3194, 1.0
      %v3209 = vadd.f32 %v3196, 1.0
      %v3210 = vadd.f32 %v3198, 1.0
      %v3211 = vadd.f32 %v3200, 1.0
      %v3212 = vadd.f32 %v3202, 1.0
      %v3213 = vadd.f32 %v3204, 1.0
      %v3214 = vadd.f32 %v3206, 1.0
      %v3215 = vrcp.pop %v3207
      %v3216 = vmul.f32 %v3207, %v3215
      %v3217 = vsub.f32 1.0, %v3216
      %v3218 = vmul.f32 %v3215, %v3217
      %v3219 = vadd.f32 %v3215, %v3218
      %vm3220 = vweird.f32 %v3207
      %vm3221 = vweird.f32 %v3215
      %vm3222 = vmor %vm3220, %vm3221
      %v3223 = vsel %vm3222, %v3215, %v3219
      %v3224 = vand.u32 2147483647, %v3207
      %vm3225 = vcmp.eq.f32.partialorder %v3224, 8.507059e+37
      %v3226 = vand.u32 %v3207, 2147483648
      %v3227 = vor.u32 1.1754944e-38, %v3226
      %v3228 = vsel %vm3225, %v3227, %v3223
      %v3229 = vmul.f32 1.0, %v3228
      %v3230 = vrcp.pop %v3208
      %v3231 = vmul.f32 %v3208, %v3230
      %v3232 = vsub.f32 1.0, %v3231
      %v3233 = vmul.f32 %v3230, %v3232
      %v3234 = vadd.f32 %v3230, %v3233
      %vm3235 = vweird.f32 %v3208
      %vm3236 = vweird.f32 %v3230
      %vm3237 = vmor %vm3235, %vm3236
      %v3238 = vsel %vm3237, %v3230, %v3234
      %v3239 = vand.u32 2147483647, %v3208
      %vm3240 = vcmp.eq.f32.partialorder %v3239, 8.507059e+37
      %v3241 = vand.u32 %v3208, 2147483648
      %v3242 = vor.u32 1.1754944e-38, %v3241
      %v3243 = vsel %vm3240, %v3242, %v3238
      %v3244 = vmul.f32 1.0, %v3243
      %v3245 = vrcp.pop %v3209
      %v3246 = vmul.f32 %v3209, %v3245
      %v3247 = vsub.f32 1.0, %v3246
      %v3248 = vmul.f32 %v3245, %v3247
      %v3249 = vadd.f32 %v3245, %v3248
      %vm3250 = vweird.f32 %v3209
      %vm3251 = vweird.f32 %v3245
      %vm3252 = vmor %vm3250, %vm3251
      %v3253 = vsel %vm3252, %v3245, %v3249
      %v3254 = vand.u32 2147483647, %v3209
      %vm3255 = vcmp.eq.f32.partialorder %v3254, 8.507059e+37
      %v3256 = vand.u32 %v3209, 2147483648
      %v3257 = vor.u32 1.1754944e-38, %v3256
      %v3258 = vsel %vm3255, %v3257, %v3253
      %v3259 = vmul.f32 1.0, %v3258
      %v3260 = vrcp.pop %v3210
      %v3261 = vmul.f32 %v3210, %v3260
      %v3262 = vsub.f32 1.0, %v3261
      %v3263 = vmul.f32 %v3260, %v3262
      %v3264 = vadd.f32 %v3260, %v3263
      %vm3265 = vweird.f32 %v3210
      %vm3266 = vweird.f32 %v3260
      %vm3267 = vmor %vm3265, %vm3266
      %v3268 = vsel %vm3267, %v3260, %v3264
      %v3269 = vand.u32 2147483647, %v3210
      %vm3270 = vcmp.eq.f32.partialorder %v3269, 8.507059e+37
      %v3271 = vand.u32 %v3210, 2147483648
      %v3272 = vor.u32 1.1754944e-38, %v3271
      %v3273 = vsel %vm3270, %v3272, %v3268
      %v3274 = vmul.f32 1.0, %v3273
      %v3275 = vrcp.pop %v3211
      %v3276 = vmul.f32 %v3211, %v3275
      %v3277 = vsub.f32 1.0, %v3276
      %v3278 = vmul.f32 %v3275, %v3277
      %v3279 = vadd.f32 %v3275, %v3278
      %vm3280 = vweird.f32 %v3211
      %vm3281 = vweird.f32 %v3275
      %vm3282 = vmor %vm3280, %vm3281
      %v3283 = vsel %vm3282, %v3275, %v3279
      %v3284 = vand.u32 2147483647, %v3211
      %vm3285 = vcmp.eq.f32.partialorder %v3284, 8.507059e+37
      %v3286 = vand.u32 %v3211, 2147483648
      %v3287 = vor.u32 1.1754944e-38, %v3286
      %v3288 = vsel %vm3285, %v3287, %v3283
      %v3289 = vmul.f32 1.0, %v3288
      %v3290 = vrcp.pop %v3212
      %v3291 = vmul.f32 %v3212, %v3290
      %v3292 = vsub.f32 1.0, %v3291
      %v3293 = vmul.f32 %v3290, %v3292
      %v3294 = vadd.f32 %v3290, %v3293
      %vm3295 = vweird.f32 %v3212
      %vm3296 = vweird.f32 %v3290
      %vm3297 = vmor %vm3295, %vm3296
      %v3298 = vsel %vm3297, %v3290, %v3294
      %v3299 = vand.u32 2147483647, %v3212
      %vm3300 = vcmp.eq.f32.partialorder %v3299, 8.507059e+37
      %v3301 = vand.u32 %v3212, 2147483648
      %v3302 = vor.u32 1.1754944e-38, %v3301
      %v3303 = vsel %vm3300, %v3302, %v3298
      %v3304 = vmul.f32 1.0, %v3303
      %v3305 = vrcp.pop %v3213
      %v3306 = vmul.f32 %v3213, %v3305
      %v3307 = vsub.f32 1.0, %v3306
      %v3308 = vmul.f32 %v3305, %v3307
      %v3309 = vadd.f32 %v3305, %v3308
      %vm3310 = vweird.f32 %v3213
      %vm3311 = vweird.f32 %v3305
      %vm3312 = vmor %vm3310, %vm3311
      %v3313 = vsel %vm3312, %v3305, %v3309
      %v3314 = vand.u32 2147483647, %v3213
      %vm3315 = vcmp.eq.f32.partialorder %v3314, 8.507059e+37
      %v3316 = vand.u32 %v3213, 2147483648
      %v3317 = vor.u32 1.1754944e-38, %v3316
      %v3318 = vsel %vm3315, %v3317, %v3313
      %v3319 = vmul.f32 1.0, %v3318
      %v3320 = vrcp.pop %v3214
      %v3321 = vmul.f32 %v3214, %v3320
      %v3322 = vsub.f32 1.0, %v3321
      %v3323 = vmul.f32 %v3320, %v3322
      %v3324 = vadd.f32 %v3320, %v3323
      %vm3325 = vweird.f32 %v3214
      %vm3326 = vweird.f32 %v3320
      %vm3327 = vmor %vm3325, %vm3326
      %v3328 = vsel %vm3327, %v3320, %v3324
      %v3329 = vand.u32 2147483647, %v3214
      %vm3330 = vcmp.eq.f32.partialorder %v3329, 8.507059e+37
      %v3331 = vand.u32 %v3214, 2147483648
      %v3332 = vor.u32 1.1754944e-38, %v3331
      %v3333 = vsel %vm3330, %v3332, %v3328
      %v3334 = vmul.f32 1.0, %v3333
      %s3335 = scalar_lea.vmem %s332, 192
      %3336 = vst [vmem:[%s3335] sm:$0xff] %v3229
      %3337 = vst [vmem:[%s3335 + $0x8] sm:$0xff] %v3244
      %3338 = vst [vmem:[%s3335 + $0x10] sm:$0xff] %v3259
      %3339 = vst [vmem:[%s3335 + $0x18] sm:$0xff] %v3274
      %3340 = vst [vmem:[%s3335 + $0x20] sm:$0xff] %v3289
      %3341 = vst [vmem:[%s3335 + $0x28] sm:$0xff] %v3304
      %3342 = vst [vmem:[%s3335 + $0x30] sm:$0xff] %v3319
      %3343 = vst [vmem:[%s3335 + $0x38] sm:$0xff] %v3334
      %p3344 = scmp.lt.s32.totalorder %s20, 1
      %s3345 = scalar_select %p3344, %s20, 1
      %s3346 = smul.addr %s3345, 32
      %s3347 = smul.addr %s3346, 8
      %s3348 = scalar_lea.vmem %s9, %s3347
      // Predicated region
      $region57: #{conv_autoencoder_forward.1} parent=55 // pred_check
        %p3349 = pneg %p232
      $region58: #{conv_autoencoder_forward.1} parent=55 // pred_check_branch
        %3351 = sbr.rel (%p3349) target = $region60
      $region59: #{conv_autoencoder_forward.1} parent=55 // pred_region
        _
      $region60: #{conv_autoencoder_forward.1} parent=55 // pred_fallthru
        _
    $region56: #{conv_autoencoder_forward.1} parent=5 // pred_fallthru
      _
    %p3352 = scmp.le.s32.totalorder 2, %s15
    // Predicated region
    $region61: #{conv_autoencoder_forward.1} parent=5 // pred_check
      %p3353 = pneg %p3352
    $region62: #{conv_autoencoder_forward.1} parent=5 // pred_check_branch
      %3355 = sbr.rel (%p3353) target = $region64
    $region63: #{conv_autoencoder_forward.1} parent=5 // pred_region
      %s3356 = ssub.s32 %s15, 2
      // Predicated region
      $region65: #{conv_autoencoder_forward.1} parent=63 // pred_check
        %p3357 = pneg %p238
      $region66: #{conv_autoencoder_forward.1} parent=63 // pred_check_branch
        %3359 = sbr.rel (%p3357) target = $region68
      $region67: #{conv_autoencoder_forward.1} parent=63 // pred_region
        %p3360 = scmp.lt.s32.totalorder %s21, 1
        %s3361 = scalar_select %p3360, %s21, 1
        %s3362 = smul.addr %s3361, 32
        %s3363 = smul.addr %s3362, 8
        %s3364 = scalar_lea.vmem %s9, %s3363
      $region68: #{conv_autoencoder_forward.1} parent=63 // pred_fallthru
        _
    $region64: #{conv_autoencoder_forward.1} parent=5 // pred_fallthru
      _
  $region6: #{conv_autoencoder_forward.1} parent=0 // loop_footer
    %s19 = sadd.s32 1, %s15
  $region7: #{conv_autoencoder_forward.1} parent=0 // loop_footer_branch
    %14 = sbr.rel target = $region3
  $region8: #{conv_autoencoder_forward.1} parent=0 // loop_exit
    _

</llo_original>
